<compile_context>
chip_gen: v7x
topology: tpu7x:2x2x1
jax: 0.10.0
libtpu: 0.0.40
codegen_flags: <defaults>
</compile_context>

<pallas_src>
import jax
import jax.numpy as jnp
from jax.experimental import pallas as pl
from jax.experimental.pallas import tpu as pltpu


def _round_up(x, m):
    return ((x + m - 1) // m) * m


def _fold_bn(gamma, beta, running_mean, running_var, eps=1e-5):
    scale = gamma / jnp.sqrt(running_var + eps)
    bias = beta - running_mean * scale
    return scale, bias


def _estimate_step_vmem_bytes(TH, H, W, Cp_in, Cp_mid, Cp_out):
    """Rough per-grid-step VMEM working set (blocks double-buffered)."""
    Hh = TH + 2
    f4, b2 = 4, 2
    in_block = 2 * (H + 4) * (W + 2) * Cp_in * f4      # padded image block x2
    out_block = 2 * TH * W * Cp_out * f4                # output block x2
    weights = 2 * (9 * Cp_in * Cp_mid + 9 * Cp_mid * Cp_out) * b2
    hp = Hh * (W + 2) * Cp_mid * f4                     # persistent scratch
    p1 = Hh * W * 9 * Cp_in * b2                        # conv1 im2col patch
    p2 = TH * W * 9 * Cp_mid * b2                       # conv2 im2col patch
    h = Hh * W * Cp_mid * f4
    yres = 2 * TH * W * Cp_out * f4
    return in_block + out_block + weights + hp + p1 + p2 + h + yres


def _pick_row_tile(H, W, Cp_in, Cp_mid, Cp_out, vmem_budget_bytes):
    """Largest row tile TH dividing H with TH*W % 8 == 0 that fits the budget."""
    for th in range(H, 0, -1):
        if H % th:
            continue
        if (th * W) % 8:                 # (8,128) constraint on the out block
            continue
        if _estimate_step_vmem_bytes(th, H, W, Cp_in, Cp_mid, Cp_out) <= vmem_budget_bytes:
            return th
    raise ValueError(
        "No valid row tile: need a divisor TH of H with TH*W % 8 == 0 that "
        "fits the VMEM budget (H=%d, W=%d)." % (H, W))


def _make_fused_block_kernel(H, W, Cp_in, Cp_mid, Cp_out, TH):
    """Fused [conv3x3*bn1+relu] -> [conv3x3*bn2 + residual + relu] per row tile.

    BN scales are pre-folded into the (bf16) weights; biases are f32 in-kernel.
    xp_ref holds the whole spatially (2,2)/(1,1) zero-padded, channel-padded
    image of one batch element (DMA'd once per batch element).
    """
    Hh = TH + 2  # conv1 rows per tile: TH output rows + one halo row per side

    def kernel(xp_ref, w1_ref, b1_ref, w2_ref, b2_ref, out_ref, hp_ref):
        r = pl.program_id(1)
        r0 = pl.multiple_of(r * TH, TH)

        # conv2's left/right zero padding = hp's border columns (tiny stores).
        zcol = jnp.zeros((Hh, 1, Cp_mid), jnp.float32)
        hp_ref[:, 0:1, :] = zcol
        hp_ref[:, W + 1:W + 2, :] = zcol

        # ---- conv1 (bn1 scale folded into w1) + bias + ReLU ------------------
        # im2col: one (Hh*W, 9*Cp_in) x (9*Cp_in, Cp_mid) bf16 MXU matmul.
        # Pieces are 128-lane aligned so the concat/reshape are tile-aligned.
        p1 = jnp.concatenate(
            [xp_ref[0, pl.ds(r0 + kh, Hh), kw:kw + W, :].astype(jnp.bfloat16)
             for kh in range(3) for kw in range(3)],
            axis=-1,
        ).reshape(Hh * W, 9 * Cp_in)
        h = jnp.dot(p1, w1_ref[...], preferred_element_type=jnp.float32)
        h = jnp.maximum(h + b1_ref[...], 0.0)

        # Stage h in the column-zero-bordered scratch feeding conv2.
        hp_ref[:, 1:W + 1, :] = h.reshape(Hh, W, Cp_mid)

        # Halo rows of h outside the image act as conv2's zero padding: only
        # the first tile's top row / last tile's bottom row need zeroing.
        zrow = jnp.zeros((1, W + 2, Cp_mid), jnp.float32)

        @pl.when(r == 0)
        def _():
            hp_ref[0:1, :, :] = zrow

        @pl.when(r == pl.num_programs(1) - 1)
        def _():
            hp_ref[Hh - 1:Hh, :, :] = zrow

        # ---- conv2 (bn2 scale folded into w2) + bias + residual + ReLU -------
        p2 = jnp.concatenate(
            [hp_ref[kh:kh + TH, kw:kw + W, :].astype(jnp.bfloat16)
             for kh in range(3) for kw in range(3)],
            axis=-1,
        ).reshape(TH * W, 9 * Cp_mid)
        y = jnp.dot(p2, w2_ref[...], preferred_element_type=jnp.float32)

        # Residual in f32 straight from the resident padded-input block
        # (interior rows r0..r0+TH-1 live at xp rows r0+2.., cols 1..W).
        res = xp_ref[0, pl.ds(r0 + 2, TH), 1:W + 1, :].reshape(TH * W, Cp_out)
        out_ref[...] = jnp.maximum(y + b2_ref[...] + res, 0.0).astype(out_ref.dtype)

    return kernel


def basic_block_v1_forward(x_nchw, params, *, vmem_budget_bytes=24 * 1024 * 1024):
    """BasicBlockV1 forward (stride=1, downsample=None). Input/output NCHW f32."""
    N, C, H, W = x_nchw.shape
    Cin = C
    Cmid = params["w1"].shape[-1]
    Cout = params["w2"].shape[-1]
    assert Cin == Cout, "stride=1 / downsample=None requires inplanes == planes"

    # Lane-dense channel padding (multiple of 128).
    Cp_in = _round_up(Cin, 128)
    Cp_mid = _round_up(Cmid, 128)
    Cp_out = _round_up(Cout, 128)
    assert Cp_in == Cp_out

    s1, b1 = _fold_bn(params["bn1_gamma"], params["bn1_beta"],
                      params["bn1_mean"], params["bn1_var"])
    s2, b2 = _fold_bn(params["bn2_gamma"], params["bn2_beta"],
                      params["bn2_mean"], params["bn2_var"])

    # Fold BN scale into weights, zero-pad channels, reshape HWIO ->
    # (9*Cp_in, Cp_out) matching the kernel's (kh, kw, cin) im2col ordering,
    # and cast the matmul operands to bf16 (accumulation stays f32).
    w1f = params["w1"].astype(jnp.float32) * s1[None, None, None, :]
    w1f = jnp.pad(w1f, ((0, 0), (0, 0), (0, Cp_in - Cin), (0, Cp_mid - Cmid)))
    w1f = w1f.reshape(9 * Cp_in, Cp_mid).astype(jnp.bfloat16)
    w2f = params["w2"].astype(jnp.float32) * s2[None, None, None, :]
    w2f = jnp.pad(w2f, ((0, 0), (0, 0), (0, Cp_mid - Cmid), (0, Cp_out - Cout)))
    w2f = w2f.reshape(9 * Cp_mid, Cp_out).astype(jnp.bfloat16)
    b1r = jnp.pad(b1, (0, Cp_mid - Cmid)).reshape(1, Cp_mid).astype(jnp.float32)
    b2r = jnp.pad(b2, (0, Cp_out - Cout)).reshape(1, Cp_out).astype(jnp.float32)

    # NCHW -> NHWC, f32 (full-precision residual), channel-padded and spatially
    # pre-padded ((2,2) rows for the conv1 halo, (1,1) cols) once in the wrapper.
    x = jnp.transpose(x_nchw, (0, 2, 3, 1)).astype(jnp.float32)
    xp = jnp.pad(x, ((0, 0), (2, 2), (1, 1), (0, Cp_in - Cin)))

    TH = _pick_row_tile(H, W, Cp_in, Cp_mid, Cp_out, vmem_budget_bytes)
    R = H // TH
    est = _estimate_step_vmem_bytes(TH, H, W, Cp_in, Cp_mid, Cp_out)
    vmem_limit = int(min(64 * 1024 * 1024, max(32 * 1024 * 1024, 2 * est)))

    kernel = _make_fused_block_kernel(H, W, Cp_in, Cp_mid, Cp_out, TH)

    out_flat = pl.pallas_call(
        kernel,
        out_shape=jax.ShapeDtypeStruct((N * H * W, Cp_out), jnp.float32),
        grid_spec=pltpu.PrefetchScalarGridSpec(
            num_scalar_prefetch=0,
            grid=(N, R),
            in_specs=[
                # Whole padded image of one batch element; block index constant
                # across r -> DMA'd once per batch element (revisiting).
                pl.BlockSpec((1, H + 4, W + 2, Cp_in), lambda n, r: (n, 0, 0, 0)),
                pl.BlockSpec((9 * Cp_in, Cp_mid), lambda n, r: (0, 0)),
                pl.BlockSpec((1, Cp_mid), lambda n, r: (0, 0)),
                pl.BlockSpec((9 * Cp_mid, Cp_out), lambda n, r: (0, 0)),
                pl.BlockSpec((1, Cp_out), lambda n, r: (0, 0)),
            ],
            # Flat (rows, 128-padded channels) output: lane-dense single store.
            out_specs=pl.BlockSpec((TH * W, Cp_out), lambda n, r: (n * R + r, 0)),
            scratch_shapes=[
                # Persistent column-zero-bordered staging buffer for h.
                pltpu.VMEM((TH + 2, W + 2, Cp_mid), jnp.float32),
            ],
        ),
        compiler_params=pltpu.CompilerParams(
            # Batch elements independent (megacore-shardable); row tiles of one
            # batch element run sequentially (reuse of the resident input block).
            dimension_semantics=("parallel", "arbitrary"),
            vmem_limit_bytes=vmem_limit,
        ),
    )(xp, w1f, b1r, w2f, b2r)

    y = out_flat.reshape(N, H, W, Cp_out)[..., :Cout]
    return jnp.transpose(y, (0, 3, 1, 2))  # NHWC -> NCHW


def _reference_forward(x_nchw, params, *, operand_dtype=jnp.float32):
    """Plain-JAX reference (lax.conv).

    operand_dtype=jnp.bfloat16 mirrors the kernel's numerics (bf16 matmul
    operands, f32 accumulation, f32 bias/residual/ReLU); float32 gives the
    exact eval-mode module semantics.
    """
    x = x_nchw.astype(jnp.float32)
    s1, b1 = _fold_bn(params["bn1_gamma"], params["bn1_beta"],
                      params["bn1_mean"], params["bn1_var"])
    s2, b2 = _fold_bn(params["bn2_gamma"], params["bn2_beta"],
                      params["bn2_mean"], params["bn2_var"])

    def conv(inp, w_hwio):
        w_oihw = jnp.transpose(w_hwio, (3, 2, 0, 1)).astype(operand_dtype)
        return jax.lax.conv_general_dilated(
            inp.astype(operand_dtype), w_oihw, window_strides=(1, 1),
            padding=((1, 1), (1, 1)),
            dimension_numbers=("NCHW", "OIHW", "NCHW"),
            precision=jax.lax.Precision.HIGHEST,
            preferred_element_type=jnp.float32)

    w1f = params["w1"].astype(jnp.float32) * s1[None, None, None, :]
    w2f = params["w2"].astype(jnp.float32) * s2[None, None, None, :]
    h = conv(x, w1f) + b1[None, :, None, None]
    h = jnp.maximum(h, 0.0)
    y = conv(h, w2f) + b2[None, :, None, None]
    y = jnp.maximum(y + x, 0.0)
    return y


def _init_params(key, inplanes, planes):
    ks = jax.random.split(key, 8)
    return {
        # conv weights stored HWIO (3, 3, Cin, Cout)
        "w1": 0.1 * jax.random.normal(ks[0], (3, 3, inplanes, planes), jnp.float32),
        "w2": 0.1 * jax.random.normal(ks[1], (3, 3, planes, planes), jnp.float32),
        "bn1_gamma": 1.0 + 0.1 * jax.random.normal(ks[2], (planes,), jnp.float32),
        "bn1_beta": 0.05 * jax.random.normal(ks[3], (planes,), jnp.float32),
        "bn1_mean": 0.01 * jax.random.normal(ks[4], (planes,), jnp.float32),
        "bn1_var": 1.0 + 0.1 * jnp.abs(jax.random.normal(ks[5], (planes,), jnp.float32)),
        "bn2_gamma": 1.0 + 0.1 * jax.random.normal(ks[6], (planes,), jnp.float32),
        "bn2_beta": 0.05 * jax.random.normal(ks[7], (planes,), jnp.float32),
        "bn2_mean": jnp.zeros((planes,), jnp.float32),
        "bn2_var": jnp.ones((planes,), jnp.float32),
    }


if __name__ == "__main__":
    key = jax.random.PRNGKey(0)
    k_x, k_p = jax.random.split(key)

    N, C, H, W = 2, 4, 16, 16          # inplanes = planes = 4, stride = 1
    x = jax.random.normal(k_x, (N, C, H, W), jnp.float32)
    params = _init_params(k_p, inplanes=C, planes=C)

    out = jax.block_until_ready(basic_block_v1_forward(x, params))
    assert out.shape == (N, C, H, W)

    # Tight check against a reference that mirrors the kernel's numerics
    # (bf16 matmul operands, f32 accumulation / bias / residual / ReLU).
    ref_bf16 = jax.block_until_ready(
        _reference_forward(x, params, operand_dtype=jnp.bfloat16))
    assert jnp.allclose(out, ref_bf16, atol=5e-3, rtol=5e-3), \
        "mismatch vs bf16-operand reference"

    # Loose check against the exact f32 module semantics (slack accounts for
    # the bf16 matmul operands recommended by the perf review).
    ref_f32 = jax.block_until_ready(
        _reference_forward(x, params, operand_dtype=jnp.float32))
    assert jnp.allclose(out, ref_f32, atol=5e-2, rtol=5e-2), \
        "mismatch vs f32 reference"

    print("KERNEL_OK")
</pallas_src>

<mosaic_0001>
module attributes {stable_mosaic.version = 11 : i64} {
  func.func @kernel(%arg0: i32, %arg1: i32, %arg2: memref<1x20x18x128xf32, #tpu.memory_space<vmem>>, %arg3: memref<1152x128xbf16, #tpu.memory_space<vmem>>, %arg4: memref<1x128xf32, #tpu.memory_space<vmem>>, %arg5: memref<1152x128xbf16, #tpu.memory_space<vmem>>, %arg6: memref<1x128xf32, #tpu.memory_space<vmem>>, %arg7: memref<256x128xf32, #tpu.memory_space<vmem>>, %arg8: memref<18x18x128xf32, #tpu.memory_space<vmem>>) attributes {dimension_semantics = [#tpu.dimension_semantics<parallel>, #tpu.dimension_semantics<arbitrary>], iteration_bounds = array<i64: 2, 1>, scalar_prefetch = 0 : i64, scratch_operands = 1 : i64, tpu.core_type = #tpu.core_type<tc>, window_params = [{transform_indices = @transform_0, window_bounds = array<i64: 1, 20, 18, 128>}, {pipeline_mode = #tpu.pipeline_mode<synchronous>, transform_indices = @transform_1, window_bounds = array<i64: 1152, 128>}, {pipeline_mode = #tpu.pipeline_mode<synchronous>, transform_indices = @transform_2, window_bounds = array<i64: 1, 128>}, {pipeline_mode = #tpu.pipeline_mode<synchronous>, transform_indices = @transform_3, window_bounds = array<i64: 1152, 128>}, {pipeline_mode = #tpu.pipeline_mode<synchronous>, transform_indices = @transform_4, window_bounds = array<i64: 1, 128>}, {transform_indices = @transform_5, window_bounds = array<i64: 256, 128>}]} {
    %c16_i32 = arith.constant 16 : i32
    %0 = arith.muli %arg1, %c16_i32 : i32
    %1 = tpu.assume_multiple %0, 16 : i32
    %cst = arith.constant 0.000000e+00 : f32
    %2 = vector.broadcast %cst : f32 to vector<18x1x128xf32>
    %c0 = arith.constant 0 : index
    %c0_0 = arith.constant 0 : index
    %c0_1 = arith.constant 0 : index
    %3 = vector.load %arg8[%c0, %c0_0, %c0_1] : memref<18x18x128xf32, #tpu.memory_space<vmem>>, vector<18x1x128xf32>
    tpu.vector_store %arg8[%c0, %c0_0, %c0_1], %2 {strides = array<i32>} : memref<18x18x128xf32, #tpu.memory_space<vmem>>, vector<18x1x128xf32>,
    %c0_2 = arith.constant 0 : index
    %c17 = arith.constant 17 : index
    %c0_3 = arith.constant 0 : index
    %4 = vector.load %arg8[%c0_2, %c17, %c0_3] : memref<18x18x128xf32, #tpu.memory_space<vmem>>, vector<18x1x128xf32>
    tpu.vector_store %arg8[%c0_2, %c17, %c0_3], %2 {strides = array<i32>} : memref<18x18x128xf32, #tpu.memory_space<vmem>>, vector<18x1x128xf32>,
    %c0_i32 = arith.constant 0 : i32
    %5 = arith.addi %1, %c0_i32 : i32
    %c0_4 = arith.constant 0 : index
    %6 = arith.index_cast %5 : i32 to index
    %c0_5 = arith.constant 0 : index
    %c0_6 = arith.constant 0 : index
    %7 = vector.load %arg2[%c0_4, %6, %c0_5, %c0_6] : memref<1x20x18x128xf32, #tpu.memory_space<vmem>>, vector<1x18x16x128xf32>
    %8 = vector.shape_cast %7 : vector<1x18x16x128xf32> to vector<18x16x128xf32>
    %9 = arith.truncf %8 : vector<18x16x128xf32> to vector<18x16x128xbf16>
    %c0_i32_7 = arith.constant 0 : i32
    %10 = arith.addi %1, %c0_i32_7 : i32
    %c0_8 = arith.constant 0 : index
    %11 = arith.index_cast %10 : i32 to index
    %c1 = arith.constant 1 : index
    %c0_9 = arith.constant 0 : index
    %12 = vector.load %arg2[%c0_8, %11, %c1, %c0_9] : memref<1x20x18x128xf32, #tpu.memory_space<vmem>>, vector<1x18x16x128xf32>
    %13 = vector.shape_cast %12 : vector<1x18x16x128xf32> to vector<18x16x128xf32>
    %14 = arith.truncf %13 : vector<18x16x128xf32> to vector<18x16x128xbf16>
    %c0_i32_10 = arith.constant 0 : i32
    %15 = arith.addi %1, %c0_i32_10 : i32
    %c0_11 = arith.constant 0 : index
    %16 = arith.index_cast %15 : i32 to index
    %c2 = arith.constant 2 : index
    %c0_12 = arith.constant 0 : index
    %17 = vector.load %arg2[%c0_11, %16, %c2, %c0_12] : memref<1x20x18x128xf32, #tpu.memory_space<vmem>>, vector<1x18x16x128xf32>
    %18 = vector.shape_cast %17 : vector<1x18x16x128xf32> to vector<18x16x128xf32>
    %19 = arith.truncf %18 : vector<18x16x128xf32> to vector<18x16x128xbf16>
    %c1_i32 = arith.constant 1 : i32
    %20 = arith.addi %1, %c1_i32 : i32
    %c0_13 = arith.constant 0 : index
    %21 = arith.index_cast %20 : i32 to index
    %c0_14 = arith.constant 0 : index
    %c0_15 = arith.constant 0 : index
    %22 = vector.load %arg2[%c0_13, %21, %c0_14, %c0_15] : memref<1x20x18x128xf32, #tpu.memory_space<vmem>>, vector<1x18x16x128xf32>
    %23 = vector.shape_cast %22 : vector<1x18x16x128xf32> to vector<18x16x128xf32>
    %24 = arith.truncf %23 : vector<18x16x128xf32> to vector<18x16x128xbf16>
    %c1_i32_16 = arith.constant 1 : i32
    %25 = arith.addi %1, %c1_i32_16 : i32
    %c0_17 = arith.constant 0 : index
    %26 = arith.index_cast %25 : i32 to index
    %c1_18 = arith.constant 1 : index
    %c0_19 = arith.constant 0 : index
    %27 = vector.load %arg2[%c0_17, %26, %c1_18, %c0_19] : memref<1x20x18x128xf32, #tpu.memory_space<vmem>>, vector<1x18x16x128xf32>
    %28 = vector.shape_cast %27 : vector<1x18x16x128xf32> to vector<18x16x128xf32>
    %29 = arith.truncf %28 : vector<18x16x128xf32> to vector<18x16x128xbf16>
    %c1_i32_20 = arith.constant 1 : i32
    %30 = arith.addi %1, %c1_i32_20 : i32
    %c0_21 = arith.constant 0 : index
    %31 = arith.index_cast %30 : i32 to index
    %c2_22 = arith.constant 2 : index
    %c0_23 = arith.constant 0 : index
    %32 = vector.load %arg2[%c0_21, %31, %c2_22, %c0_23] : memref<1x20x18x128xf32, #tpu.memory_space<vmem>>, vector<1x18x16x128xf32>
    %33 = vector.shape_cast %32 : vector<1x18x16x128xf32> to vector<18x16x128xf32>
    %34 = arith.truncf %33 : vector<18x16x128xf32> to vector<18x16x128xbf16>
    %c2_i32 = arith.constant 2 : i32
    %35 = arith.addi %1, %c2_i32 : i32
    %c0_24 = arith.constant 0 : index
    %36 = arith.index_cast %35 : i32 to index
    %c0_25 = arith.constant 0 : index
    %c0_26 = arith.constant 0 : index
    %37 = vector.load %arg2[%c0_24, %36, %c0_25, %c0_26] : memref<1x20x18x128xf32, #tpu.memory_space<vmem>>, vector<1x18x16x128xf32>
    %38 = vector.shape_cast %37 : vector<1x18x16x128xf32> to vector<18x16x128xf32>
    %39 = arith.truncf %38 : vector<18x16x128xf32> to vector<18x16x128xbf16>
    %c2_i32_27 = arith.constant 2 : i32
    %40 = arith.addi %1, %c2_i32_27 : i32
    %c0_28 = arith.constant 0 : index
    %41 = arith.index_cast %40 : i32 to index
    %c1_29 = arith.constant 1 : index
    %c0_30 = arith.constant 0 : index
    %42 = vector.load %arg2[%c0_28, %41, %c1_29, %c0_30] : memref<1x20x18x128xf32, #tpu.memory_space<vmem>>, vector<1x18x16x128xf32>
    %43 = vector.shape_cast %42 : vector<1x18x16x128xf32> to vector<18x16x128xf32>
    %44 = arith.truncf %43 : vector<18x16x128xf32> to vector<18x16x128xbf16>
    %c2_i32_31 = arith.constant 2 : i32
    %45 = arith.addi %1, %c2_i32_31 : i32
    %c0_32 = arith.constant 0 : index
    %46 = arith.index_cast %45 : i32 to index
    %c2_33 = arith.constant 2 : index
    %c0_34 = arith.constant 0 : index
    %47 = vector.load %arg2[%c0_32, %46, %c2_33, %c0_34] : memref<1x20x18x128xf32, #tpu.memory_space<vmem>>, vector<1x18x16x128xf32>
    %48 = vector.shape_cast %47 : vector<1x18x16x128xf32> to vector<18x16x128xf32>
    %49 = arith.truncf %48 : vector<18x16x128xf32> to vector<18x16x128xbf16>
    %50 = tpu.concatenate %9, %14, %19, %24, %29, %34, %39, %44, %49 in 2 : vector<18x16x128xbf16>, vector<18x16x128xbf16>, vector<18x16x128xbf16>, vector<18x16x128xbf16>, vector<18x16x128xbf16>, vector<18x16x128xbf16>, vector<18x16x128xbf16>, vector<18x16x128xbf16>, vector<18x16x128xbf16> -> vector<18x16x1152xbf16>
    %51 = vector.shape_cast %50 : vector<18x16x1152xbf16> to vector<288x1152xbf16>
    %c0_35 = arith.constant 0 : index
    %c0_36 = arith.constant 0 : index
    %52 = vector.load %arg3[%c0_35, %c0_36] : memref<1152x128xbf16, #tpu.memory_space<vmem>>, vector<1152x128xbf16>
    %cst_37 = arith.constant dense<0.000000e+00> : vector<288x128xf32>
    %53 = tpu.matmul %51, %52, %cst_37 {dimension_numbers = #tpu.dot_dimension_numbers<[1], [0], [0], [1], [0, 0, 1, 1], [], []>} : vector<288x1152xbf16>, vector<1152x128xbf16>, vector<288x128xf32> -> vector<288x128xf32>
    %c0_38 = arith.constant 0 : index
    %c0_39 = arith.constant 0 : index
    %54 = vector.load %arg4[%c0_38, %c0_39] : memref<1x128xf32, #tpu.memory_space<vmem>>, vector<1x128xf32>
    %55 = vector.broadcast %54 : vector<1x128xf32> to vector<288x128xf32>
    %56 = arith.addf %53, %55 : vector<288x128xf32>
    %cst_40 = arith.constant 0.000000e+00 : f32
    %57 = vector.broadcast %cst_40 : f32 to vector<288x128xf32>
    %58 = arith.maximumf %56, %57 : vector<288x128xf32>
    %59 = vector.shape_cast %58 : vector<288x128xf32> to vector<18x16x128xf32>
    %c0_41 = arith.constant 0 : index
    %c1_42 = arith.constant 1 : index
    %c0_43 = arith.constant 0 : index
    %60 = vector.load %arg8[%c0_41, %c1_42, %c0_43] : memref<18x18x128xf32, #tpu.memory_space<vmem>>, vector<18x16x128xf32>
    tpu.vector_store %arg8[%c0_41, %c1_42, %c0_43], %59 {strides = array<i32>} : memref<18x18x128xf32, #tpu.memory_space<vmem>>, vector<18x16x128xf32>,
    %cst_44 = arith.constant 0.000000e+00 : f32
    %61 = vector.broadcast %cst_44 : f32 to vector<1x18x128xf32>
    %c0_i32_45 = arith.constant 0 : i32
    %62 = arith.cmpi eq, %arg1, %c0_i32_45 : i32
    %63 = arith.extui %62 : i1 to i32
    %c0_i32_46 = arith.constant 0 : i32
    %64 = arith.cmpi ne, %63, %c0_i32_46 : i32
    scf.if %64 {
      %c0_88 = arith.constant 0 : index
      %c0_89 = arith.constant 0 : index
      %c0_90 = arith.constant 0 : index
      %102 = vector.load %arg8[%c0_88, %c0_89, %c0_90] : memref<18x18x128xf32, #tpu.memory_space<vmem>>, vector<1x18x128xf32>
      tpu.vector_store %arg8[%c0_88, %c0_89, %c0_90], %61 {strides = array<i32>} : memref<18x18x128xf32, #tpu.memory_space<vmem>>, vector<1x18x128xf32>,
    } else {
    }
    %c0_i32_47 = arith.constant 0 : i32
    %65 = arith.cmpi eq, %arg1, %c0_i32_47 : i32
    %66 = arith.extui %65 : i1 to i32
    %c0_i32_48 = arith.constant 0 : i32
    %67 = arith.cmpi ne, %66, %c0_i32_48 : i32
    scf.if %67 {
      %c17_88 = arith.constant 17 : index
      %c0_89 = arith.constant 0 : index
      %c0_90 = arith.constant 0 : index
      %102 = vector.load %arg8[%c17_88, %c0_89, %c0_90] : memref<18x18x128xf32, #tpu.memory_space<vmem>>, vector<1x18x128xf32>
      tpu.vector_store %arg8[%c17_88, %c0_89, %c0_90], %61 {strides = array<i32>} : memref<18x18x128xf32, #tpu.memory_space<vmem>>, vector<1x18x128xf32>,
    } else {
    }
    %c0_49 = arith.constant 0 : index
    %c0_50 = arith.constant 0 : index
    %c0_51 = arith.constant 0 : index
    %68 = vector.load %arg8[%c0_49, %c0_50, %c0_51] : memref<18x18x128xf32, #tpu.memory_space<vmem>>, vector<16x16x128xf32>
    %69 = arith.truncf %68 : vector<16x16x128xf32> to vector<16x16x128xbf16>
    %c0_52 = arith.constant 0 : index
    %c1_53 = arith.constant 1 : index
    %c0_54 = arith.constant 0 : index
    %70 = vector.load %arg8[%c0_52, %c1_53, %c0_54] : memref<18x18x128xf32, #tpu.memory_space<vmem>>, vector<16x16x128xf32>
    %71 = arith.truncf %70 : vector<16x16x128xf32> to vector<16x16x128xbf16>
    %c0_55 = arith.constant 0 : index
    %c2_56 = arith.constant 2 : index
    %c0_57 = arith.constant 0 : index
    %72 = vector.load %arg8[%c0_55, %c2_56, %c0_57] : memref<18x18x128xf32, #tpu.memory_space<vmem>>, vector<16x16x128xf32>
    %73 = arith.truncf %72 : vector<16x16x128xf32> to vector<16x16x128xbf16>
    %c1_58 = arith.constant 1 : index
    %c0_59 = arith.constant 0 : index
    %c0_60 = arith.constant 0 : index
    %74 = vector.load %arg8[%c1_58, %c0_59, %c0_60] : memref<18x18x128xf32, #tpu.memory_space<vmem>>, vector<16x16x128xf32>
    %75 = arith.truncf %74 : vector<16x16x128xf32> to vector<16x16x128xbf16>
    %c1_61 = arith.constant 1 : index
    %c1_62 = arith.constant 1 : index
    %c0_63 = arith.constant 0 : index
    %76 = vector.load %arg8[%c1_61, %c1_62, %c0_63] : memref<18x18x128xf32, #tpu.memory_space<vmem>>, vector<16x16x128xf32>
    %77 = arith.truncf %76 : vector<16x16x128xf32> to vector<16x16x128xbf16>
    %c1_64 = arith.constant 1 : index
    %c2_65 = arith.constant 2 : index
    %c0_66 = arith.constant 0 : index
    %78 = vector.load %arg8[%c1_64, %c2_65, %c0_66] : memref<18x18x128xf32, #tpu.memory_space<vmem>>, vector<16x16x128xf32>
    %79 = arith.truncf %78 : vector<16x16x128xf32> to vector<16x16x128xbf16>
    %c2_67 = arith.constant 2 : index
    %c0_68 = arith.constant 0 : index
    %c0_69 = arith.constant 0 : index
    %80 = vector.load %arg8[%c2_67, %c0_68, %c0_69] : memref<18x18x128xf32, #tpu.memory_space<vmem>>, vector<16x16x128xf32>
    %81 = arith.truncf %80 : vector<16x16x128xf32> to vector<16x16x128xbf16>
    %c2_70 = arith.constant 2 : index
    %c1_71 = arith.constant 1 : index
    %c0_72 = arith.constant 0 : index
    %82 = vector.load %arg8[%c2_70, %c1_71, %c0_72] : memref<18x18x128xf32, #tpu.memory_space<vmem>>, vector<16x16x128xf32>
    %83 = arith.truncf %82 : vector<16x16x128xf32> to vector<16x16x128xbf16>
    %c2_73 = arith.constant 2 : index
    %c2_74 = arith.constant 2 : index
    %c0_75 = arith.constant 0 : index
    %84 = vector.load %arg8[%c2_73, %c2_74, %c0_75] : memref<18x18x128xf32, #tpu.memory_space<vmem>>, vector<16x16x128xf32>
    %85 = arith.truncf %84 : vector<16x16x128xf32> to vector<16x16x128xbf16>
    %86 = tpu.concatenate %69, %71, %73, %75, %77, %79, %81, %83, %85 in 2 : vector<16x16x128xbf16>, vector<16x16x128xbf16>, vector<16x16x128xbf16>, vector<16x16x128xbf16>, vector<16x16x128xbf16>, vector<16x16x128xbf16>, vector<16x16x128xbf16>, vector<16x16x128xbf16>, vector<16x16x128xbf16> -> vector<16x16x1152xbf16>
    %87 = vector.shape_cast %86 : vector<16x16x1152xbf16> to vector<256x1152xbf16>
    %c0_76 = arith.constant 0 : index
    %c0_77 = arith.constant 0 : index
    %88 = vector.load %arg5[%c0_76, %c0_77] : memref<1152x128xbf16, #tpu.memory_space<vmem>>, vector<1152x128xbf16>
    %cst_78 = arith.constant dense<0.000000e+00> : vector<256x128xf32>
    %89 = tpu.matmul %87, %88, %cst_78 {dimension_numbers = #tpu.dot_dimension_numbers<[1], [0], [0], [1], [0, 0, 1, 1], [], []>} : vector<256x1152xbf16>, vector<1152x128xbf16>, vector<256x128xf32> -> vector<256x128xf32>
    %c2_i32_79 = arith.constant 2 : i32
    %90 = arith.addi %1, %c2_i32_79 : i32
    %c0_80 = arith.constant 0 : index
    %91 = arith.index_cast %90 : i32 to index
    %c1_81 = arith.constant 1 : index
    %c0_82 = arith.constant 0 : index
    %92 = vector.load %arg2[%c0_80, %91, %c1_81, %c0_82] : memref<1x20x18x128xf32, #tpu.memory_space<vmem>>, vector<1x16x16x128xf32>
    %93 = vector.shape_cast %92 : vector<1x16x16x128xf32> to vector<16x16x128xf32>
    %94 = vector.shape_cast %93 : vector<16x16x128xf32> to vector<256x128xf32>
    %c0_83 = arith.constant 0 : index
    %c0_84 = arith.constant 0 : index
    %95 = vector.load %arg6[%c0_83, %c0_84] : memref<1x128xf32, #tpu.memory_space<vmem>>, vector<1x128xf32>
    %96 = vector.broadcast %95 : vector<1x128xf32> to vector<256x128xf32>
    %97 = arith.addf %89, %96 : vector<256x128xf32>
    %98 = arith.addf %97, %94 : vector<256x128xf32>
    %cst_85 = arith.constant 0.000000e+00 : f32
    %99 = vector.broadcast %cst_85 : f32 to vector<256x128xf32>
    %100 = arith.maximumf %98, %99 : vector<256x128xf32>
    %c0_86 = arith.constant 0 : index
    %c0_87 = arith.constant 0 : index
    %101 = vector.load %arg7[%c0_86, %c0_87] : memref<256x128xf32, #tpu.memory_space<vmem>>, vector<256x128xf32>
    tpu.vector_store %arg7[%c0_86, %c0_87], %100 {strides = array<i32>} : memref<256x128xf32, #tpu.memory_space<vmem>>, vector<256x128xf32>,
    return
  }
  func.func @transform_0(%arg0: i32, %arg1: i32) -> (i32, i32, i32, i32) {
    %c0_i32 = arith.constant 0 : i32
    %c0_i32_0 = arith.constant 0 : i32
    %c0_i32_1 = arith.constant 0 : i32
    %c0_i32_2 = arith.constant 0 : i32
    return %arg0, %c0_i32, %c0_i32_0, %c0_i32_1 : i32, i32, i32, i32
  }
  func.func @transform_1(%arg0: i32, %arg1: i32) -> (i32, i32) {
    %c0_i32 = arith.constant 0 : i32
    %c0_i32_0 = arith.constant 0 : i32
    %c0_i32_1 = arith.constant 0 : i32
    return %c0_i32, %c0_i32_0 : i32, i32
  }
  func.func @transform_2(%arg0: i32, %arg1: i32) -> (i32, i32) {
    %c0_i32 = arith.constant 0 : i32
    %c0_i32_0 = arith.constant 0 : i32
    %c0_i32_1 = arith.constant 0 : i32
    return %c0_i32, %c0_i32_0 : i32, i32
  }
  func.func @transform_3(%arg0: i32, %arg1: i32) -> (i32, i32) {
    %c0_i32 = arith.constant 0 : i32
    %c0_i32_0 = arith.constant 0 : i32
    %c0_i32_1 = arith.constant 0 : i32
    return %c0_i32, %c0_i32_0 : i32, i32
  }
  func.func @transform_4(%arg0: i32, %arg1: i32) -> (i32, i32) {
    %c0_i32 = arith.constant 0 : i32
    %c0_i32_0 = arith.constant 0 : i32
    %c0_i32_1 = arith.constant 0 : i32
    return %c0_i32, %c0_i32_0 : i32, i32
  }
  func.func @transform_5(%arg0: i32, %arg1: i32) -> (i32, i32) {
    %c1_i32 = arith.constant 1 : i32
    %0 = arith.muli %arg0, %c1_i32 : i32
    %1 = arith.addi %0, %arg1 : i32
    %c0_i32 = arith.constant 0 : i32
    %c0_i32_0 = arith.constant 0 : i32
    return %1, %c0_i32 : i32, i32
  }
}

</mosaic_0001>

<llo_original>
// kernel: tpu_custom_call.1
$region0: #{tpu_custom_call.1}
  #allocation0 [shape = 'u32[]', space=smem, size = 0x4, offset = 0x4, fixed_abs, tag = 'smem constant byte address 0x4 - core index']
  #allocation1 [shape = 'u32[144,128]{1,0:T(1,128)}', space=vmem, size = 0x12000, scoped, tag = 'internal scratch']
  #allocation2 [shape = 'f32[18,18,128]{2,1,0:T(8,128)}', space=vmem, size = 0x36000, scoped, tag = 'scratch operand']
  %s0 = inlined_call_operand.vmem [shape: f32[2,20,18,128], index: 0, kind: input, shape index: {}]
  %s1 = inlined_call_operand.vmem [shape: bf16[1152,128], index: 1, kind: input, shape index: {}]
  %s2 = inlined_call_operand.vmem [shape: f32[1,128], index: 2, kind: input, shape index: {}]
  %s3 = inlined_call_operand.vmem [shape: bf16[1152,128], index: 3, kind: input, shape index: {}]
  %s4 = inlined_call_operand.vmem [shape: f32[1,128], index: 4, kind: input, shape index: {}]
  %s5 = inlined_call_operand.hbm [shape: f32[512,128], index: 5, kind: output, shape index: {}]
  %s6 = sld [smem:[#allocation0]]
  $region57: #{tpu_custom_call.1} parent=0
    _
  %s8 = ssub.s32 1, %s6
  %s9 = scalar_select 0, %s8, %s6
  $region1: #{tpu_custom_call.1} parent=0
    #allocation3 [shape = 'u8[262144]{0}', space=vmem, size = 0x40000, scoped, tag = 'output window, operand 0']
    #allocation4 [shape = 's32[2]{0}', space=sflag, size = 0x8, scoped, tag = 'scoped memory for tpu_custom_call.1']
    %10 = vsyncpa [#allocation4], 0
    %s11 = scalar_lea.sflag [#allocation4], 1
    %12 = vsyncpa %s11, 0
    loop: start=0, step=1, limit=4
    $region2: #{tpu_custom_call.1} parent=1 // loop_pre_header
      _
    $region3: #{tpu_custom_call.1} parent=1 // loop_header
      %s14 = sphi 0, %s18
      %p15 = scmp.ge.s32.totalorder %s14, 4
      %s21 = sphi 0, %s33
      %s22 = sphi 0, %s29
      %s23 = sphi 0, %s21
      %s24 = sphi 0, %s22
      %s25 = sphi 0, %s23
      %s26 = sphi 0, %s24
      %s36 = sphi 0, %s38
      %s39 = sphi 0, %s36
      %s40 = sphi 0, %s39
      %s56 = sphi 0, %s40
      %s60 = sphi 0, %s60
      %s62 = sphi 0, %s60
      %s63 = sphi 0, %s62
      %s77 = sphi 0, %s63
      %s81 = sphi 0, %s81
      %s83 = sphi 0, %s81
      %s84 = sphi 0, %s83
      %s98 = sphi 0, %s84
      %s102 = sphi 0, %s102
      %s104 = sphi 0, %s102
      %s105 = sphi 0, %s104
      %s119 = sphi 0, %s105
      %s123 = sphi 0, %s123
      %s125 = sphi 0, %s123
      %s126 = sphi 0, %s125
      %s140 = sphi 0, %s126
      %s148 = sphi 0, %s150
      %s151 = sphi 0, %s148
      %s152 = sphi 0, %s151
      %s168 = sphi 0, %s152
    $region4: #{tpu_custom_call.1} parent=1 // loop_header_branch
      %17 = sbr.rel (%p15) target = $region8
    $region5: #{tpu_custom_call.1} parent=1 // loop_body
      %s19 = ssub.s32 %s14, 1
      %s20 = ssub.s32 %s14, 2
      %s27 = sadd.s32 1, %s22
      %p28 = scmp.ge.s32.totalorder %s27, 1
      %s29 = scalar_select %p28, 0, %s27
      %s30 = sadd.s32 1, %s21
      %s31 = scalar_select %p28, %s30, %s21
      %p32 = scmp.ge.s32.totalorder %s31, 2
      %s33 = scalar_select %p32, 0, %s31
      %s34 = ssub.s32 %s21, %s33
      %p35 = scmp.eq.s32.totalorder %s34, 0
      %s37 = sadd.s32 %s36, 1
      %s38 = scalar_select %p35, %s36, %s37
      %p41 = pneg %p35
      %p42 = scmp.eq.s32.totalorder %s14, 1
      %p43 = por %p41, %p42
      %p44 = scmp.ne.s32.totalorder %s36, %s39
      %p45 = scmp.eq.s32.totalorder %s14, 0
      %p46 = por %p44, %p45
      %p47 = scmp.ne.s32.totalorder %s36, %s39
      %p48 = scmp.eq.s32.totalorder %s19, 1
      %p49 = por %p47, %p48
      %p50 = scmp.ne.s32.totalorder %s39, %s40
      %p51 = scmp.eq.s32.totalorder %s19, 0
      %p52 = por %p50, %p51
      %p53 = scmp.ne.s32.totalorder %s39, %s40
      %p54 = scmp.eq.s32.totalorder %s20, 1
      %p55 = por %p53, %p54
      %p57 = scmp.ne.s32.totalorder %s40, %s56
      %p58 = scmp.eq.s32.totalorder %s20, 0
      %p59 = por %p57, %p58
      %s61 = sadd.s32 %s60, 1
      %p64 = scmp.eq.s32.totalorder %s14, 1
      %p65 = scmp.ne.s32.totalorder %s60, %s62
      %p66 = scmp.eq.s32.totalorder %s14, 0
      %p67 = por %p65, %p66
      %p68 = scmp.ne.s32.totalorder %s60, %s62
      %p69 = scmp.eq.s32.totalorder %s19, 1
      %p70 = por %p68, %p69
      %p71 = scmp.ne.s32.totalorder %s62, %s63
      %p72 = scmp.eq.s32.totalorder %s19, 0
      %p73 = por %p71, %p72
      %p74 = scmp.ne.s32.totalorder %s62, %s63
      %p75 = scmp.eq.s32.totalorder %s20, 1
      %p76 = por %p74, %p75
      %p78 = scmp.ne.s32.totalorder %s63, %s77
      %p79 = scmp.eq.s32.totalorder %s20, 0
      %p80 = por %p78, %p79
      %s82 = sadd.s32 %s81, 1
      %p85 = scmp.eq.s32.totalorder %s14, 1
      %p86 = scmp.ne.s32.totalorder %s81, %s83
      %p87 = scmp.eq.s32.totalorder %s14, 0
      %p88 = por %p86, %p87
      %p89 = scmp.ne.s32.totalorder %s81, %s83
      %p90 = scmp.eq.s32.totalorder %s19, 1
      %p91 = por %p89, %p90
      %p92 = scmp.ne.s32.totalorder %s83, %s84
      %p93 = scmp.eq.s32.totalorder %s19, 0
      %p94 = por %p92, %p93
      %p95 = scmp.ne.s32.totalorder %s83, %s84
      %p96 = scmp.eq.s32.totalorder %s20, 1
      %p97 = por %p95, %p96
      %p99 = scmp.ne.s32.totalorder %s84, %s98
      %p100 = scmp.eq.s32.totalorder %s20, 0
      %p101 = por %p99, %p100
      %s103 = sadd.s32 %s102, 1
      %p106 = scmp.eq.s32.totalorder %s14, 1
      %p107 = scmp.ne.s32.totalorder %s102, %s104
      %p108 = scmp.eq.s32.totalorder %s14, 0
      %p109 = por %p107, %p108
      %p110 = scmp.ne.s32.totalorder %s102, %s104
      %p111 = scmp.eq.s32.totalorder %s19, 1
      %p112 = por %p110, %p111
      %p113 = scmp.ne.s32.totalorder %s104, %s105
      %p114 = scmp.eq.s32.totalorder %s19, 0
      %p115 = por %p113, %p114
      %p116 = scmp.ne.s32.totalorder %s104, %s105
      %p117 = scmp.eq.s32.totalorder %s20, 1
      %p118 = por %p116, %p117
      %p120 = scmp.ne.s32.totalorder %s105, %s119
      %p121 = scmp.eq.s32.totalorder %s20, 0
      %p122 = por %p120, %p121
      %s124 = sadd.s32 %s123, 1
      %p127 = scmp.eq.s32.totalorder %s14, 1
      %p128 = scmp.ne.s32.totalorder %s123, %s125
      %p129 = scmp.eq.s32.totalorder %s14, 0
      %p130 = por %p128, %p129
      %p131 = scmp.ne.s32.totalorder %s123, %s125
      %p132 = scmp.eq.s32.totalorder %s19, 1
      %p133 = por %p131, %p132
      %p134 = scmp.ne.s32.totalorder %s125, %s126
      %p135 = scmp.eq.s32.totalorder %s19, 0
      %p136 = por %p134, %p135
      %p137 = scmp.ne.s32.totalorder %s125, %s126
      %p138 = scmp.eq.s32.totalorder %s20, 1
      %p139 = por %p137, %p138
      %p141 = scmp.ne.s32.totalorder %s126, %s140
      %p142 = scmp.eq.s32.totalorder %s20, 0
      %p143 = por %p141, %p142
      %s144 = sadd.s32 %s21, %s22
      %s145 = sadd.s32 %s33, %s29
      %s146 = ssub.s32 %s144, %s145
      %p147 = scmp.eq.s32.totalorder %s146, 0
      %s149 = sadd.s32 %s148, 1
      %s150 = scalar_select %p147, %s148, %s149
      %p153 = pneg %p147
      %p154 = scmp.eq.s32.totalorder %s14, 1
      %p155 = por %p153, %p154
      %p156 = scmp.ne.s32.totalorder %s148, %s151
      %p157 = scmp.eq.s32.totalorder %s14, 0
      %p158 = por %p156, %p157
      %p159 = scmp.ne.s32.totalorder %s148, %s151
      %p160 = scmp.eq.s32.totalorder %s19, 1
      %p161 = por %p159, %p160
      %p162 = scmp.ne.s32.totalorder %s151, %s152
      %p163 = scmp.eq.s32.totalorder %s19, 0
      %p164 = por %p162, %p163
      %p165 = scmp.ne.s32.totalorder %s151, %s152
      %p166 = scmp.eq.s32.totalorder %s20, 1
      %p167 = por %p165, %p166
      %p169 = scmp.ne.s32.totalorder %s152, %s168
      %p170 = scmp.eq.s32.totalorder %s20, 0
      %p171 = por %p169, %p170
      %p172 = scmp.le.s32.totalorder 1, %s14
      %p173 = scmp.lt.s32.totalorder %s14, 3
      %p174 = pnand %p172, %p173
      %p175 = pneg %p174
      // Predicated region
      $region9: #{tpu_custom_call.1} parent=5 // pred_check
        _
      $region10: #{tpu_custom_call.1} parent=5 // pred_check_branch
        %177 = sbr.rel (%p174) target = $region12
      $region11: #{tpu_custom_call.1} parent=5 // pred_region
        %s178 = ssub.s32 %s14, 1
        // Predicated region
        $region13: #{tpu_custom_call.1} parent=11 // pred_check
          %p179 = pneg %p73
        $region14: #{tpu_custom_call.1} parent=11 // pred_check_branch
          %181 = sbr.rel (%p179) target = $region16
        $region15: #{tpu_custom_call.1} parent=11 // pred_region
          _
        $region16: #{tpu_custom_call.1} parent=11 // pred_fallthru
          _
        // Predicated region
        $region17: #{tpu_custom_call.1} parent=11 // pred_check
          %p182 = pneg %p94
        $region18: #{tpu_custom_call.1} parent=11 // pred_check_branch
          %184 = sbr.rel (%p182) target = $region20
        $region19: #{tpu_custom_call.1} parent=11 // pred_region
          _
        $region20: #{tpu_custom_call.1} parent=11 // pred_fallthru
          _
        // Predicated region
        $region21: #{tpu_custom_call.1} parent=11 // pred_check
          %p185 = pneg %p115
        $region22: #{tpu_custom_call.1} parent=11 // pred_check_branch
          %187 = sbr.rel (%p185) target = $region24
        $region23: #{tpu_custom_call.1} parent=11 // pred_region
          _
        $region24: #{tpu_custom_call.1} parent=11 // pred_fallthru
          _
        // Predicated region
        $region25: #{tpu_custom_call.1} parent=11 // pred_check
          %p188 = pneg %p136
        $region26: #{tpu_custom_call.1} parent=11 // pred_check_branch
          %190 = sbr.rel (%p188) target = $region28
        $region27: #{tpu_custom_call.1} parent=11 // pred_region
          _
        $region28: #{tpu_custom_call.1} parent=11 // pred_fallthru
          _
      $region12: #{tpu_custom_call.1} parent=5 // pred_fallthru
        _
      %p191 = scmp.lt.s32.totalorder %s14, 2
      // Predicated region
      $region29: #{tpu_custom_call.1} parent=5 // pred_check
        %p192 = pneg %p191
      $region30: #{tpu_custom_call.1} parent=5 // pred_check_branch
        %194 = sbr.rel (%p192) target = $region32
      $region31: #{tpu_custom_call.1} parent=5 // pred_region
        // Predicated region
        $region33: #{tpu_custom_call.1} parent=31 // pred_check
          %p195 = pneg %p46
        $region34: #{tpu_custom_call.1} parent=31 // pred_check_branch
          %197 = sbr.rel (%p195) target = $region36
        $region35: #{tpu_custom_call.1} parent=31 // pred_region
          %p198 = scmp.lt.s32.totalorder %s21, 1
          %s199 = scalar_select %p198, %s21, 1
          %s200 = smul.addr %s199, 60
          %s201 = smul.addr %s200, 8
          %s202 = scalar_lea.vmem %s0, %s201
        $region36: #{tpu_custom_call.1} parent=31 // pred_fallthru
          _
      $region32: #{tpu_custom_call.1} parent=5 // pred_fallthru
        _
      %p203 = scmp.le.s32.totalorder 1, %s14
      %p204 = scmp.lt.s32.totalorder %s14, 3
      %p205 = pnand %p203, %p204
      %p206 = pneg %p205
      // Predicated region
      $region37: #{tpu_custom_call.1} parent=5 // pred_check
        _
      $region38: #{tpu_custom_call.1} parent=5 // pred_check_branch
        %208 = sbr.rel (%p205) target = $region40
      $region39: #{tpu_custom_call.1} parent=5 // pred_region
        %s209 = ssub.s32 %s14, 1
        %p210 = scmp.lt.s32.totalorder %s23, 1
        %s211 = scalar_select %p210, %s23, 1
        %s212 = smul.addr %s211, 60
        %s213 = smul.addr %s212, 8
        %s214 = scalar_lea.vmem %s0, %s213
        %p215 = pneg %p52
        %p216 = pneg %p49
        %p217 = pneg %p73
        %p218 = pneg %p70
        %p219 = pneg %p94
        %p220 = pneg %p91
        %p221 = pneg %p115
        %p222 = pneg %p112
        %p223 = pneg %p136
        %p224 = pneg %p133
        %p225 = pneg %p164
        %p226 = pneg %p161
        %s227 = sand.u32 %s151, 1
        %s228 = scalar_lea.sflag [#allocation4], %s227
        %s229 = sand.u32 %s151, 1
        %s230 = smul.addr %s229, 256
        %s231 = scalar_lea.vmem [#allocation3], %s230
        %p232 = scmp.lt.s32.totalorder %s23, 1
        %s233 = scalar_select %p232, %s23, 1
        %s234 = smul.addr %s233, 60
        %s235 = smul.addr %s234, 8
        %s236 = scalar_lea.vmem %s0, %s235
        %s237 = sadd.s32 %s23, %s24
        %s238 = smul.u32 32, %s237
        %s240 = smul.u32 %s24, 16
        %241 = vst [vmem:[#allocation2] sm:$0x1] 0.0
        %242 = vst [vmem:[#allocation2 + $0x18] sm:$0x1] 0.0
        %243 = vst [vmem:[#allocation2 + $0x30] sm:$0x1] 0.0
        %244 = vst [vmem:[#allocation2 + $0x48] sm:$0x1] 0.0
        %245 = vst [vmem:[#allocation2 + $0x60] sm:$0x1] 0.0
        %246 = vst [vmem:[#allocation2 + $0x78] sm:$0x1] 0.0
        %247 = vst [vmem:[#allocation2 + $0x90] sm:$0x1] 0.0
        %248 = vst [vmem:[#allocation2 + $0xa8] sm:$0x1] 0.0
        %249 = vst [vmem:[#allocation2 + $0xc0] sm:$0x1] 0.0
        %250 = vst [vmem:[#allocation2 + $0xd8] sm:$0x1] 0.0
        %251 = vst [vmem:[#allocation2 + $0xf0] sm:$0x1] 0.0
        %252 = vst [vmem:[#allocation2 + $0x108] sm:$0x1] 0.0
        %253 = vst [vmem:[#allocation2 + $0x120] sm:$0x1] 0.0
        %254 = vst [vmem:[#allocation2 + $0x138] sm:$0x1] 0.0
        %255 = vst [vmem:[#allocation2 + $0x150] sm:$0x1] 0.0
        %256 = vst [vmem:[#allocation2 + $0x168] sm:$0x1] 0.0
        %257 = vst [vmem:[#allocation2 + $0x180] sm:$0x1] 0.0
        %258 = vst [vmem:[#allocation2 + $0x198] sm:$0x1] 0.0
        %259 = vst [vmem:[#allocation2 + $0x11] sm:$0x1] 0.0
        %260 = vst [vmem:[#allocation2 + $0x29] sm:$0x1] 0.0
        %261 = vst [vmem:[#allocation2 + $0x41] sm:$0x1] 0.0
        %262 = vst [vmem:[#allocation2 + $0x59] sm:$0x1] 0.0
        %263 = vst [vmem:[#allocation2 + $0x71] sm:$0x1] 0.0
        %264 = vst [vmem:[#allocation2 + $0x89] sm:$0x1] 0.0
        %265 = vst [vmem:[#allocation2 + $0xa1] sm:$0x1] 0.0
        %266 = vst [vmem:[#allocation2 + $0xb9] sm:$0x1] 0.0
        %267 = vst [vmem:[#allocation2 + $0xd1] sm:$0x1] 0.0
        %268 = vst [vmem:[#allocation2 + $0xe9] sm:$0x1] 0.0
        %269 = vst [vmem:[#allocation2 + $0x101] sm:$0x1] 0.0
        %270 = vst [vmem:[#allocation2 + $0x119] sm:$0x1] 0.0
        %271 = vst [vmem:[#allocation2 + $0x131] sm:$0x1] 0.0
        %272 = vst [vmem:[#allocation2 + $0x149] sm:$0x1] 0.0
        %273 = vst [vmem:[#allocation2 + $0x161] sm:$0x1] 0.0
        %274 = vst [vmem:[#allocation2 + $0x179] sm:$0x1] 0.0
        %275 = vst [vmem:[#allocation2 + $0x191] sm:$0x1] 0.0
        %276 = vst [vmem:[#allocation2 + $0x1a9] sm:$0x1] 0.0
        %s277 = smul.u32 %s240, 24
        %s278 = scalar_lea.vmem %s236, %s277
        %v279 = vld [vmem:[%s278] sm:$0xff]
        %v280 = vld [vmem:[%s278 + $0x8] sm:$0xff]
        %v281 = vld [vmem:[%s278 + $0x18] sm:$0xff]
        %v282 = vld [vmem:[%s278 + $0x20] sm:$0xff]
        %v283 = vld [vmem:[%s278 + $0x30] sm:$0xff]
        %v284 = vld [vmem:[%s278 + $0x38] sm:$0xff]
        %v285 = vld [vmem:[%s278 + $0x48] sm:$0xff]
        %v286 = vld [vmem:[%s278 + $0x50] sm:$0xff]
        %v287 = vld [vmem:[%s278 + $0x60] sm:$0xff]
        %v288 = vld [vmem:[%s278 + $0x68] sm:$0xff]
        %v289 = vld [vmem:[%s278 + $0x78] sm:$0xff]
        %v290 = vld [vmem:[%s278 + $0x80] sm:$0xff]
        %v291 = vld [vmem:[%s278 + $0x90] sm:$0xff]
        %v292 = vld [vmem:[%s278 + $0x98] sm:$0xff]
        %v293 = vld [vmem:[%s278 + $0xa8] sm:$0xff]
        %v294 = vld [vmem:[%s278 + $0xb0] sm:$0xff]
        %v295 = vld [vmem:[%s278 + $0xc0] sm:$0xff]
        %v296 = vld [vmem:[%s278 + $0xc8] sm:$0xff]
        %v297 = vld [vmem:[%s278 + $0xd8] sm:$0xff]
        %v298 = vld [vmem:[%s278 + $0xe0] sm:$0xff]
        %v299 = vld [vmem:[%s278 + $0xf0] sm:$0xff]
        %v300 = vld [vmem:[%s278 + $0xf8] sm:$0xff]
        %v301 = vld [vmem:[%s278 + $0x108] sm:$0xff]
        %v302 = vld [vmem:[%s278 + $0x110] sm:$0xff]
        %v303 = vld [vmem:[%s278 + $0x120] sm:$0xff]
        %v304 = vld [vmem:[%s278 + $0x128] sm:$0xff]
        %v305 = vld [vmem:[%s278 + $0x138] sm:$0xff]
        %v306 = vld [vmem:[%s278 + $0x140] sm:$0xff]
        %v307 = vld [vmem:[%s278 + $0x150] sm:$0xff]
        %v308 = vld [vmem:[%s278 + $0x158] sm:$0xff]
        %v309 = vld [vmem:[%s278 + $0x168] sm:$0xff]
        %v310 = vld [vmem:[%s278 + $0x170] sm:$0xff]
        %v311 = vld [vmem:[%s278 + $0x180] sm:$0xff]
        %v312 = vld [vmem:[%s278 + $0x188] sm:$0xff]
        %v313 = vld [vmem:[%s278 + $0x198] sm:$0xff]
        %v314 = vld [vmem:[%s278 + $0x1a0] sm:$0xff]
        %v315 = vpack.c.bf16 %v280, %v279
        %v316 = vpack.c.bf16 %v282, %v281
        %v317 = vpack.c.bf16 %v284, %v283
        %v318 = vpack.c.bf16 %v286, %v285
        %v319 = vpack.c.bf16 %v288, %v287
        %v320 = vpack.c.bf16 %v290, %v289
        %v321 = vpack.c.bf16 %v292, %v291
        %v322 = vpack.c.bf16 %v294, %v293
        %v323 = vpack.c.bf16 %v296, %v295
        %v324 = vpack.c.bf16 %v298, %v297
        %v325 = vpack.c.bf16 %v300, %v299
        %v326 = vpack.c.bf16 %v302, %v301
        %v327 = vpack.c.bf16 %v304, %v303
        %v328 = vpack.c.bf16 %v306, %v305
        %v329 = vpack.c.bf16 %v308, %v307
        %v330 = vpack.c.bf16 %v310, %v309
        %v331 = vpack.c.bf16 %v312, %v311
        %v332 = vpack.c.bf16 %v314, %v313
        %v333 = vld [vmem:[%s278 + $0x1] sm:$0xff]
        %v334 = vld [vmem:[%s278 + $0x9] sm:$0xff]
        %v335 = vld [vmem:[%s278 + $0x19] sm:$0xff]
        %v336 = vld [vmem:[%s278 + $0x21] sm:$0xff]
        %v337 = vld [vmem:[%s278 + $0x31] sm:$0xff]
        %v338 = vld [vmem:[%s278 + $0x39] sm:$0xff]
        %v339 = vld [vmem:[%s278 + $0x49] sm:$0xff]
        %v340 = vld [vmem:[%s278 + $0x51] sm:$0xff]
        %v341 = vld [vmem:[%s278 + $0x61] sm:$0xff]
        %v342 = vld [vmem:[%s278 + $0x69] sm:$0xff]
        %v343 = vld [vmem:[%s278 + $0x79] sm:$0xff]
        %v344 = vld [vmem:[%s278 + $0x81] sm:$0xff]
        %v345 = vld [vmem:[%s278 + $0x91] sm:$0xff]
        %v346 = vld [vmem:[%s278 + $0x99] sm:$0xff]
        %v347 = vld [vmem:[%s278 + $0xa9] sm:$0xff]
        %v348 = vld [vmem:[%s278 + $0xb1] sm:$0xff]
        %v349 = vld [vmem:[%s278 + $0xc1] sm:$0xff]
        %v350 = vld [vmem:[%s278 + $0xc9] sm:$0xff]
        %v351 = vld [vmem:[%s278 + $0xd9] sm:$0xff]
        %v352 = vld [vmem:[%s278 + $0xe1] sm:$0xff]
        %v353 = vld [vmem:[%s278 + $0xf1] sm:$0xff]
        %v354 = vld [vmem:[%s278 + $0xf9] sm:$0xff]
        %v355 = vld [vmem:[%s278 + $0x109] sm:$0xff]
        %v356 = vld [vmem:[%s278 + $0x111] sm:$0xff]
        %v357 = vld [vmem:[%s278 + $0x121] sm:$0xff]
        %v358 = vld [vmem:[%s278 + $0x129] sm:$0xff]
        %v359 = vld [vmem:[%s278 + $0x139] sm:$0xff]
        %v360 = vld [vmem:[%s278 + $0x141] sm:$0xff]
        %v361 = vld [vmem:[%s278 + $0x151] sm:$0xff]
        %v362 = vld [vmem:[%s278 + $0x159] sm:$0xff]
        %v363 = vld [vmem:[%s278 + $0x169] sm:$0xff]
        %v364 = vld [vmem:[%s278 + $0x171] sm:$0xff]
        %v365 = vld [vmem:[%s278 + $0x181] sm:$0xff]
        %v366 = vld [vmem:[%s278 + $0x189] sm:$0xff]
        %v367 = vld [vmem:[%s278 + $0x199] sm:$0xff]
        %v368 = vld [vmem:[%s278 + $0x1a1] sm:$0xff]
        %v369 = vpack.c.bf16 %v334, %v333
        %v370 = vpack.c.bf16 %v336, %v335
        %v371 = vpack.c.bf16 %v338, %v337
        %v372 = vpack.c.bf16 %v340, %v339
        %v373 = vpack.c.bf16 %v342, %v341
        %v374 = vpack.c.bf16 %v344, %v343
        %v375 = vpack.c.bf16 %v346, %v345
        %v376 = vpack.c.bf16 %v348, %v347
        %v377 = vpack.c.bf16 %v350, %v349
        %v378 = vpack.c.bf16 %v352, %v351
        %v379 = vpack.c.bf16 %v354, %v353
        %v380 = vpack.c.bf16 %v356, %v355
        %v381 = vpack.c.bf16 %v358, %v357
        %v382 = vpack.c.bf16 %v360, %v359
        %v383 = vpack.c.bf16 %v362, %v361
        %v384 = vpack.c.bf16 %v364, %v363
        %v385 = vpack.c.bf16 %v366, %v365
        %v386 = vpack.c.bf16 %v368, %v367
        %v387 = vld [vmem:[%s278 + $0x2] sm:$0xff]
        %v388 = vld [vmem:[%s278 + $0xa] sm:$0xff]
        %v389 = vld [vmem:[%s278 + $0x1a] sm:$0xff]
        %v390 = vld [vmem:[%s278 + $0x22] sm:$0xff]
        %v391 = vld [vmem:[%s278 + $0x32] sm:$0xff]
        %v392 = vld [vmem:[%s278 + $0x3a] sm:$0xff]
        %v393 = vld [vmem:[%s278 + $0x4a] sm:$0xff]
        %v394 = vld [vmem:[%s278 + $0x52] sm:$0xff]
        %v395 = vld [vmem:[%s278 + $0x62] sm:$0xff]
        %v396 = vld [vmem:[%s278 + $0x6a] sm:$0xff]
        %v397 = vld [vmem:[%s278 + $0x7a] sm:$0xff]
        %v398 = vld [vmem:[%s278 + $0x82] sm:$0xff]
        %v399 = vld [vmem:[%s278 + $0x92] sm:$0xff]
        %v400 = vld [vmem:[%s278 + $0x9a] sm:$0xff]
        %v401 = vld [vmem:[%s278 + $0xaa] sm:$0xff]
        %v402 = vld [vmem:[%s278 + $0xb2] sm:$0xff]
        %v403 = vld [vmem:[%s278 + $0xc2] sm:$0xff]
        %v404 = vld [vmem:[%s278 + $0xca] sm:$0xff]
        %v405 = vld [vmem:[%s278 + $0xda] sm:$0xff]
        %v406 = vld [vmem:[%s278 + $0xe2] sm:$0xff]
        %v407 = vld [vmem:[%s278 + $0xf2] sm:$0xff]
        %v408 = vld [vmem:[%s278 + $0xfa] sm:$0xff]
        %v409 = vld [vmem:[%s278 + $0x10a] sm:$0xff]
        %v410 = vld [vmem:[%s278 + $0x112] sm:$0xff]
        %v411 = vld [vmem:[%s278 + $0x122] sm:$0xff]
        %v412 = vld [vmem:[%s278 + $0x12a] sm:$0xff]
        %v413 = vld [vmem:[%s278 + $0x13a] sm:$0xff]
        %v414 = vld [vmem:[%s278 + $0x142] sm:$0xff]
        %v415 = vld [vmem:[%s278 + $0x152] sm:$0xff]
        %v416 = vld [vmem:[%s278 + $0x15a] sm:$0xff]
        %v417 = vld [vmem:[%s278 + $0x16a] sm:$0xff]
        %v418 = vld [vmem:[%s278 + $0x172] sm:$0xff]
        %v419 = vld [vmem:[%s278 + $0x182] sm:$0xff]
        %v420 = vld [vmem:[%s278 + $0x18a] sm:$0xff]
        %v421 = vld [vmem:[%s278 + $0x19a] sm:$0xff]
        %v422 = vld [vmem:[%s278 + $0x1a2] sm:$0xff]
        %v423 = vpack.c.bf16 %v388, %v387
        %v424 = vpack.c.bf16 %v390, %v389
        %v425 = vpack.c.bf16 %v392, %v391
        %v426 = vpack.c.bf16 %v394, %v393
        %v427 = vpack.c.bf16 %v396, %v395
        %v428 = vpack.c.bf16 %v398, %v397
        %v429 = vpack.c.bf16 %v400, %v399
        %v430 = vpack.c.bf16 %v402, %v401
        %v431 = vpack.c.bf16 %v404, %v403
        %v432 = vpack.c.bf16 %v406, %v405
        %v433 = vpack.c.bf16 %v408, %v407
        %v434 = vpack.c.bf16 %v410, %v409
        %v435 = vpack.c.bf16 %v412, %v411
        %v436 = vpack.c.bf16 %v414, %v413
        %v437 = vpack.c.bf16 %v416, %v415
        %v438 = vpack.c.bf16 %v418, %v417
        %v439 = vpack.c.bf16 %v420, %v419
        %v440 = vpack.c.bf16 %v422, %v421
        %s441 = sadd.s32 %s240, 1
        %s442 = smul.u32 %s441, 24
        %s443 = scalar_lea.vmem %s236, %s442
        %v444 = vld [vmem:[%s443] sm:$0xff]
        %v445 = vld [vmem:[%s443 + $0x8] sm:$0xff]
        %v446 = vld [vmem:[%s443 + $0x18] sm:$0xff]
        %v447 = vld [vmem:[%s443 + $0x20] sm:$0xff]
        %v448 = vld [vmem:[%s443 + $0x30] sm:$0xff]
        %v449 = vld [vmem:[%s443 + $0x38] sm:$0xff]
        %v450 = vld [vmem:[%s443 + $0x48] sm:$0xff]
        %v451 = vld [vmem:[%s443 + $0x50] sm:$0xff]
        %v452 = vld [vmem:[%s443 + $0x60] sm:$0xff]
        %v453 = vld [vmem:[%s443 + $0x68] sm:$0xff]
        %v454 = vld [vmem:[%s443 + $0x78] sm:$0xff]
        %v455 = vld [vmem:[%s443 + $0x80] sm:$0xff]
        %v456 = vld [vmem:[%s443 + $0x90] sm:$0xff]
        %v457 = vld [vmem:[%s443 + $0x98] sm:$0xff]
        %v458 = vld [vmem:[%s443 + $0xa8] sm:$0xff]
        %v459 = vld [vmem:[%s443 + $0xb0] sm:$0xff]
        %v460 = vld [vmem:[%s443 + $0xc0] sm:$0xff]
        %v461 = vld [vmem:[%s443 + $0xc8] sm:$0xff]
        %v462 = vld [vmem:[%s443 + $0xd8] sm:$0xff]
        %v463 = vld [vmem:[%s443 + $0xe0] sm:$0xff]
        %v464 = vld [vmem:[%s443 + $0xf0] sm:$0xff]
        %v465 = vld [vmem:[%s443 + $0xf8] sm:$0xff]
        %v466 = vld [vmem:[%s443 + $0x108] sm:$0xff]
        %v467 = vld [vmem:[%s443 + $0x110] sm:$0xff]
        %v468 = vld [vmem:[%s443 + $0x120] sm:$0xff]
        %v469 = vld [vmem:[%s443 + $0x128] sm:$0xff]
        %v470 = vld [vmem:[%s443 + $0x138] sm:$0xff]
        %v471 = vld [vmem:[%s443 + $0x140] sm:$0xff]
        %v472 = vld [vmem:[%s443 + $0x150] sm:$0xff]
        %v473 = vld [vmem:[%s443 + $0x158] sm:$0xff]
        %v474 = vld [vmem:[%s443 + $0x168] sm:$0xff]
        %v475 = vld [vmem:[%s443 + $0x170] sm:$0xff]
        %v476 = vld [vmem:[%s443 + $0x180] sm:$0xff]
        %v477 = vld [vmem:[%s443 + $0x188] sm:$0xff]
        %v478 = vld [vmem:[%s443 + $0x198] sm:$0xff]
        %v479 = vld [vmem:[%s443 + $0x1a0] sm:$0xff]
        %v480 = vpack.c.bf16 %v445, %v444
        %v481 = vpack.c.bf16 %v447, %v446
        %v482 = vpack.c.bf16 %v449, %v448
        %v483 = vpack.c.bf16 %v451, %v450
        %v484 = vpack.c.bf16 %v453, %v452
        %v485 = vpack.c.bf16 %v455, %v454
        %v486 = vpack.c.bf16 %v457, %v456
        %v487 = vpack.c.bf16 %v459, %v458
        %v488 = vpack.c.bf16 %v461, %v460
        %v489 = vpack.c.bf16 %v463, %v462
        %v490 = vpack.c.bf16 %v465, %v464
        %v491 = vpack.c.bf16 %v467, %v466
        %v492 = vpack.c.bf16 %v469, %v468
        %v493 = vpack.c.bf16 %v471, %v470
        %v494 = vpack.c.bf16 %v473, %v472
        %v495 = vpack.c.bf16 %v475, %v474
        %v496 = vpack.c.bf16 %v477, %v476
        %v497 = vpack.c.bf16 %v479, %v478
        %v498 = vld [vmem:[%s443 + $0x1] sm:$0xff]
        %v499 = vld [vmem:[%s443 + $0x9] sm:$0xff]
        %v500 = vld [vmem:[%s443 + $0x19] sm:$0xff]
        %v501 = vld [vmem:[%s443 + $0x21] sm:$0xff]
        %v502 = vld [vmem:[%s443 + $0x31] sm:$0xff]
        %v503 = vld [vmem:[%s443 + $0x39] sm:$0xff]
        %v504 = vld [vmem:[%s443 + $0x49] sm:$0xff]
        %v505 = vld [vmem:[%s443 + $0x51] sm:$0xff]
        %v506 = vld [vmem:[%s443 + $0x61] sm:$0xff]
        %v507 = vld [vmem:[%s443 + $0x69] sm:$0xff]
        %v508 = vld [vmem:[%s443 + $0x79] sm:$0xff]
        %v509 = vld [vmem:[%s443 + $0x81] sm:$0xff]
        %v510 = vld [vmem:[%s443 + $0x91] sm:$0xff]
        %v511 = vld [vmem:[%s443 + $0x99] sm:$0xff]
        %v512 = vld [vmem:[%s443 + $0xa9] sm:$0xff]
        %v513 = vld [vmem:[%s443 + $0xb1] sm:$0xff]
        %v514 = vld [vmem:[%s443 + $0xc1] sm:$0xff]
        %v515 = vld [vmem:[%s443 + $0xc9] sm:$0xff]
        %v516 = vld [vmem:[%s443 + $0xd9] sm:$0xff]
        %v517 = vld [vmem:[%s443 + $0xe1] sm:$0xff]
        %v518 = vld [vmem:[%s443 + $0xf1] sm:$0xff]
        %v519 = vld [vmem:[%s443 + $0xf9] sm:$0xff]
        %v520 = vld [vmem:[%s443 + $0x109] sm:$0xff]
        %v521 = vld [vmem:[%s443 + $0x111] sm:$0xff]
        %v522 = vld [vmem:[%s443 + $0x121] sm:$0xff]
        %v523 = vld [vmem:[%s443 + $0x129] sm:$0xff]
        %v524 = vld [vmem:[%s443 + $0x139] sm:$0xff]
        %v525 = vld [vmem:[%s443 + $0x141] sm:$0xff]
        %v526 = vld [vmem:[%s443 + $0x151] sm:$0xff]
        %v527 = vld [vmem:[%s443 + $0x159] sm:$0xff]
        %v528 = vld [vmem:[%s443 + $0x169] sm:$0xff]
        %v529 = vld [vmem:[%s443 + $0x171] sm:$0xff]
        %v530 = vld [vmem:[%s443 + $0x181] sm:$0xff]
        %v531 = vld [vmem:[%s443 + $0x189] sm:$0xff]
        %v532 = vld [vmem:[%s443 + $0x199] sm:$0xff]
        %v533 = vld [vmem:[%s443 + $0x1a1] sm:$0xff]
        %v534 = vpack.c.bf16 %v499, %v498
        %v535 = vpack.c.bf16 %v501, %v500
        %v536 = vpack.c.bf16 %v503, %v502
        %v537 = vpack.c.bf16 %v505, %v504
        %v538 = vpack.c.bf16 %v507, %v506
        %v539 = vpack.c.bf16 %v509, %v508
        %v540 = vpack.c.bf16 %v511, %v510
        %v541 = vpack.c.bf16 %v513, %v512
        %v542 = vpack.c.bf16 %v515, %v514
        %v543 = vpack.c.bf16 %v517, %v516
        %v544 = vpack.c.bf16 %v519, %v518
        %v545 = vpack.c.bf16 %v521, %v520
        %v546 = vpack.c.bf16 %v523, %v522
        %v547 = vpack.c.bf16 %v525, %v524
        %v548 = vpack.c.bf16 %v527, %v526
        %v549 = vpack.c.bf16 %v529, %v528
        %v550 = vpack.c.bf16 %v531, %v530
        %v551 = vpack.c.bf16 %v533, %v532
        %v552 = vld [vmem:[%s443 + $0x2] sm:$0xff]
        %v553 = vld [vmem:[%s443 + $0xa] sm:$0xff]
        %v554 = vld [vmem:[%s443 + $0x1a] sm:$0xff]
        %v555 = vld [vmem:[%s443 + $0x22] sm:$0xff]
        %v556 = vld [vmem:[%s443 + $0x32] sm:$0xff]
        %v557 = vld [vmem:[%s443 + $0x3a] sm:$0xff]
        %v558 = vld [vmem:[%s443 + $0x4a] sm:$0xff]
        %v559 = vld [vmem:[%s443 + $0x52] sm:$0xff]
        %v560 = vld [vmem:[%s443 + $0x62] sm:$0xff]
        %v561 = vld [vmem:[%s443 + $0x6a] sm:$0xff]
        %v562 = vld [vmem:[%s443 + $0x7a] sm:$0xff]
        %v563 = vld [vmem:[%s443 + $0x82] sm:$0xff]
        %v564 = vld [vmem:[%s443 + $0x92] sm:$0xff]
        %v565 = vld [vmem:[%s443 + $0x9a] sm:$0xff]
        %v566 = vld [vmem:[%s443 + $0xaa] sm:$0xff]
        %v567 = vld [vmem:[%s443 + $0xb2] sm:$0xff]
        %v568 = vld [vmem:[%s443 + $0xc2] sm:$0xff]
        %v569 = vld [vmem:[%s443 + $0xca] sm:$0xff]
        %v570 = vld [vmem:[%s443 + $0xda] sm:$0xff]
        %v571 = vld [vmem:[%s443 + $0xe2] sm:$0xff]
        %v572 = vld [vmem:[%s443 + $0xf2] sm:$0xff]
        %v573 = vld [vmem:[%s443 + $0xfa] sm:$0xff]
        %v574 = vld [vmem:[%s443 + $0x10a] sm:$0xff]
        %v575 = vld [vmem:[%s443 + $0x112] sm:$0xff]
        %v576 = vld [vmem:[%s443 + $0x122] sm:$0xff]
        %v577 = vld [vmem:[%s443 + $0x12a] sm:$0xff]
        %v578 = vld [vmem:[%s443 + $0x13a] sm:$0xff]
        %v579 = vld [vmem:[%s443 + $0x142] sm:$0xff]
        %v580 = vld [vmem:[%s443 + $0x152] sm:$0xff]
        %v581 = vld [vmem:[%s443 + $0x15a] sm:$0xff]
        %v582 = vld [vmem:[%s443 + $0x16a] sm:$0xff]
        %v583 = vld [vmem:[%s443 + $0x172] sm:$0xff]
        %v584 = vld [vmem:[%s443 + $0x182] sm:$0xff]
        %v585 = vld [vmem:[%s443 + $0x18a] sm:$0xff]
        %v586 = vld [vmem:[%s443 + $0x19a] sm:$0xff]
        %v587 = vld [vmem:[%s443 + $0x1a2] sm:$0xff]
        %v588 = vpack.c.bf16 %v553, %v552
        %v589 = vpack.c.bf16 %v555, %v554
        %v590 = vpack.c.bf16 %v557, %v556
        %v591 = vpack.c.bf16 %v559, %v558
        %v592 = vpack.c.bf16 %v561, %v560
        %v593 = vpack.c.bf16 %v563, %v562
        %v594 = vpack.c.bf16 %v565, %v564
        %v595 = vpack.c.bf16 %v567, %v566
        %v596 = vpack.c.bf16 %v569, %v568
        %v597 = vpack.c.bf16 %v571, %v570
        %v598 = vpack.c.bf16 %v573, %v572
        %v599 = vpack.c.bf16 %v575, %v574
        %v600 = vpack.c.bf16 %v577, %v576
        %v601 = vpack.c.bf16 %v579, %v578
        %v602 = vpack.c.bf16 %v581, %v580
        %v603 = vpack.c.bf16 %v583, %v582
        %v604 = vpack.c.bf16 %v585, %v584
        %v605 = vpack.c.bf16 %v587, %v586
        %s606 = sadd.s32 %s240, 2
        %s607 = smul.u32 %s606, 24
        %s608 = scalar_lea.vmem %s236, %s607
        %v609 = vld [vmem:[%s608] sm:$0xff]
        %v610 = vld [vmem:[%s608 + $0x8] sm:$0xff]
        %v611 = vld [vmem:[%s608 + $0x18] sm:$0xff]
        %v612 = vld [vmem:[%s608 + $0x20] sm:$0xff]
        %v613 = vld [vmem:[%s608 + $0x30] sm:$0xff]
        %v614 = vld [vmem:[%s608 + $0x38] sm:$0xff]
        %v615 = vld [vmem:[%s608 + $0x48] sm:$0xff]
        %v616 = vld [vmem:[%s608 + $0x50] sm:$0xff]
        %v617 = vld [vmem:[%s608 + $0x60] sm:$0xff]
        %v618 = vld [vmem:[%s608 + $0x68] sm:$0xff]
        %v619 = vld [vmem:[%s608 + $0x78] sm:$0xff]
        %v620 = vld [vmem:[%s608 + $0x80] sm:$0xff]
        %v621 = vld [vmem:[%s608 + $0x90] sm:$0xff]
        %v622 = vld [vmem:[%s608 + $0x98] sm:$0xff]
        %v623 = vld [vmem:[%s608 + $0xa8] sm:$0xff]
        %v624 = vld [vmem:[%s608 + $0xb0] sm:$0xff]
        %v625 = vld [vmem:[%s608 + $0xc0] sm:$0xff]
        %v626 = vld [vmem:[%s608 + $0xc8] sm:$0xff]
        %v627 = vld [vmem:[%s608 + $0xd8] sm:$0xff]
        %v628 = vld [vmem:[%s608 + $0xe0] sm:$0xff]
        %v629 = vld [vmem:[%s608 + $0xf0] sm:$0xff]
        %v630 = vld [vmem:[%s608 + $0xf8] sm:$0xff]
        %v631 = vld [vmem:[%s608 + $0x108] sm:$0xff]
        %v632 = vld [vmem:[%s608 + $0x110] sm:$0xff]
        %v633 = vld [vmem:[%s608 + $0x120] sm:$0xff]
        %v634 = vld [vmem:[%s608 + $0x128] sm:$0xff]
        %v635 = vld [vmem:[%s608 + $0x138] sm:$0xff]
        %v636 = vld [vmem:[%s608 + $0x140] sm:$0xff]
        %v637 = vld [vmem:[%s608 + $0x150] sm:$0xff]
        %v638 = vld [vmem:[%s608 + $0x158] sm:$0xff]
        %v639 = vld [vmem:[%s608 + $0x168] sm:$0xff]
        %v640 = vld [vmem:[%s608 + $0x170] sm:$0xff]
        %v641 = vld [vmem:[%s608 + $0x180] sm:$0xff]
        %v642 = vld [vmem:[%s608 + $0x188] sm:$0xff]
        %v643 = vld [vmem:[%s608 + $0x198] sm:$0xff]
        %v644 = vld [vmem:[%s608 + $0x1a0] sm:$0xff]
        %v645 = vpack.c.bf16 %v610, %v609
        %v646 = vpack.c.bf16 %v612, %v611
        %v647 = vpack.c.bf16 %v614, %v613
        %v648 = vpack.c.bf16 %v616, %v615
        %v649 = vpack.c.bf16 %v618, %v617
        %v650 = vpack.c.bf16 %v620, %v619
        %v651 = vpack.c.bf16 %v622, %v621
        %v652 = vpack.c.bf16 %v624, %v623
        %v653 = vpack.c.bf16 %v626, %v625
        %v654 = vpack.c.bf16 %v628, %v627
        %v655 = vpack.c.bf16 %v630, %v629
        %v656 = vpack.c.bf16 %v632, %v631
        %v657 = vpack.c.bf16 %v634, %v633
        %v658 = vpack.c.bf16 %v636, %v635
        %v659 = vpack.c.bf16 %v638, %v637
        %v660 = vpack.c.bf16 %v640, %v639
        %v661 = vpack.c.bf16 %v642, %v641
        %v662 = vpack.c.bf16 %v644, %v643
        %v663 = vld [vmem:[%s608 + $0x1] sm:$0xff]
        %v664 = vld [vmem:[%s608 + $0x9] sm:$0xff]
        %v665 = vld [vmem:[%s608 + $0x19] sm:$0xff]
        %v666 = vld [vmem:[%s608 + $0x21] sm:$0xff]
        %v667 = vld [vmem:[%s608 + $0x31] sm:$0xff]
        %v668 = vld [vmem:[%s608 + $0x39] sm:$0xff]
        %v669 = vld [vmem:[%s608 + $0x49] sm:$0xff]
        %v670 = vld [vmem:[%s608 + $0x51] sm:$0xff]
        %v671 = vld [vmem:[%s608 + $0x61] sm:$0xff]
        %v672 = vld [vmem:[%s608 + $0x69] sm:$0xff]
        %v673 = vld [vmem:[%s608 + $0x79] sm:$0xff]
        %v674 = vld [vmem:[%s608 + $0x81] sm:$0xff]
        %v675 = vld [vmem:[%s608 + $0x91] sm:$0xff]
        %v676 = vld [vmem:[%s608 + $0x99] sm:$0xff]
        %v677 = vld [vmem:[%s608 + $0xa9] sm:$0xff]
        %v678 = vld [vmem:[%s608 + $0xb1] sm:$0xff]
        %v679 = vld [vmem:[%s608 + $0xc1] sm:$0xff]
        %v680 = vld [vmem:[%s608 + $0xc9] sm:$0xff]
        %v681 = vld [vmem:[%s608 + $0xd9] sm:$0xff]
        %v682 = vld [vmem:[%s608 + $0xe1] sm:$0xff]
        %v683 = vld [vmem:[%s608 + $0xf1] sm:$0xff]
        %v684 = vld [vmem:[%s608 + $0xf9] sm:$0xff]
        %v685 = vld [vmem:[%s608 + $0x109] sm:$0xff]
        %v686 = vld [vmem:[%s608 + $0x111] sm:$0xff]
        %v687 = vld [vmem:[%s608 + $0x121] sm:$0xff]
        %v688 = vld [vmem:[%s608 + $0x129] sm:$0xff]
        %v689 = vld [vmem:[%s608 + $0x139] sm:$0xff]
        %v690 = vld [vmem:[%s608 + $0x141] sm:$0xff]
        %v691 = vld [vmem:[%s608 + $0x151] sm:$0xff]
        %v692 = vld [vmem:[%s608 + $0x159] sm:$0xff]
        %v693 = vld [vmem:[%s608 + $0x169] sm:$0xff]
        %v694 = vld [vmem:[%s608 + $0x171] sm:$0xff]
        %v695 = vld [vmem:[%s608 + $0x181] sm:$0xff]
        %v696 = vld [vmem:[%s608 + $0x189] sm:$0xff]
        %v697 = vld [vmem:[%s608 + $0x199] sm:$0xff]
        %v698 = vld [vmem:[%s608 + $0x1a1] sm:$0xff]
        %v699 = vpack.c.bf16 %v664, %v663
        %v700 = vpack.c.bf16 %v666, %v665
        %v701 = vpack.c.bf16 %v668, %v667
        %v702 = vpack.c.bf16 %v670, %v669
        %v703 = vpack.c.bf16 %v672, %v671
        %v704 = vpack.c.bf16 %v674, %v673
        %v705 = vpack.c.bf16 %v676, %v675
        %v706 = vpack.c.bf16 %v678, %v677
        %v707 = vpack.c.bf16 %v680, %v679
        %v708 = vpack.c.bf16 %v682, %v681
        %v709 = vpack.c.bf16 %v684, %v683
        %v710 = vpack.c.bf16 %v686, %v685
        %v711 = vpack.c.bf16 %v688, %v687
        %v712 = vpack.c.bf16 %v690, %v689
        %v713 = vpack.c.bf16 %v692, %v691
        %v714 = vpack.c.bf16 %v694, %v693
        %v715 = vpack.c.bf16 %v696, %v695
        %v716 = vpack.c.bf16 %v698, %v697
        %v717 = vld [vmem:[%s608 + $0x2] sm:$0xff]
        %v718 = vld [vmem:[%s608 + $0xa] sm:$0xff]
        %v719 = vld [vmem:[%s608 + $0x1a] sm:$0xff]
        %v720 = vld [vmem:[%s608 + $0x22] sm:$0xff]
        %v721 = vld [vmem:[%s608 + $0x32] sm:$0xff]
        %v722 = vld [vmem:[%s608 + $0x3a] sm:$0xff]
        %v723 = vld [vmem:[%s608 + $0x4a] sm:$0xff]
        %v724 = vld [vmem:[%s608 + $0x52] sm:$0xff]
        %v725 = vld [vmem:[%s608 + $0x62] sm:$0xff]
        %v726 = vld [vmem:[%s608 + $0x6a] sm:$0xff]
        %v727 = vld [vmem:[%s608 + $0x7a] sm:$0xff]
        %v728 = vld [vmem:[%s608 + $0x82] sm:$0xff]
        %v729 = vld [vmem:[%s608 + $0x92] sm:$0xff]
        %v730 = vld [vmem:[%s608 + $0x9a] sm:$0xff]
        %v731 = vld [vmem:[%s608 + $0xaa] sm:$0xff]
        %v732 = vld [vmem:[%s608 + $0xb2] sm:$0xff]
        %v733 = vld [vmem:[%s608 + $0xc2] sm:$0xff]
        %v734 = vld [vmem:[%s608 + $0xca] sm:$0xff]
        %v735 = vld [vmem:[%s608 + $0xda] sm:$0xff]
        %v736 = vld [vmem:[%s608 + $0xe2] sm:$0xff]
        %v737 = vld [vmem:[%s608 + $0xf2] sm:$0xff]
        %v738 = vld [vmem:[%s608 + $0xfa] sm:$0xff]
        %v739 = vld [vmem:[%s608 + $0x10a] sm:$0xff]
        %v740 = vld [vmem:[%s608 + $0x112] sm:$0xff]
        %v741 = vld [vmem:[%s608 + $0x122] sm:$0xff]
        %v742 = vld [vmem:[%s608 + $0x12a] sm:$0xff]
        %v743 = vld [vmem:[%s608 + $0x13a] sm:$0xff]
        %v744 = vld [vmem:[%s608 + $0x142] sm:$0xff]
        %v745 = vld [vmem:[%s608 + $0x152] sm:$0xff]
        %v746 = vld [vmem:[%s608 + $0x15a] sm:$0xff]
        %v747 = vld [vmem:[%s608 + $0x16a] sm:$0xff]
        %v748 = vld [vmem:[%s608 + $0x172] sm:$0xff]
        %v749 = vld [vmem:[%s608 + $0x182] sm:$0xff]
        %v750 = vld [vmem:[%s608 + $0x18a] sm:$0xff]
        %v751 = vld [vmem:[%s608 + $0x19a] sm:$0xff]
        %v752 = vld [vmem:[%s608 + $0x1a2] sm:$0xff]
        %v753 = vpack.c.bf16 %v718, %v717
        %v754 = vpack.c.bf16 %v720, %v719
        %v755 = vpack.c.bf16 %v722, %v721
        %v756 = vpack.c.bf16 %v724, %v723
        %v757 = vpack.c.bf16 %v726, %v725
        %v758 = vpack.c.bf16 %v728, %v727
        %v759 = vpack.c.bf16 %v730, %v729
        %v760 = vpack.c.bf16 %v732, %v731
        %v761 = vpack.c.bf16 %v734, %v733
        %v762 = vpack.c.bf16 %v736, %v735
        %v763 = vpack.c.bf16 %v738, %v737
        %v764 = vpack.c.bf16 %v740, %v739
        %v765 = vpack.c.bf16 %v742, %v741
        %v766 = vpack.c.bf16 %v744, %v743
        %v767 = vpack.c.bf16 %v746, %v745
        %v768 = vpack.c.bf16 %v748, %v747
        %v769 = vpack.c.bf16 %v750, %v749
        %v770 = vpack.c.bf16 %v752, %v751
        %v771 = vld [vmem:[%s1] sm:$0xf]
        %v772 = vld [vmem:[%s1 + $0x4] sm:$0xf]
        %v773 = vld [vmem:[%s1 + $0x8] sm:$0xf]
        %v774 = vld [vmem:[%s1 + $0xc] sm:$0xf]
        %v775 = vld [vmem:[%s1 + $0x10] sm:$0xf]
        %v776 = vld [vmem:[%s1 + $0x14] sm:$0xf]
        %v777 = vld [vmem:[%s1 + $0x18] sm:$0xf]
        %v778 = vld [vmem:[%s1 + $0x1c] sm:$0xf]
        %v779 = vld [vmem:[%s1 + $0x20] sm:$0xf]
        %v780 = vld [vmem:[%s1 + $0x24] sm:$0xf]
        %v781 = vld [vmem:[%s1 + $0x28] sm:$0xf]
        %v782 = vld [vmem:[%s1 + $0x2c] sm:$0xf]
        %v783 = vld [vmem:[%s1 + $0x30] sm:$0xf]
        %v784 = vld [vmem:[%s1 + $0x34] sm:$0xf]
        %v785 = vld [vmem:[%s1 + $0x38] sm:$0xf]
        %v786 = vld [vmem:[%s1 + $0x3c] sm:$0xf]
        %v787 = vld [vmem:[%s1 + $0x40] sm:$0xf]
        %v788 = vld [vmem:[%s1 + $0x44] sm:$0xf]
        %v789 = vld [vmem:[%s1 + $0x48] sm:$0xf]
        %v790 = vld [vmem:[%s1 + $0x4c] sm:$0xf]
        %v791 = vld [vmem:[%s1 + $0x50] sm:$0xf]
        %v792 = vld [vmem:[%s1 + $0x54] sm:$0xf]
        %v793 = vld [vmem:[%s1 + $0x58] sm:$0xf]
        %v794 = vld [vmem:[%s1 + $0x5c] sm:$0xf]
        %v795 = vld [vmem:[%s1 + $0x60] sm:$0xf]
        %v796 = vld [vmem:[%s1 + $0x64] sm:$0xf]
        %v797 = vld [vmem:[%s1 + $0x68] sm:$0xf]
        %v798 = vld [vmem:[%s1 + $0x6c] sm:$0xf]
        %v799 = vld [vmem:[%s1 + $0x70] sm:$0xf]
        %v800 = vld [vmem:[%s1 + $0x74] sm:$0xf]
        %v801 = vld [vmem:[%s1 + $0x78] sm:$0xf]
        %v802 = vld [vmem:[%s1 + $0x7c] sm:$0xf]
        %v803 = vld [vmem:[%s1 + $0x80] sm:$0xf]
        %v804 = vld [vmem:[%s1 + $0x84] sm:$0xf]
        %v805 = vld [vmem:[%s1 + $0x88] sm:$0xf]
        %v806 = vld [vmem:[%s1 + $0x8c] sm:$0xf]
        %v807 = vld [vmem:[%s1 + $0x90] sm:$0xf]
        %v808 = vld [vmem:[%s1 + $0x94] sm:$0xf]
        %v809 = vld [vmem:[%s1 + $0x98] sm:$0xf]
        %v810 = vld [vmem:[%s1 + $0x9c] sm:$0xf]
        %v811 = vld [vmem:[%s1 + $0xa0] sm:$0xf]
        %v812 = vld [vmem:[%s1 + $0xa4] sm:$0xf]
        %v813 = vld [vmem:[%s1 + $0xa8] sm:$0xf]
        %v814 = vld [vmem:[%s1 + $0xac] sm:$0xf]
        %v815 = vld [vmem:[%s1 + $0xb0] sm:$0xf]
        %v816 = vld [vmem:[%s1 + $0xb4] sm:$0xf]
        %v817 = vld [vmem:[%s1 + $0xb8] sm:$0xf]
        %v818 = vld [vmem:[%s1 + $0xbc] sm:$0xf]
        %v819 = vld [vmem:[%s1 + $0xc0] sm:$0xf]
        %v820 = vld [vmem:[%s1 + $0xc4] sm:$0xf]
        %v821 = vld [vmem:[%s1 + $0xc8] sm:$0xf]
        %v822 = vld [vmem:[%s1 + $0xcc] sm:$0xf]
        %v823 = vld [vmem:[%s1 + $0xd0] sm:$0xf]
        %v824 = vld [vmem:[%s1 + $0xd4] sm:$0xf]
        %v825 = vld [vmem:[%s1 + $0xd8] sm:$0xf]
        %v826 = vld [vmem:[%s1 + $0xdc] sm:$0xf]
        %v827 = vld [vmem:[%s1 + $0xe0] sm:$0xf]
        %v828 = vld [vmem:[%s1 + $0xe4] sm:$0xf]
        %v829 = vld [vmem:[%s1 + $0xe8] sm:$0xf]
        %v830 = vld [vmem:[%s1 + $0xec] sm:$0xf]
        %v831 = vld [vmem:[%s1 + $0xf0] sm:$0xf]
        %v832 = vld [vmem:[%s1 + $0xf4] sm:$0xf]
        %v833 = vld [vmem:[%s1 + $0xf8] sm:$0xf]
        %v834 = vld [vmem:[%s1 + $0xfc] sm:$0xf]
        %v835 = vld [vmem:[%s1 + $0x100] sm:$0xf]
        %v836 = vld [vmem:[%s1 + $0x104] sm:$0xf]
        %v837 = vld [vmem:[%s1 + $0x108] sm:$0xf]
        %v838 = vld [vmem:[%s1 + $0x10c] sm:$0xf]
        %v839 = vld [vmem:[%s1 + $0x110] sm:$0xf]
        %v840 = vld [vmem:[%s1 + $0x114] sm:$0xf]
        %v841 = vld [vmem:[%s1 + $0x118] sm:$0xf]
        %v842 = vld [vmem:[%s1 + $0x11c] sm:$0xf]
        %v843 = vld [vmem:[%s1 + $0x120] sm:$0xf]
        %v844 = vld [vmem:[%s1 + $0x124] sm:$0xf]
        %v845 = vld [vmem:[%s1 + $0x128] sm:$0xf]
        %v846 = vld [vmem:[%s1 + $0x12c] sm:$0xf]
        %v847 = vld [vmem:[%s1 + $0x130] sm:$0xf]
        %v848 = vld [vmem:[%s1 + $0x134] sm:$0xf]
        %v849 = vld [vmem:[%s1 + $0x138] sm:$0xf]
        %v850 = vld [vmem:[%s1 + $0x13c] sm:$0xf]
        %v851 = vld [vmem:[%s1 + $0x140] sm:$0xf]
        %v852 = vld [vmem:[%s1 + $0x144] sm:$0xf]
        %v853 = vld [vmem:[%s1 + $0x148] sm:$0xf]
        %v854 = vld [vmem:[%s1 + $0x14c] sm:$0xf]
        %v855 = vld [vmem:[%s1 + $0x150] sm:$0xf]
        %v856 = vld [vmem:[%s1 + $0x154] sm:$0xf]
        %v857 = vld [vmem:[%s1 + $0x158] sm:$0xf]
        %v858 = vld [vmem:[%s1 + $0x15c] sm:$0xf]
        %v859 = vld [vmem:[%s1 + $0x160] sm:$0xf]
        %v860 = vld [vmem:[%s1 + $0x164] sm:$0xf]
        %v861 = vld [vmem:[%s1 + $0x168] sm:$0xf]
        %v862 = vld [vmem:[%s1 + $0x16c] sm:$0xf]
        %v863 = vld [vmem:[%s1 + $0x170] sm:$0xf]
        %v864 = vld [vmem:[%s1 + $0x174] sm:$0xf]
        %v865 = vld [vmem:[%s1 + $0x178] sm:$0xf]
        %v866 = vld [vmem:[%s1 + $0x17c] sm:$0xf]
        %v867 = vld [vmem:[%s1 + $0x180] sm:$0xf]
        %v868 = vld [vmem:[%s1 + $0x184] sm:$0xf]
        %v869 = vld [vmem:[%s1 + $0x188] sm:$0xf]
        %v870 = vld [vmem:[%s1 + $0x18c] sm:$0xf]
        %v871 = vld [vmem:[%s1 + $0x190] sm:$0xf]
        %v872 = vld [vmem:[%s1 + $0x194] sm:$0xf]
        %v873 = vld [vmem:[%s1 + $0x198] sm:$0xf]
        %v874 = vld [vmem:[%s1 + $0x19c] sm:$0xf]
        %v875 = vld [vmem:[%s1 + $0x1a0] sm:$0xf]
        %v876 = vld [vmem:[%s1 + $0x1a4] sm:$0xf]
        %v877 = vld [vmem:[%s1 + $0x1a8] sm:$0xf]
        %v878 = vld [vmem:[%s1 + $0x1ac] sm:$0xf]
        %v879 = vld [vmem:[%s1 + $0x1b0] sm:$0xf]
        %v880 = vld [vmem:[%s1 + $0x1b4] sm:$0xf]
        %v881 = vld [vmem:[%s1 + $0x1b8] sm:$0xf]
        %v882 = vld [vmem:[%s1 + $0x1bc] sm:$0xf]
        %v883 = vld [vmem:[%s1 + $0x1c0] sm:$0xf]
        %v884 = vld [vmem:[%s1 + $0x1c4] sm:$0xf]
        %v885 = vld [vmem:[%s1 + $0x1c8] sm:$0xf]
        %v886 = vld [vmem:[%s1 + $0x1cc] sm:$0xf]
        %v887 = vld [vmem:[%s1 + $0x1d0] sm:$0xf]
        %v888 = vld [vmem:[%s1 + $0x1d4] sm:$0xf]
        %v889 = vld [vmem:[%s1 + $0x1d8] sm:$0xf]
        %v890 = vld [vmem:[%s1 + $0x1dc] sm:$0xf]
        %v891 = vld [vmem:[%s1 + $0x1e0] sm:$0xf]
        %v892 = vld [vmem:[%s1 + $0x1e4] sm:$0xf]
        %v893 = vld [vmem:[%s1 + $0x1e8] sm:$0xf]
        %v894 = vld [vmem:[%s1 + $0x1ec] sm:$0xf]
        %v895 = vld [vmem:[%s1 + $0x1f0] sm:$0xf]
        %v896 = vld [vmem:[%s1 + $0x1f4] sm:$0xf]
        %v897 = vld [vmem:[%s1 + $0x1f8] sm:$0xf]
        %v898 = vld [vmem:[%s1 + $0x1fc] sm:$0xf]
        %v899 = vld [vmem:[%s1 + $0x200] sm:$0xf]
        %v900 = vld [vmem:[%s1 + $0x204] sm:$0xf]
        %v901 = vld [vmem:[%s1 + $0x208] sm:$0xf]
        %v902 = vld [vmem:[%s1 + $0x20c] sm:$0xf]
        %v903 = vld [vmem:[%s1 + $0x210] sm:$0xf]
        %v904 = vld [vmem:[%s1 + $0x214] sm:$0xf]
        %v905 = vld [vmem:[%s1 + $0x218] sm:$0xf]
        %v906 = vld [vmem:[%s1 + $0x21c] sm:$0xf]
        %v907 = vld [vmem:[%s1 + $0x220] sm:$0xf]
        %v908 = vld [vmem:[%s1 + $0x224] sm:$0xf]
        %v909 = vld [vmem:[%s1 + $0x228] sm:$0xf]
        %v910 = vld [vmem:[%s1 + $0x22c] sm:$0xf]
        %v911 = vld [vmem:[%s1 + $0x230] sm:$0xf]
        %v912 = vld [vmem:[%s1 + $0x234] sm:$0xf]
        %v913 = vld [vmem:[%s1 + $0x238] sm:$0xf]
        %v914 = vld [vmem:[%s1 + $0x23c] sm:$0xf]
        %v915 = vld [vmem:[%s2] sm:$0x1]
        %v917 = vlaneseq
        %v918 = vshrl.u32 %v917, 7
        %v919 = vsub.s32 0, %v918
        %v920 = vrot.slane %v915, %v919
        %v1066 = vunpack.c.l.b16 %v771
        %v1067 = vunpack.c.l.b16 %v772
        %v1068 = vunpack.c.l.b16 %v773
        %v1069 = vunpack.c.l.b16 %v774
        %v1070 = vunpack.c.l.b16 %v775
        %v1071 = vunpack.c.l.b16 %v776
        %v1072 = vunpack.c.l.b16 %v777
        %v1073 = vunpack.c.l.b16 %v778
        %v1074 = vunpack.c.l.b16 %v779
        %v1075 = vunpack.c.l.b16 %v780
        %v1076 = vunpack.c.l.b16 %v781
        %v1077 = vunpack.c.l.b16 %v782
        %v1078 = vunpack.c.l.b16 %v783
        %v1079 = vunpack.c.l.b16 %v784
        %v1080 = vunpack.c.l.b16 %v785
        %v1081 = vunpack.c.l.b16 %v786
        %v1082 = vunpack.c.l.b16 %v787
        %v1083 = vunpack.c.l.b16 %v788
        %v1084 = vunpack.c.l.b16 %v789
        %v1085 = vunpack.c.l.b16 %v790
        %v1086 = vunpack.c.l.b16 %v791
        %v1087 = vunpack.c.l.b16 %v792
        %v1088 = vunpack.c.l.b16 %v793
        %v1089 = vunpack.c.l.b16 %v794
        %v1090 = vunpack.c.l.b16 %v795
        %v1091 = vunpack.c.l.b16 %v796
        %v1092 = vunpack.c.l.b16 %v797
        %v1093 = vunpack.c.l.b16 %v798
        %v1094 = vunpack.c.l.b16 %v799
        %v1095 = vunpack.c.l.b16 %v800
        %v1096 = vunpack.c.l.b16 %v801
        %v1097 = vunpack.c.l.b16 %v802
        %v1098 = vunpack.c.l.b16 %v803
        %v1099 = vunpack.c.l.b16 %v804
        %v1100 = vunpack.c.l.b16 %v805
        %v1101 = vunpack.c.l.b16 %v806
        %v1102 = vunpack.c.l.b16 %v807
        %v1103 = vunpack.c.l.b16 %v808
        %v1104 = vunpack.c.l.b16 %v809
        %v1105 = vunpack.c.l.b16 %v810
        %v1106 = vunpack.c.l.b16 %v811
        %v1107 = vunpack.c.l.b16 %v812
        %v1108 = vunpack.c.l.b16 %v813
        %v1109 = vunpack.c.l.b16 %v814
        %v1110 = vunpack.c.l.b16 %v815
        %v1111 = vunpack.c.l.b16 %v816
        %v1112 = vunpack.c.l.b16 %v817
        %v1113 = vunpack.c.l.b16 %v818
        %v1114 = vunpack.c.l.b16 %v819
        %v1115 = vunpack.c.l.b16 %v820
        %v1116 = vunpack.c.l.b16 %v821
        %v1117 = vunpack.c.l.b16 %v822
        %v1118 = vunpack.c.l.b16 %v823
        %v1119 = vunpack.c.l.b16 %v824
        %v1120 = vunpack.c.l.b16 %v825
        %v1121 = vunpack.c.l.b16 %v826
        %v1122 = vunpack.c.l.b16 %v827
        %v1123 = vunpack.c.l.b16 %v828
        %v1124 = vunpack.c.l.b16 %v829
        %v1125 = vunpack.c.l.b16 %v830
        %v1126 = vunpack.c.l.b16 %v831
        %v1127 = vunpack.c.l.b16 %v832
        %v1128 = vunpack.c.l.b16 %v833
        %v1129 = vunpack.c.l.b16 %v834
        %v1130 = vunpack.c.l.b16 %v835
        %v1131 = vunpack.c.l.b16 %v836
        %v1132 = vunpack.c.l.b16 %v837
        %v1133 = vunpack.c.l.b16 %v838
        %v1134 = vunpack.c.l.b16 %v839
        %v1135 = vunpack.c.l.b16 %v840
        %v1136 = vunpack.c.l.b16 %v841
        %v1137 = vunpack.c.l.b16 %v842
        %v1138 = vunpack.c.l.b16 %v843
        %v1139 = vunpack.c.l.b16 %v844
        %v1140 = vunpack.c.l.b16 %v845
        %v1141 = vunpack.c.l.b16 %v846
        %v1142 = vunpack.c.l.b16 %v847
        %v1143 = vunpack.c.l.b16 %v848
        %v1144 = vunpack.c.l.b16 %v849
        %v1145 = vunpack.c.l.b16 %v850
        %v1146 = vunpack.c.l.b16 %v851
        %v1147 = vunpack.c.l.b16 %v852
        %v1148 = vunpack.c.l.b16 %v853
        %v1149 = vunpack.c.l.b16 %v854
        %v1150 = vunpack.c.l.b16 %v855
        %v1151 = vunpack.c.l.b16 %v856
        %v1152 = vunpack.c.l.b16 %v857
        %v1153 = vunpack.c.l.b16 %v858
        %v1154 = vunpack.c.l.b16 %v859
        %v1155 = vunpack.c.l.b16 %v860
        %v1156 = vunpack.c.l.b16 %v861
        %v1157 = vunpack.c.l.b16 %v862
        %v1158 = vunpack.c.l.b16 %v863
        %v1159 = vunpack.c.l.b16 %v864
        %v1160 = vunpack.c.l.b16 %v865
        %v1161 = vunpack.c.l.b16 %v866
        %v1162 = vunpack.c.l.b16 %v867
        %v1163 = vunpack.c.l.b16 %v868
        %v1164 = vunpack.c.l.b16 %v869
        %v1165 = vunpack.c.l.b16 %v870
        %v1166 = vunpack.c.l.b16 %v871
        %v1167 = vunpack.c.l.b16 %v872
        %v1168 = vunpack.c.l.b16 %v873
        %v1169 = vunpack.c.l.b16 %v874
        %v1170 = vunpack.c.l.b16 %v875
        %v1171 = vunpack.c.l.b16 %v876
        %v1172 = vunpack.c.l.b16 %v877
        %v1173 = vunpack.c.l.b16 %v878
        %v1174 = vunpack.c.l.b16 %v879
        %v1175 = vunpack.c.l.b16 %v880
        %v1176 = vunpack.c.l.b16 %v881
        %v1177 = vunpack.c.l.b16 %v882
        %v1178 = vunpack.c.l.b16 %v883
        %v1179 = vunpack.c.l.b16 %v884
        %v1180 = vunpack.c.l.b16 %v885
        %v1181 = vunpack.c.l.b16 %v886
        %v1182 = vunpack.c.l.b16 %v887
        %v1183 = vunpack.c.l.b16 %v888
        %v1184 = vunpack.c.l.b16 %v889
        %v1185 = vunpack.c.l.b16 %v890
        %v1186 = vunpack.c.l.b16 %v891
        %v1187 = vunpack.c.l.b16 %v892
        %v1188 = vunpack.c.l.b16 %v893
        %v1189 = vunpack.c.l.b16 %v894
        %v1190 = vunpack.c.l.b16 %v895
        %v1191 = vunpack.c.l.b16 %v896
        %v1192 = vunpack.c.l.b16 %v897
        %v1193 = vunpack.c.l.b16 %v898
        %v1194 = vunpack.c.l.b16 %v899
        %v1195 = vunpack.c.l.b16 %v900
        %v1196 = vunpack.c.l.b16 %v901
        %v1197 = vunpack.c.l.b16 %v902
        %v1198 = vunpack.c.l.b16 %v903
        %v1199 = vunpack.c.l.b16 %v904
        %v1200 = vunpack.c.l.b16 %v905
        %v1201 = vunpack.c.l.b16 %v906
        %v1202 = vunpack.c.l.b16 %v907
        %v1203 = vunpack.c.l.b16 %v908
        %v1204 = vunpack.c.l.b16 %v909
        %v1205 = vunpack.c.l.b16 %v910
        %v1206 = vunpack.c.l.b16 %v911
        %v1207 = vunpack.c.l.b16 %v912
        %v1208 = vunpack.c.l.b16 %v913
        %v1209 = vunpack.c.l.b16 %v914
        %v1210 = vpack.c.b16 %v1067, %v1066
        %v1211 = vpack.c.b16 %v1069, %v1068
        %v1212 = vpack.c.b16 %v1071, %v1070
        %v1213 = vpack.c.b16 %v1073, %v1072
        %v1214 = vpack.c.b16 %v1075, %v1074
        %v1215 = vpack.c.b16 %v1077, %v1076
        %v1216 = vpack.c.b16 %v1079, %v1078
        %v1217 = vpack.c.b16 %v1081, %v1080
        %v1218 = vpack.c.b16 %v1083, %v1082
        %v1219 = vpack.c.b16 %v1085, %v1084
        %v1220 = vpack.c.b16 %v1087, %v1086
        %v1221 = vpack.c.b16 %v1089, %v1088
        %v1222 = vpack.c.b16 %v1091, %v1090
        %v1223 = vpack.c.b16 %v1093, %v1092
        %v1224 = vpack.c.b16 %v1095, %v1094
        %v1225 = vpack.c.b16 %v1097, %v1096
        %v1226 = vpack.c.b16 %v1099, %v1098
        %v1227 = vpack.c.b16 %v1101, %v1100
        %v1228 = vpack.c.b16 %v1103, %v1102
        %v1229 = vpack.c.b16 %v1105, %v1104
        %v1230 = vpack.c.b16 %v1107, %v1106
        %v1231 = vpack.c.b16 %v1109, %v1108
        %v1232 = vpack.c.b16 %v1111, %v1110
        %v1233 = vpack.c.b16 %v1113, %v1112
        %v1234 = vpack.c.b16 %v1115, %v1114
        %v1235 = vpack.c.b16 %v1117, %v1116
        %v1236 = vpack.c.b16 %v1119, %v1118
        %v1237 = vpack.c.b16 %v1121, %v1120
        %v1238 = vpack.c.b16 %v1123, %v1122
        %v1239 = vpack.c.b16 %v1125, %v1124
        %v1240 = vpack.c.b16 %v1127, %v1126
        %v1241 = vpack.c.b16 %v1129, %v1128
        %v1242 = vpack.c.b16 %v1131, %v1130
        %v1243 = vpack.c.b16 %v1133, %v1132
        %v1244 = vpack.c.b16 %v1135, %v1134
        %v1245 = vpack.c.b16 %v1137, %v1136
        %v1246 = vpack.c.b16 %v1139, %v1138
        %v1247 = vpack.c.b16 %v1141, %v1140
        %v1248 = vpack.c.b16 %v1143, %v1142
        %v1249 = vpack.c.b16 %v1145, %v1144
        %v1250 = vpack.c.b16 %v1147, %v1146
        %v1251 = vpack.c.b16 %v1149, %v1148
        %v1252 = vpack.c.b16 %v1151, %v1150
        %v1253 = vpack.c.b16 %v1153, %v1152
        %v1254 = vpack.c.b16 %v1155, %v1154
        %v1255 = vpack.c.b16 %v1157, %v1156
        %v1256 = vpack.c.b16 %v1159, %v1158
        %v1257 = vpack.c.b16 %v1161, %v1160
        %v1258 = vpack.c.b16 %v1163, %v1162
        %v1259 = vpack.c.b16 %v1165, %v1164
        %v1260 = vpack.c.b16 %v1167, %v1166
        %v1261 = vpack.c.b16 %v1169, %v1168
        %v1262 = vpack.c.b16 %v1171, %v1170
        %v1263 = vpack.c.b16 %v1173, %v1172
        %v1264 = vpack.c.b16 %v1175, %v1174
        %v1265 = vpack.c.b16 %v1177, %v1176
        %v1266 = vpack.c.b16 %v1179, %v1178
        %v1267 = vpack.c.b16 %v1181, %v1180
        %v1268 = vpack.c.b16 %v1183, %v1182
        %v1269 = vpack.c.b16 %v1185, %v1184
        %v1270 = vpack.c.b16 %v1187, %v1186
        %v1271 = vpack.c.b16 %v1189, %v1188
        %v1272 = vpack.c.b16 %v1191, %v1190
        %v1273 = vpack.c.b16 %v1193, %v1192
        %v1274 = vpack.c.b16 %v1195, %v1194
        %v1275 = vpack.c.b16 %v1197, %v1196
        %v1276 = vpack.c.b16 %v1199, %v1198
        %v1277 = vpack.c.b16 %v1201, %v1200
        %v1278 = vpack.c.b16 %v1203, %v1202
        %v1279 = vpack.c.b16 %v1205, %v1204
        %v1280 = vpack.c.b16 %v1207, %v1206
        %v1281 = vpack.c.b16 %v1209, %v1208
        %1354 = vmatprep.subr.bf16.mxu0 0
        %1355 = vmatpush1.bf16.msra.mxu0 %v1210
        %1356 = vmatprep.subr.bf16.mxu0 0
        %1357 = vmatpush1.bf16.msra.mxu0 %v1211
        %1358 = vmatprep.subr.bf16.mxu0 0
        %1359 = vmatpush1.bf16.msra.mxu0 %v1212
        %1360 = vmatprep.subr.bf16.mxu0 0
        %1361 = vmatpush1.bf16.msra.mxu0 %v1213
        %1362 = vmatprep.subr.bf16.mxu0 0
        %1363 = vmatpush1.bf16.msra.mxu0 %v1214
        %1364 = vmatprep.subr.bf16.mxu0 0
        %1365 = vmatpush1.bf16.msra.mxu0 %v1215
        %1366 = vmatprep.subr.bf16.mxu0 0
        %1367 = vmatpush1.bf16.msra.mxu0 %v1216
        %1368 = vmatprep.subr.bf16.mxu0 0
        %1369 = vmatpush1.bf16.msra.mxu0 %v1217
        %1370 = vmatprep.subr.bf16.mxu0 0
        %1371 = vmatpush1.bf16.msra.mxu0 %v1218
        %1372 = vmatprep.subr.bf16.mxu0 0
        %1373 = vmatpush1.bf16.msra.mxu0 %v1219
        %1374 = vmatprep.subr.bf16.mxu0 0
        %1375 = vmatpush1.bf16.msra.mxu0 %v1220
        %1376 = vmatprep.subr.bf16.mxu0 0
        %1377 = vmatpush1.bf16.msra.mxu0 %v1221
        %1378 = vmatprep.subr.bf16.mxu0 0
        %1379 = vmatpush1.bf16.msra.mxu0 %v1222
        %1380 = vmatprep.subr.bf16.mxu0 0
        %1381 = vmatpush1.bf16.msra.mxu0 %v1223
        %1382 = vmatprep.subr.bf16.mxu0 0
        %1383 = vmatpush1.bf16.msra.mxu0 %v1224
        %1384 = vmatprep.subr.bf16.mxu0 0
        %1385 = vmatpush1.bf16.msra.mxu0 %v1225
        %1386 = vmatprep.mubr.bf16.mxu0 %v369
        %1387 = vmatmul.mubr.bf16.gmra.mrb[0].mxu0 %v315
        %v1388 = vpop.f32.mrb[0].mxu0
        %v1389 = vadd.f32 %v920, %v1388
        %v1390 = vpop.f32.mrb[0].mxu0
        %v1391 = vpop.f32.mrb[0].mxu0
        %v1392 = vadd.f32 %v920, %v1391
        %v1393 = vpop.f32.mrb[0].mxu0
        %1394 = vmatprep.mubr.bf16.mxu0 %v370
        %1395 = vmatmul.mubr.bf16.gmra.mrb[0].mxu0 %v316
        %v1396 = vpop.f32.mrb[0].mxu0
        %v1397 = vadd.f32 %v920, %v1396
        %v1398 = vpop.f32.mrb[0].mxu0
        %v1399 = vpop.f32.mrb[0].mxu0
        %v1400 = vadd.f32 %v920, %v1399
        %v1401 = vpop.f32.mrb[0].mxu0
        %1402 = vmatprep.mubr.bf16.mxu0 %v371
        %1403 = vmatmul.mubr.bf16.gmra.mrb[0].mxu0 %v317
        %v1404 = vpop.f32.mrb[0].mxu0
        %v1405 = vadd.f32 %v920, %v1404
        %v1406 = vpop.f32.mrb[0].mxu0
        %v1407 = vpop.f32.mrb[0].mxu0
        %v1408 = vadd.f32 %v920, %v1407
        %v1409 = vpop.f32.mrb[0].mxu0
        %1410 = vmatprep.mubr.bf16.mxu0 %v372
        %1411 = vmatmul.mubr.bf16.gmra.mrb[0].mxu0 %v318
        %v1412 = vpop.f32.mrb[0].mxu0
        %v1413 = vadd.f32 %v920, %v1412
        %v1414 = vpop.f32.mrb[0].mxu0
        %v1415 = vpop.f32.mrb[0].mxu0
        %v1416 = vadd.f32 %v920, %v1415
        %v1417 = vpop.f32.mrb[0].mxu0
        %1418 = vmatprep.mubr.bf16.mxu0 %v373
        %1419 = vmatmul.mubr.bf16.gmra.mrb[0].mxu0 %v319
        %v1420 = vpop.f32.mrb[0].mxu0
        %v1421 = vadd.f32 %v920, %v1420
        %v1422 = vpop.f32.mrb[0].mxu0
        %v1423 = vpop.f32.mrb[0].mxu0
        %v1424 = vadd.f32 %v920, %v1423
        %v1425 = vpop.f32.mrb[0].mxu0
        %1426 = vmatprep.mubr.bf16.mxu0 %v374
        %1427 = vmatmul.mubr.bf16.gmra.mrb[0].mxu0 %v320
        %v1428 = vpop.f32.mrb[0].mxu0
        %v1429 = vadd.f32 %v920, %v1428
        %v1430 = vpop.f32.mrb[0].mxu0
        %v1431 = vpop.f32.mrb[0].mxu0
        %v1432 = vadd.f32 %v920, %v1431
        %v1433 = vpop.f32.mrb[0].mxu0
        %1434 = vmatprep.mubr.bf16.mxu0 %v375
        %1435 = vmatmul.mubr.bf16.gmra.mrb[0].mxu0 %v321
        %v1436 = vpop.f32.mrb[0].mxu0
        %v1437 = vadd.f32 %v920, %v1436
        %v1438 = vpop.f32.mrb[0].mxu0
        %v1439 = vpop.f32.mrb[0].mxu0
        %v1440 = vadd.f32 %v920, %v1439
        %v1441 = vpop.f32.mrb[0].mxu0
        %1442 = vmatprep.mubr.bf16.mxu0 %v376
        %1443 = vmatmul.mubr.bf16.gmra.mrb[0].mxu0 %v322
        %v1444 = vpop.f32.mrb[0].mxu0
        %v1445 = vadd.f32 %v920, %v1444
        %v1446 = vpop.f32.mrb[0].mxu0
        %v1447 = vpop.f32.mrb[0].mxu0
        %v1448 = vadd.f32 %v920, %v1447
        %v1449 = vpop.f32.mrb[0].mxu0
        %1450 = vmatprep.mubr.bf16.mxu0 %v377
        %1451 = vmatmul.mubr.bf16.gmra.mrb[0].mxu0 %v323
        %v1452 = vpop.f32.mrb[0].mxu0
        %v1453 = vadd.f32 %v920, %v1452
        %v1454 = vpop.f32.mrb[0].mxu0
        %v1455 = vpop.f32.mrb[0].mxu0
        %v1456 = vadd.f32 %v920, %v1455
        %v1457 = vpop.f32.mrb[0].mxu0
        %1458 = vmatprep.mubr.bf16.mxu0 %v378
        %1459 = vmatmul.mubr.bf16.gmra.mrb[0].mxu0 %v324
        %v1460 = vpop.f32.mrb[0].mxu0
        %v1461 = vadd.f32 %v920, %v1460
        %v1462 = vpop.f32.mrb[0].mxu0
        %v1463 = vpop.f32.mrb[0].mxu0
        %v1464 = vadd.f32 %v920, %v1463
        %v1465 = vpop.f32.mrb[0].mxu0
        %1466 = vmatprep.mubr.bf16.mxu0 %v379
        %1467 = vmatmul.mubr.bf16.gmra.mrb[0].mxu0 %v325
        %v1468 = vpop.f32.mrb[0].mxu0
        %v1469 = vadd.f32 %v920, %v1468
        %v1470 = vpop.f32.mrb[0].mxu0
        %v1471 = vpop.f32.mrb[0].mxu0
        %v1472 = vadd.f32 %v920, %v1471
        %v1473 = vpop.f32.mrb[0].mxu0
        %1474 = vmatprep.mubr.bf16.mxu0 %v380
        %1475 = vmatmul.mubr.bf16.gmra.mrb[0].mxu0 %v326
        %v1476 = vpop.f32.mrb[0].mxu0
        %v1477 = vadd.f32 %v920, %v1476
        %v1478 = vpop.f32.mrb[0].mxu0
        %v1479 = vpop.f32.mrb[0].mxu0
        %v1480 = vadd.f32 %v920, %v1479
        %v1481 = vpop.f32.mrb[0].mxu0
        %1482 = vmatprep.mubr.bf16.mxu0 %v381
        %1483 = vmatmul.mubr.bf16.gmra.mrb[0].mxu0 %v327
        %v1484 = vpop.f32.mrb[0].mxu0
        %v1485 = vadd.f32 %v920, %v1484
        %v1486 = vpop.f32.mrb[0].mxu0
        %v1487 = vpop.f32.mrb[0].mxu0
        %v1488 = vadd.f32 %v920, %v1487
        %v1489 = vpop.f32.mrb[0].mxu0
        %1490 = vmatprep.mubr.bf16.mxu0 %v382
        %1491 = vmatmul.mubr.bf16.gmra.mrb[0].mxu0 %v328
        %v1492 = vpop.f32.mrb[0].mxu0
        %v1493 = vadd.f32 %v920, %v1492
        %v1494 = vpop.f32.mrb[0].mxu0
        %v1495 = vpop.f32.mrb[0].mxu0
        %v1496 = vadd.f32 %v920, %v1495
        %v1497 = vpop.f32.mrb[0].mxu0
        %1498 = vmatprep.mubr.bf16.mxu0 %v383
        %1499 = vmatmul.mubr.bf16.gmra.mrb[0].mxu0 %v329
        %v1500 = vpop.f32.mrb[0].mxu0
        %v1501 = vadd.f32 %v920, %v1500
        %v1502 = vpop.f32.mrb[0].mxu0
        %v1503 = vpop.f32.mrb[0].mxu0
        %v1504 = vadd.f32 %v920, %v1503
        %v1505 = vpop.f32.mrb[0].mxu0
        %1506 = vmatprep.mubr.bf16.mxu0 %v384
        %1507 = vmatmul.mubr.bf16.gmra.mrb[0].mxu0 %v330
        %v1508 = vpop.f32.mrb[0].mxu0
        %v1509 = vadd.f32 %v920, %v1508
        %v1510 = vpop.f32.mrb[0].mxu0
        %v1511 = vpop.f32.mrb[0].mxu0
        %v1512 = vadd.f32 %v920, %v1511
        %v1513 = vpop.f32.mrb[0].mxu0
        %1514 = vmatprep.mubr.bf16.mxu0 %v385
        %1515 = vmatmul.mubr.bf16.gmra.mrb[0].mxu0 %v331
        %v1516 = vpop.f32.mrb[0].mxu0
        %v1517 = vadd.f32 %v920, %v1516
        %v1518 = vpop.f32.mrb[0].mxu0
        %v1519 = vpop.f32.mrb[0].mxu0
        %v1520 = vadd.f32 %v920, %v1519
        %v1521 = vpop.f32.mrb[0].mxu0
        %1522 = vmatprep.mubr.bf16.mxu0 %v386
        %1523 = vmatmul.mubr.bf16.gmra.mrb[0].mxu0 %v332
        %v1524 = vpop.f32.mrb[0].mxu0
        %v1525 = vadd.f32 %v920, %v1524
        %v1526 = vpop.f32.mrb[0].mxu0
        %v1527 = vpop.f32.mrb[0].mxu0
        %v1528 = vadd.f32 %v920, %v1527
        %v1529 = vpop.f32.mrb[0].mxu0
        %1530 = vdwg.mxu0
        %1531 = vmatprep.subr.bf16.mxu0 0
        %1532 = vmatpush1.bf16.msra.mxu0 %v1226
        %1533 = vmatprep.subr.bf16.mxu0 0
        %1534 = vmatpush1.bf16.msra.mxu0 %v1227
        %1535 = vmatprep.subr.bf16.mxu0 0
        %1536 = vmatpush1.bf16.msra.mxu0 %v1228
        %1537 = vmatprep.subr.bf16.mxu0 0
        %1538 = vmatpush1.bf16.msra.mxu0 %v1229
        %1539 = vmatprep.subr.bf16.mxu0 0
        %1540 = vmatpush1.bf16.msra.mxu0 %v1230
        %1541 = vmatprep.subr.bf16.mxu0 0
        %1542 = vmatpush1.bf16.msra.mxu0 %v1231
        %1543 = vmatprep.subr.bf16.mxu0 0
        %1544 = vmatpush1.bf16.msra.mxu0 %v1232
        %1545 = vmatprep.subr.bf16.mxu0 0
        %1546 = vmatpush1.bf16.msra.mxu0 %v1233
        %1547 = vmatprep.subr.bf16.mxu0 0
        %1548 = vmatpush1.bf16.msra.mxu0 %v1234
        %1549 = vmatprep.subr.bf16.mxu0 0
        %1550 = vmatpush1.bf16.msra.mxu0 %v1235
        %1551 = vmatprep.subr.bf16.mxu0 0
        %1552 = vmatpush1.bf16.msra.mxu0 %v1236
        %1553 = vmatprep.subr.bf16.mxu0 0
        %1554 = vmatpush1.bf16.msra.mxu0 %v1237
        %1555 = vmatprep.subr.bf16.mxu0 0
        %1556 = vmatpush1.bf16.msra.mxu0 %v1238
        %1557 = vmatprep.subr.bf16.mxu0 0
        %1558 = vmatpush1.bf16.msra.mxu0 %v1239
        %1559 = vmatprep.subr.bf16.mxu0 0
        %1560 = vmatpush1.bf16.msra.mxu0 %v1240
        %1561 = vmatprep.subr.bf16.mxu0 0
        %1562 = vmatpush1.bf16.msra.mxu0 %v1241
        %1563 = vmatprep.mubr.bf16.mxu0 %v480
        %1564 = vmatmul.mubr.bf16.gmra.mrb[0].mxu0 %v423
        %v1565 = vpop.f32.mrb[0].mxu0
        %v1566 = vadd.f32 %v1389, %v1565
        %v1567 = vpop.f32.mrb[0].mxu0
        %v1568 = vpop.f32.mrb[0].mxu0
        %v1569 = vadd.f32 %v1392, %v1568
        %v1570 = vpop.f32.mrb[0].mxu0
        %1571 = vmatprep.mubr.bf16.mxu0 %v481
        %1572 = vmatmul.mubr.bf16.gmra.mrb[0].mxu0 %v424
        %v1573 = vpop.f32.mrb[0].mxu0
        %v1574 = vadd.f32 %v1397, %v1573
        %v1575 = vpop.f32.mrb[0].mxu0
        %v1576 = vpop.f32.mrb[0].mxu0
        %v1577 = vadd.f32 %v1400, %v1576
        %v1578 = vpop.f32.mrb[0].mxu0
        %1579 = vmatprep.mubr.bf16.mxu0 %v482
        %1580 = vmatmul.mubr.bf16.gmra.mrb[0].mxu0 %v425
        %v1581 = vpop.f32.mrb[0].mxu0
        %v1582 = vadd.f32 %v1405, %v1581
        %v1583 = vpop.f32.mrb[0].mxu0
        %v1584 = vpop.f32.mrb[0].mxu0
        %v1585 = vadd.f32 %v1408, %v1584
        %v1586 = vpop.f32.mrb[0].mxu0
        %1587 = vmatprep.mubr.bf16.mxu0 %v483
        %1588 = vmatmul.mubr.bf16.gmra.mrb[0].mxu0 %v426
        %v1589 = vpop.f32.mrb[0].mxu0
        %v1590 = vadd.f32 %v1413, %v1589
        %v1591 = vpop.f32.mrb[0].mxu0
        %v1592 = vpop.f32.mrb[0].mxu0
        %v1593 = vadd.f32 %v1416, %v1592
        %v1594 = vpop.f32.mrb[0].mxu0
        %1595 = vmatprep.mubr.bf16.mxu0 %v484
        %1596 = vmatmul.mubr.bf16.gmra.mrb[0].mxu0 %v427
        %v1597 = vpop.f32.mrb[0].mxu0
        %v1598 = vadd.f32 %v1421, %v1597
        %v1599 = vpop.f32.mrb[0].mxu0
        %v1600 = vpop.f32.mrb[0].mxu0
        %v1601 = vadd.f32 %v1424, %v1600
        %v1602 = vpop.f32.mrb[0].mxu0
        %1603 = vmatprep.mubr.bf16.mxu0 %v485
        %1604 = vmatmul.mubr.bf16.gmra.mrb[0].mxu0 %v428
        %v1605 = vpop.f32.mrb[0].mxu0
        %v1606 = vadd.f32 %v1429, %v1605
        %v1607 = vpop.f32.mrb[0].mxu0
        %v1608 = vpop.f32.mrb[0].mxu0
        %v1609 = vadd.f32 %v1432, %v1608
        %v1610 = vpop.f32.mrb[0].mxu0
        %1611 = vmatprep.mubr.bf16.mxu0 %v486
        %1612 = vmatmul.mubr.bf16.gmra.mrb[0].mxu0 %v429
        %v1613 = vpop.f32.mrb[0].mxu0
        %v1614 = vadd.f32 %v1437, %v1613
        %v1615 = vpop.f32.mrb[0].mxu0
        %v1616 = vpop.f32.mrb[0].mxu0
        %v1617 = vadd.f32 %v1440, %v1616
        %v1618 = vpop.f32.mrb[0].mxu0
        %1619 = vmatprep.mubr.bf16.mxu0 %v487
        %1620 = vmatmul.mubr.bf16.gmra.mrb[0].mxu0 %v430
        %v1621 = vpop.f32.mrb[0].mxu0
        %v1622 = vadd.f32 %v1445, %v1621
        %v1623 = vpop.f32.mrb[0].mxu0
        %v1624 = vpop.f32.mrb[0].mxu0
        %v1625 = vadd.f32 %v1448, %v1624
        %v1626 = vpop.f32.mrb[0].mxu0
        %1627 = vmatprep.mubr.bf16.mxu0 %v488
        %1628 = vmatmul.mubr.bf16.gmra.mrb[0].mxu0 %v431
        %v1629 = vpop.f32.mrb[0].mxu0
        %v1630 = vadd.f32 %v1453, %v1629
        %v1631 = vpop.f32.mrb[0].mxu0
        %v1632 = vpop.f32.mrb[0].mxu0
        %v1633 = vadd.f32 %v1456, %v1632
        %v1634 = vpop.f32.mrb[0].mxu0
        %1635 = vmatprep.mubr.bf16.mxu0 %v489
        %1636 = vmatmul.mubr.bf16.gmra.mrb[0].mxu0 %v432
        %v1637 = vpop.f32.mrb[0].mxu0
        %v1638 = vadd.f32 %v1461, %v1637
        %v1639 = vpop.f32.mrb[0].mxu0
        %v1640 = vpop.f32.mrb[0].mxu0
        %v1641 = vadd.f32 %v1464, %v1640
        %v1642 = vpop.f32.mrb[0].mxu0
        %1643 = vmatprep.mubr.bf16.mxu0 %v490
        %1644 = vmatmul.mubr.bf16.gmra.mrb[0].mxu0 %v433
        %v1645 = vpop.f32.mrb[0].mxu0
        %v1646 = vadd.f32 %v1469, %v1645
        %v1647 = vpop.f32.mrb[0].mxu0
        %v1648 = vpop.f32.mrb[0].mxu0
        %v1649 = vadd.f32 %v1472, %v1648
        %v1650 = vpop.f32.mrb[0].mxu0
        %1651 = vmatprep.mubr.bf16.mxu0 %v491
        %1652 = vmatmul.mubr.bf16.gmra.mrb[0].mxu0 %v434
        %v1653 = vpop.f32.mrb[0].mxu0
        %v1654 = vadd.f32 %v1477, %v1653
        %v1655 = vpop.f32.mrb[0].mxu0
        %v1656 = vpop.f32.mrb[0].mxu0
        %v1657 = vadd.f32 %v1480, %v1656
        %v1658 = vpop.f32.mrb[0].mxu0
        %1659 = vmatprep.mubr.bf16.mxu0 %v492
        %1660 = vmatmul.mubr.bf16.gmra.mrb[0].mxu0 %v435
        %v1661 = vpop.f32.mrb[0].mxu0
        %v1662 = vadd.f32 %v1485, %v1661
        %v1663 = vpop.f32.mrb[0].mxu0
        %v1664 = vpop.f32.mrb[0].mxu0
        %v1665 = vadd.f32 %v1488, %v1664
        %v1666 = vpop.f32.mrb[0].mxu0
        %1667 = vmatprep.mubr.bf16.mxu0 %v493
        %1668 = vmatmul.mubr.bf16.gmra.mrb[0].mxu0 %v436
        %v1669 = vpop.f32.mrb[0].mxu0
        %v1670 = vadd.f32 %v1493, %v1669
        %v1671 = vpop.f32.mrb[0].mxu0
        %v1672 = vpop.f32.mrb[0].mxu0
        %v1673 = vadd.f32 %v1496, %v1672
        %v1674 = vpop.f32.mrb[0].mxu0
        %1675 = vmatprep.mubr.bf16.mxu0 %v494
        %1676 = vmatmul.mubr.bf16.gmra.mrb[0].mxu0 %v437
        %v1677 = vpop.f32.mrb[0].mxu0
        %v1678 = vadd.f32 %v1501, %v1677
        %v1679 = vpop.f32.mrb[0].mxu0
        %v1680 = vpop.f32.mrb[0].mxu0
        %v1681 = vadd.f32 %v1504, %v1680
        %v1682 = vpop.f32.mrb[0].mxu0
        %1683 = vmatprep.mubr.bf16.mxu0 %v495
        %1684 = vmatmul.mubr.bf16.gmra.mrb[0].mxu0 %v438
        %v1685 = vpop.f32.mrb[0].mxu0
        %v1686 = vadd.f32 %v1509, %v1685
        %v1687 = vpop.f32.mrb[0].mxu0
        %v1688 = vpop.f32.mrb[0].mxu0
        %v1689 = vadd.f32 %v1512, %v1688
        %v1690 = vpop.f32.mrb[0].mxu0
        %1691 = vmatprep.mubr.bf16.mxu0 %v496
        %1692 = vmatmul.mubr.bf16.gmra.mrb[0].mxu0 %v439
        %v1693 = vpop.f32.mrb[0].mxu0
        %v1694 = vadd.f32 %v1517, %v1693
        %v1695 = vpop.f32.mrb[0].mxu0
        %v1696 = vpop.f32.mrb[0].mxu0
        %v1697 = vadd.f32 %v1520, %v1696
        %v1698 = vpop.f32.mrb[0].mxu0
        %1699 = vmatprep.mubr.bf16.mxu0 %v497
        %1700 = vmatmul.mubr.bf16.gmra.mrb[0].mxu0 %v440
        %v1701 = vpop.f32.mrb[0].mxu0
        %v1702 = vadd.f32 %v1525, %v1701
        %v1703 = vpop.f32.mrb[0].mxu0
        %v1704 = vpop.f32.mrb[0].mxu0
        %v1705 = vadd.f32 %v1528, %v1704
        %v1706 = vpop.f32.mrb[0].mxu0
        %1707 = vdwg.mxu0
        %1708 = vmatprep.subr.bf16.mxu0 0
        %1709 = vmatpush1.bf16.msra.mxu0 %v1242
        %1710 = vmatprep.subr.bf16.mxu0 0
        %1711 = vmatpush1.bf16.msra.mxu0 %v1243
        %1712 = vmatprep.subr.bf16.mxu0 0
        %1713 = vmatpush1.bf16.msra.mxu0 %v1244
        %1714 = vmatprep.subr.bf16.mxu0 0
        %1715 = vmatpush1.bf16.msra.mxu0 %v1245
        %1716 = vmatprep.subr.bf16.mxu0 0
        %1717 = vmatpush1.bf16.msra.mxu0 %v1246
        %1718 = vmatprep.subr.bf16.mxu0 0
        %1719 = vmatpush1.bf16.msra.mxu0 %v1247
        %1720 = vmatprep.subr.bf16.mxu0 0
        %1721 = vmatpush1.bf16.msra.mxu0 %v1248
        %1722 = vmatprep.subr.bf16.mxu0 0
        %1723 = vmatpush1.bf16.msra.mxu0 %v1249
        %1724 = vmatprep.subr.bf16.mxu0 0
        %1725 = vmatpush1.bf16.msra.mxu0 %v1250
        %1726 = vmatprep.subr.bf16.mxu0 0
        %1727 = vmatpush1.bf16.msra.mxu0 %v1251
        %1728 = vmatprep.subr.bf16.mxu0 0
        %1729 = vmatpush1.bf16.msra.mxu0 %v1252
        %1730 = vmatprep.subr.bf16.mxu0 0
        %1731 = vmatpush1.bf16.msra.mxu0 %v1253
        %1732 = vmatprep.subr.bf16.mxu0 0
        %1733 = vmatpush1.bf16.msra.mxu0 %v1254
        %1734 = vmatprep.subr.bf16.mxu0 0
        %1735 = vmatpush1.bf16.msra.mxu0 %v1255
        %1736 = vmatprep.subr.bf16.mxu0 0
        %1737 = vmatpush1.bf16.msra.mxu0 %v1256
        %1738 = vmatprep.subr.bf16.mxu0 0
        %1739 = vmatpush1.bf16.msra.mxu0 %v1257
        %1740 = vmatprep.mubr.bf16.mxu0 %v588
        %1741 = vmatmul.mubr.bf16.gmra.mrb[0].mxu0 %v534
        %v1742 = vpop.f32.mrb[0].mxu0
        %v1743 = vadd.f32 %v1566, %v1742
        %v1744 = vpop.f32.mrb[0].mxu0
        %v1745 = vpop.f32.mrb[0].mxu0
        %v1746 = vadd.f32 %v1569, %v1745
        %v1747 = vpop.f32.mrb[0].mxu0
        %1748 = vmatprep.mubr.bf16.mxu0 %v589
        %1749 = vmatmul.mubr.bf16.gmra.mrb[0].mxu0 %v535
        %v1750 = vpop.f32.mrb[0].mxu0
        %v1751 = vadd.f32 %v1574, %v1750
        %v1752 = vpop.f32.mrb[0].mxu0
        %v1753 = vpop.f32.mrb[0].mxu0
        %v1754 = vadd.f32 %v1577, %v1753
        %v1755 = vpop.f32.mrb[0].mxu0
        %1756 = vmatprep.mubr.bf16.mxu0 %v590
        %1757 = vmatmul.mubr.bf16.gmra.mrb[0].mxu0 %v536
        %v1758 = vpop.f32.mrb[0].mxu0
        %v1759 = vadd.f32 %v1582, %v1758
        %v1760 = vpop.f32.mrb[0].mxu0
        %v1761 = vpop.f32.mrb[0].mxu0
        %v1762 = vadd.f32 %v1585, %v1761
        %v1763 = vpop.f32.mrb[0].mxu0
        %1764 = vmatprep.mubr.bf16.mxu0 %v591
        %1765 = vmatmul.mubr.bf16.gmra.mrb[0].mxu0 %v537
        %v1766 = vpop.f32.mrb[0].mxu0
        %v1767 = vadd.f32 %v1590, %v1766
        %v1768 = vpop.f32.mrb[0].mxu0
        %v1769 = vpop.f32.mrb[0].mxu0
        %v1770 = vadd.f32 %v1593, %v1769
        %v1771 = vpop.f32.mrb[0].mxu0
        %1772 = vmatprep.mubr.bf16.mxu0 %v592
        %1773 = vmatmul.mubr.bf16.gmra.mrb[0].mxu0 %v538
        %v1774 = vpop.f32.mrb[0].mxu0
        %v1775 = vadd.f32 %v1598, %v1774
        %v1776 = vpop.f32.mrb[0].mxu0
        %v1777 = vpop.f32.mrb[0].mxu0
        %v1778 = vadd.f32 %v1601, %v1777
        %v1779 = vpop.f32.mrb[0].mxu0
        %1780 = vmatprep.mubr.bf16.mxu0 %v593
        %1781 = vmatmul.mubr.bf16.gmra.mrb[0].mxu0 %v539
        %v1782 = vpop.f32.mrb[0].mxu0
        %v1783 = vadd.f32 %v1606, %v1782
        %v1784 = vpop.f32.mrb[0].mxu0
        %v1785 = vpop.f32.mrb[0].mxu0
        %v1786 = vadd.f32 %v1609, %v1785
        %v1787 = vpop.f32.mrb[0].mxu0
        %1788 = vmatprep.mubr.bf16.mxu0 %v594
        %1789 = vmatmul.mubr.bf16.gmra.mrb[0].mxu0 %v540
        %v1790 = vpop.f32.mrb[0].mxu0
        %v1791 = vadd.f32 %v1614, %v1790
        %v1792 = vpop.f32.mrb[0].mxu0
        %v1793 = vpop.f32.mrb[0].mxu0
        %v1794 = vadd.f32 %v1617, %v1793
        %v1795 = vpop.f32.mrb[0].mxu0
        %1796 = vmatprep.mubr.bf16.mxu0 %v595
        %1797 = vmatmul.mubr.bf16.gmra.mrb[0].mxu0 %v541
        %v1798 = vpop.f32.mrb[0].mxu0
        %v1799 = vadd.f32 %v1622, %v1798
        %v1800 = vpop.f32.mrb[0].mxu0
        %v1801 = vpop.f32.mrb[0].mxu0
        %v1802 = vadd.f32 %v1625, %v1801
        %v1803 = vpop.f32.mrb[0].mxu0
        %1804 = vmatprep.mubr.bf16.mxu0 %v596
        %1805 = vmatmul.mubr.bf16.gmra.mrb[0].mxu0 %v542
        %v1806 = vpop.f32.mrb[0].mxu0
        %v1807 = vadd.f32 %v1630, %v1806
        %v1808 = vpop.f32.mrb[0].mxu0
        %v1809 = vpop.f32.mrb[0].mxu0
        %v1810 = vadd.f32 %v1633, %v1809
        %v1811 = vpop.f32.mrb[0].mxu0
        %1812 = vmatprep.mubr.bf16.mxu0 %v597
        %1813 = vmatmul.mubr.bf16.gmra.mrb[0].mxu0 %v543
        %v1814 = vpop.f32.mrb[0].mxu0
        %v1815 = vadd.f32 %v1638, %v1814
        %v1816 = vpop.f32.mrb[0].mxu0
        %v1817 = vpop.f32.mrb[0].mxu0
        %v1818 = vadd.f32 %v1641, %v1817
        %v1819 = vpop.f32.mrb[0].mxu0
        %1820 = vmatprep.mubr.bf16.mxu0 %v598
        %1821 = vmatmul.mubr.bf16.gmra.mrb[0].mxu0 %v544
        %v1822 = vpop.f32.mrb[0].mxu0
        %v1823 = vadd.f32 %v1646, %v1822
        %v1824 = vpop.f32.mrb[0].mxu0
        %v1825 = vpop.f32.mrb[0].mxu0
        %v1826 = vadd.f32 %v1649, %v1825
        %v1827 = vpop.f32.mrb[0].mxu0
        %1828 = vmatprep.mubr.bf16.mxu0 %v599
        %1829 = vmatmul.mubr.bf16.gmra.mrb[0].mxu0 %v545
        %v1830 = vpop.f32.mrb[0].mxu0
        %v1831 = vadd.f32 %v1654, %v1830
        %v1832 = vpop.f32.mrb[0].mxu0
        %v1833 = vpop.f32.mrb[0].mxu0
        %v1834 = vadd.f32 %v1657, %v1833
        %v1835 = vpop.f32.mrb[0].mxu0
        %1836 = vmatprep.mubr.bf16.mxu0 %v600
        %1837 = vmatmul.mubr.bf16.gmra.mrb[0].mxu0 %v546
        %v1838 = vpop.f32.mrb[0].mxu0
        %v1839 = vadd.f32 %v1662, %v1838
        %v1840 = vpop.f32.mrb[0].mxu0
        %v1841 = vpop.f32.mrb[0].mxu0
        %v1842 = vadd.f32 %v1665, %v1841
        %v1843 = vpop.f32.mrb[0].mxu0
        %1844 = vmatprep.mubr.bf16.mxu0 %v601
        %1845 = vmatmul.mubr.bf16.gmra.mrb[0].mxu0 %v547
        %v1846 = vpop.f32.mrb[0].mxu0
        %v1847 = vadd.f32 %v1670, %v1846
        %v1848 = vpop.f32.mrb[0].mxu0
        %v1849 = vpop.f32.mrb[0].mxu0
        %v1850 = vadd.f32 %v1673, %v1849
        %v1851 = vpop.f32.mrb[0].mxu0
        %1852 = vmatprep.mubr.bf16.mxu0 %v602
        %1853 = vmatmul.mubr.bf16.gmra.mrb[0].mxu0 %v548
        %v1854 = vpop.f32.mrb[0].mxu0
        %v1855 = vadd.f32 %v1678, %v1854
        %v1856 = vpop.f32.mrb[0].mxu0
        %v1857 = vpop.f32.mrb[0].mxu0
        %v1858 = vadd.f32 %v1681, %v1857
        %v1859 = vpop.f32.mrb[0].mxu0
        %1860 = vmatprep.mubr.bf16.mxu0 %v603
        %1861 = vmatmul.mubr.bf16.gmra.mrb[0].mxu0 %v549
        %v1862 = vpop.f32.mrb[0].mxu0
        %v1863 = vadd.f32 %v1686, %v1862
        %v1864 = vpop.f32.mrb[0].mxu0
        %v1865 = vpop.f32.mrb[0].mxu0
        %v1866 = vadd.f32 %v1689, %v1865
        %v1867 = vpop.f32.mrb[0].mxu0
        %1868 = vmatprep.mubr.bf16.mxu0 %v604
        %1869 = vmatmul.mubr.bf16.gmra.mrb[0].mxu0 %v550
        %v1870 = vpop.f32.mrb[0].mxu0
        %v1871 = vadd.f32 %v1694, %v1870
        %v1872 = vpop.f32.mrb[0].mxu0
        %v1873 = vpop.f32.mrb[0].mxu0
        %v1874 = vadd.f32 %v1697, %v1873
        %v1875 = vpop.f32.mrb[0].mxu0
        %1876 = vmatprep.mubr.bf16.mxu0 %v605
        %1877 = vmatmul.mubr.bf16.gmra.mrb[0].mxu0 %v551
        %v1878 = vpop.f32.mrb[0].mxu0
        %v1879 = vadd.f32 %v1702, %v1878
        %v1880 = vpop.f32.mrb[0].mxu0
        %v1881 = vpop.f32.mrb[0].mxu0
        %v1882 = vadd.f32 %v1705, %v1881
        %v1883 = vpop.f32.mrb[0].mxu0
        %1884 = vdwg.mxu0
        %1885 = vmatprep.subr.bf16.mxu0 0
        %1886 = vmatpush1.bf16.msra.mxu0 %v1258
        %1887 = vmatprep.subr.bf16.mxu0 0
        %1888 = vmatpush1.bf16.msra.mxu0 %v1259
        %1889 = vmatprep.subr.bf16.mxu0 0
        %1890 = vmatpush1.bf16.msra.mxu0 %v1260
        %1891 = vmatprep.subr.bf16.mxu0 0
        %1892 = vmatpush1.bf16.msra.mxu0 %v1261
        %1893 = vmatprep.subr.bf16.mxu0 0
        %1894 = vmatpush1.bf16.msra.mxu0 %v1262
        %1895 = vmatprep.subr.bf16.mxu0 0
        %1896 = vmatpush1.bf16.msra.mxu0 %v1263
        %1897 = vmatprep.subr.bf16.mxu0 0
        %1898 = vmatpush1.bf16.msra.mxu0 %v1264
        %1899 = vmatprep.subr.bf16.mxu0 0
        %1900 = vmatpush1.bf16.msra.mxu0 %v1265
        %1901 = vmatprep.subr.bf16.mxu0 0
        %1902 = vmatpush1.bf16.msra.mxu0 %v1266
        %1903 = vmatprep.subr.bf16.mxu0 0
        %1904 = vmatpush1.bf16.msra.mxu0 %v1267
        %1905 = vmatprep.subr.bf16.mxu0 0
        %1906 = vmatpush1.bf16.msra.mxu0 %v1268
        %1907 = vmatprep.subr.bf16.mxu0 0
        %1908 = vmatpush1.bf16.msra.mxu0 %v1269
        %1909 = vmatprep.subr.bf16.mxu0 0
        %1910 = vmatpush1.bf16.msra.mxu0 %v1270
        %1911 = vmatprep.subr.bf16.mxu0 0
        %1912 = vmatpush1.bf16.msra.mxu0 %v1271
        %1913 = vmatprep.subr.bf16.mxu0 0
        %1914 = vmatpush1.bf16.msra.mxu0 %v1272
        %1915 = vmatprep.subr.bf16.mxu0 0
        %1916 = vmatpush1.bf16.msra.mxu0 %v1273
        %1917 = vmatprep.mubr.bf16.mxu0 %v699
        %1918 = vmatmul.mubr.bf16.gmra.mrb[0].mxu0 %v645
        %v1919 = vpop.f32.mrb[0].mxu0
        %v1920 = vadd.f32 %v1743, %v1919
        %v1921 = vpop.f32.mrb[0].mxu0
        %v1922 = vpop.f32.mrb[0].mxu0
        %v1923 = vadd.f32 %v1746, %v1922
        %v1924 = vpop.f32.mrb[0].mxu0
        %1925 = vmatprep.mubr.bf16.mxu0 %v700
        %1926 = vmatmul.mubr.bf16.gmra.mrb[0].mxu0 %v646
        %v1927 = vpop.f32.mrb[0].mxu0
        %v1928 = vadd.f32 %v1751, %v1927
        %v1929 = vpop.f32.mrb[0].mxu0
        %v1930 = vpop.f32.mrb[0].mxu0
        %v1931 = vadd.f32 %v1754, %v1930
        %v1932 = vpop.f32.mrb[0].mxu0
        %1933 = vmatprep.mubr.bf16.mxu0 %v701
        %1934 = vmatmul.mubr.bf16.gmra.mrb[0].mxu0 %v647
        %v1935 = vpop.f32.mrb[0].mxu0
        %v1936 = vadd.f32 %v1759, %v1935
        %v1937 = vpop.f32.mrb[0].mxu0
        %v1938 = vpop.f32.mrb[0].mxu0
        %v1939 = vadd.f32 %v1762, %v1938
        %v1940 = vpop.f32.mrb[0].mxu0
        %1941 = vmatprep.mubr.bf16.mxu0 %v702
        %1942 = vmatmul.mubr.bf16.gmra.mrb[0].mxu0 %v648
        %v1943 = vpop.f32.mrb[0].mxu0
        %v1944 = vadd.f32 %v1767, %v1943
        %v1945 = vpop.f32.mrb[0].mxu0
        %v1946 = vpop.f32.mrb[0].mxu0
        %v1947 = vadd.f32 %v1770, %v1946
        %v1948 = vpop.f32.mrb[0].mxu0
        %1949 = vmatprep.mubr.bf16.mxu0 %v703
        %1950 = vmatmul.mubr.bf16.gmra.mrb[0].mxu0 %v649
        %v1951 = vpop.f32.mrb[0].mxu0
        %v1952 = vadd.f32 %v1775, %v1951
        %v1953 = vpop.f32.mrb[0].mxu0
        %v1954 = vpop.f32.mrb[0].mxu0
        %v1955 = vadd.f32 %v1778, %v1954
        %v1956 = vpop.f32.mrb[0].mxu0
        %1957 = vmatprep.mubr.bf16.mxu0 %v704
        %1958 = vmatmul.mubr.bf16.gmra.mrb[0].mxu0 %v650
        %v1959 = vpop.f32.mrb[0].mxu0
        %v1960 = vadd.f32 %v1783, %v1959
        %v1961 = vpop.f32.mrb[0].mxu0
        %v1962 = vpop.f32.mrb[0].mxu0
        %v1963 = vadd.f32 %v1786, %v1962
        %v1964 = vpop.f32.mrb[0].mxu0
        %1965 = vmatprep.mubr.bf16.mxu0 %v705
        %1966 = vmatmul.mubr.bf16.gmra.mrb[0].mxu0 %v651
        %v1967 = vpop.f32.mrb[0].mxu0
        %v1968 = vadd.f32 %v1791, %v1967
        %v1969 = vpop.f32.mrb[0].mxu0
        %v1970 = vpop.f32.mrb[0].mxu0
        %v1971 = vadd.f32 %v1794, %v1970
        %v1972 = vpop.f32.mrb[0].mxu0
        %1973 = vmatprep.mubr.bf16.mxu0 %v706
        %1974 = vmatmul.mubr.bf16.gmra.mrb[0].mxu0 %v652
        %v1975 = vpop.f32.mrb[0].mxu0
        %v1976 = vadd.f32 %v1799, %v1975
        %v1977 = vpop.f32.mrb[0].mxu0
        %v1978 = vpop.f32.mrb[0].mxu0
        %v1979 = vadd.f32 %v1802, %v1978
        %v1980 = vpop.f32.mrb[0].mxu0
        %1981 = vmatprep.mubr.bf16.mxu0 %v707
        %1982 = vmatmul.mubr.bf16.gmra.mrb[0].mxu0 %v653
        %v1983 = vpop.f32.mrb[0].mxu0
        %v1984 = vadd.f32 %v1807, %v1983
        %v1985 = vpop.f32.mrb[0].mxu0
        %v1986 = vpop.f32.mrb[0].mxu0
        %v1987 = vadd.f32 %v1810, %v1986
        %v1988 = vpop.f32.mrb[0].mxu0
        %1989 = vmatprep.mubr.bf16.mxu0 %v708
        %1990 = vmatmul.mubr.bf16.gmra.mrb[0].mxu0 %v654
        %v1991 = vpop.f32.mrb[0].mxu0
        %v1992 = vadd.f32 %v1815, %v1991
        %v1993 = vpop.f32.mrb[0].mxu0
        %v1994 = vpop.f32.mrb[0].mxu0
        %v1995 = vadd.f32 %v1818, %v1994
        %v1996 = vpop.f32.mrb[0].mxu0
        %1997 = vmatprep.mubr.bf16.mxu0 %v709
        %1998 = vmatmul.mubr.bf16.gmra.mrb[0].mxu0 %v655
        %v1999 = vpop.f32.mrb[0].mxu0
        %v2000 = vadd.f32 %v1823, %v1999
        %v2001 = vpop.f32.mrb[0].mxu0
        %v2002 = vpop.f32.mrb[0].mxu0
        %v2003 = vadd.f32 %v1826, %v2002
        %v2004 = vpop.f32.mrb[0].mxu0
        %2005 = vmatprep.mubr.bf16.mxu0 %v710
        %2006 = vmatmul.mubr.bf16.gmra.mrb[0].mxu0 %v656
        %v2007 = vpop.f32.mrb[0].mxu0
        %v2008 = vadd.f32 %v1831, %v2007
        %v2009 = vpop.f32.mrb[0].mxu0
        %v2010 = vpop.f32.mrb[0].mxu0
        %v2011 = vadd.f32 %v1834, %v2010
        %v2012 = vpop.f32.mrb[0].mxu0
        %2013 = vmatprep.mubr.bf16.mxu0 %v711
        %2014 = vmatmul.mubr.bf16.gmra.mrb[0].mxu0 %v657
        %v2015 = vpop.f32.mrb[0].mxu0
        %v2016 = vadd.f32 %v1839, %v2015
        %v2017 = vpop.f32.mrb[0].mxu0
        %v2018 = vpop.f32.mrb[0].mxu0
        %v2019 = vadd.f32 %v1842, %v2018
        %v2020 = vpop.f32.mrb[0].mxu0
        %2021 = vmatprep.mubr.bf16.mxu0 %v712
        %2022 = vmatmul.mubr.bf16.gmra.mrb[0].mxu0 %v658
        %v2023 = vpop.f32.mrb[0].mxu0
        %v2024 = vadd.f32 %v1847, %v2023
        %v2025 = vpop.f32.mrb[0].mxu0
        %v2026 = vpop.f32.mrb[0].mxu0
        %v2027 = vadd.f32 %v1850, %v2026
        %v2028 = vpop.f32.mrb[0].mxu0
        %2029 = vmatprep.mubr.bf16.mxu0 %v713
        %2030 = vmatmul.mubr.bf16.gmra.mrb[0].mxu0 %v659
        %v2031 = vpop.f32.mrb[0].mxu0
        %v2032 = vadd.f32 %v1855, %v2031
        %v2033 = vpop.f32.mrb[0].mxu0
        %v2034 = vpop.f32.mrb[0].mxu0
        %v2035 = vadd.f32 %v1858, %v2034
        %v2036 = vpop.f32.mrb[0].mxu0
        %2037 = vmatprep.mubr.bf16.mxu0 %v714
        %2038 = vmatmul.mubr.bf16.gmra.mrb[0].mxu0 %v660
        %v2039 = vpop.f32.mrb[0].mxu0
        %v2040 = vadd.f32 %v1863, %v2039
        %v2041 = vpop.f32.mrb[0].mxu0
        %v2042 = vpop.f32.mrb[0].mxu0
        %v2043 = vadd.f32 %v1866, %v2042
        %v2044 = vpop.f32.mrb[0].mxu0
        %2045 = vmatprep.mubr.bf16.mxu0 %v715
        %2046 = vmatmul.mubr.bf16.gmra.mrb[0].mxu0 %v661
        %v2047 = vpop.f32.mrb[0].mxu0
        %v2048 = vadd.f32 %v1871, %v2047
        %v2049 = vpop.f32.mrb[0].mxu0
        %v2050 = vpop.f32.mrb[0].mxu0
        %v2051 = vadd.f32 %v1874, %v2050
        %v2052 = vpop.f32.mrb[0].mxu0
        %2053 = vmatprep.mubr.bf16.mxu0 %v716
        %2054 = vmatmul.mubr.bf16.gmra.mrb[0].mxu0 %v662
        %v2055 = vpop.f32.mrb[0].mxu0
        %v2056 = vadd.f32 %v1879, %v2055
        %v2057 = vpop.f32.mrb[0].mxu0
        %v2058 = vpop.f32.mrb[0].mxu0
        %v2059 = vadd.f32 %v1882, %v2058
        %v2060 = vpop.f32.mrb[0].mxu0
        %2061 = vdwg.mxu0
        %2062 = vmatprep.subr.bf16.mxu0 0
        %2063 = vmatpush1.bf16.msra.mxu0 %v1274
        %2064 = vmatprep.subr.bf16.mxu0 0
        %2065 = vmatpush1.bf16.msra.mxu0 %v1275
        %2066 = vmatprep.subr.bf16.mxu0 0
        %2067 = vmatpush1.bf16.msra.mxu0 %v1276
        %2068 = vmatprep.subr.bf16.mxu0 0
        %2069 = vmatpush1.bf16.msra.mxu0 %v1277
        %2070 = vmatprep.subr.bf16.mxu0 0
        %2071 = vmatpush1.bf16.msra.mxu0 %v1278
        %2072 = vmatprep.subr.bf16.mxu0 0
        %2073 = vmatpush1.bf16.msra.mxu0 %v1279
        %2074 = vmatprep.subr.bf16.mxu0 0
        %2075 = vmatpush1.bf16.msra.mxu0 %v1280
        %2076 = vmatprep.subr.bf16.mxu0 0
        %2077 = vmatpush1.bf16.msra.mxu0 %v1281
        %2078 = vmatprep.subr.bf16.mxu0 0
        %2079 = vmatpush1.bf16.msra.mxu0 0
        %2080 = vmatprep.subr.bf16.mxu0 0
        %2081 = vmatpush1.bf16.msra.mxu0 0
        %2082 = vmatprep.subr.bf16.mxu0 0
        %2083 = vmatpush1.bf16.msra.mxu0 0
        %2084 = vmatprep.subr.bf16.mxu0 0
        %2085 = vmatpush1.bf16.msra.mxu0 0
        %2086 = vmatprep.subr.bf16.mxu0 0
        %2087 = vmatpush1.bf16.msra.mxu0 0
        %2088 = vmatprep.subr.bf16.mxu0 0
        %2089 = vmatpush1.bf16.msra.mxu0 0
        %2090 = vmatprep.subr.bf16.mxu0 0
        %2091 = vmatpush1.bf16.msra.mxu0 0
        %2092 = vmatprep.subr.bf16.mxu0 0
        %2093 = vmatpush1.bf16.msra.mxu0 0
        %2094 = vmatprep.mubr.bf16.mxu0 0
        %2095 = vmatmul.mubr.bf16.gmra.mrb[0].mxu0 %v753
        %v2096 = vpop.f32.mrb[0].mxu0
        %v2097 = vadd.f32 %v1920, %v2096
        %v2098 = vpop.f32.mrb[0].mxu0
        %v2099 = vpop.f32.mrb[0].mxu0
        %v2100 = vadd.f32 %v1923, %v2099
        %v2101 = vpop.f32.mrb[0].mxu0
        %2102 = vmatprep.mubr.bf16.mxu0 0
        %2103 = vmatmul.mubr.bf16.gmra.mrb[0].mxu0 %v754
        %v2104 = vpop.f32.mrb[0].mxu0
        %v2105 = vadd.f32 %v1928, %v2104
        %v2106 = vpop.f32.mrb[0].mxu0
        %v2107 = vpop.f32.mrb[0].mxu0
        %v2108 = vadd.f32 %v1931, %v2107
        %v2109 = vpop.f32.mrb[0].mxu0
        %2110 = vmatprep.mubr.bf16.mxu0 0
        %2111 = vmatmul.mubr.bf16.gmra.mrb[0].mxu0 %v755
        %v2112 = vpop.f32.mrb[0].mxu0
        %v2113 = vadd.f32 %v1936, %v2112
        %v2114 = vpop.f32.mrb[0].mxu0
        %v2115 = vpop.f32.mrb[0].mxu0
        %v2116 = vadd.f32 %v1939, %v2115
        %v2117 = vpop.f32.mrb[0].mxu0
        %2118 = vmatprep.mubr.bf16.mxu0 0
        %2119 = vmatmul.mubr.bf16.gmra.mrb[0].mxu0 %v756
        %v2120 = vpop.f32.mrb[0].mxu0
        %v2121 = vadd.f32 %v1944, %v2120
        %v2122 = vpop.f32.mrb[0].mxu0
        %v2123 = vpop.f32.mrb[0].mxu0
        %v2124 = vadd.f32 %v1947, %v2123
        %v2125 = vpop.f32.mrb[0].mxu0
        %2126 = vmatprep.mubr.bf16.mxu0 0
        %2127 = vmatmul.mubr.bf16.gmra.mrb[0].mxu0 %v757
        %v2128 = vpop.f32.mrb[0].mxu0
        %v2129 = vadd.f32 %v1952, %v2128
        %v2130 = vpop.f32.mrb[0].mxu0
        %v2131 = vpop.f32.mrb[0].mxu0
        %v2132 = vadd.f32 %v1955, %v2131
        %v2133 = vpop.f32.mrb[0].mxu0
        %2134 = vmatprep.mubr.bf16.mxu0 0
        %2135 = vmatmul.mubr.bf16.gmra.mrb[0].mxu0 %v758
        %v2136 = vpop.f32.mrb[0].mxu0
        %v2137 = vadd.f32 %v1960, %v2136
        %v2138 = vpop.f32.mrb[0].mxu0
        %v2139 = vpop.f32.mrb[0].mxu0
        %v2140 = vadd.f32 %v1963, %v2139
        %v2141 = vpop.f32.mrb[0].mxu0
        %2142 = vmatprep.mubr.bf16.mxu0 0
        %2143 = vmatmul.mubr.bf16.gmra.mrb[0].mxu0 %v759
        %v2144 = vpop.f32.mrb[0].mxu0
        %v2145 = vadd.f32 %v1968, %v2144
        %v2146 = vpop.f32.mrb[0].mxu0
        %v2147 = vpop.f32.mrb[0].mxu0
        %v2148 = vadd.f32 %v1971, %v2147
        %v2149 = vpop.f32.mrb[0].mxu0
        %2150 = vmatprep.mubr.bf16.mxu0 0
        %2151 = vmatmul.mubr.bf16.gmra.mrb[0].mxu0 %v760
        %v2152 = vpop.f32.mrb[0].mxu0
        %v2153 = vadd.f32 %v1976, %v2152
        %v2154 = vpop.f32.mrb[0].mxu0
        %v2155 = vpop.f32.mrb[0].mxu0
        %v2156 = vadd.f32 %v1979, %v2155
        %v2157 = vpop.f32.mrb[0].mxu0
        %2158 = vmatprep.mubr.bf16.mxu0 0
        %2159 = vmatmul.mubr.bf16.gmra.mrb[0].mxu0 %v761
        %v2160 = vpop.f32.mrb[0].mxu0
        %v2161 = vadd.f32 %v1984, %v2160
        %v2162 = vpop.f32.mrb[0].mxu0
        %v2163 = vpop.f32.mrb[0].mxu0
        %v2164 = vadd.f32 %v1987, %v2163
        %v2165 = vpop.f32.mrb[0].mxu0
        %2166 = vmatprep.mubr.bf16.mxu0 0
        %2167 = vmatmul.mubr.bf16.gmra.mrb[0].mxu0 %v762
        %v2168 = vpop.f32.mrb[0].mxu0
        %v2169 = vadd.f32 %v1992, %v2168
        %v2170 = vpop.f32.mrb[0].mxu0
        %v2171 = vpop.f32.mrb[0].mxu0
        %v2172 = vadd.f32 %v1995, %v2171
        %v2173 = vpop.f32.mrb[0].mxu0
        %2174 = vmatprep.mubr.bf16.mxu0 0
        %2175 = vmatmul.mubr.bf16.gmra.mrb[0].mxu0 %v763
        %v2176 = vpop.f32.mrb[0].mxu0
        %v2177 = vadd.f32 %v2000, %v2176
        %v2178 = vpop.f32.mrb[0].mxu0
        %v2179 = vpop.f32.mrb[0].mxu0
        %v2180 = vadd.f32 %v2003, %v2179
        %v2181 = vpop.f32.mrb[0].mxu0
        %2182 = vmatprep.mubr.bf16.mxu0 0
        %2183 = vmatmul.mubr.bf16.gmra.mrb[0].mxu0 %v764
        %v2184 = vpop.f32.mrb[0].mxu0
        %v2185 = vadd.f32 %v2008, %v2184
        %v2186 = vpop.f32.mrb[0].mxu0
        %v2187 = vpop.f32.mrb[0].mxu0
        %v2188 = vadd.f32 %v2011, %v2187
        %v2189 = vpop.f32.mrb[0].mxu0
        %2190 = vmatprep.mubr.bf16.mxu0 0
        %2191 = vmatmul.mubr.bf16.gmra.mrb[0].mxu0 %v765
        %v2192 = vpop.f32.mrb[0].mxu0
        %v2193 = vadd.f32 %v2016, %v2192
        %v2194 = vpop.f32.mrb[0].mxu0
        %v2195 = vpop.f32.mrb[0].mxu0
        %v2196 = vadd.f32 %v2019, %v2195
        %v2197 = vpop.f32.mrb[0].mxu0
        %2198 = vmatprep.mubr.bf16.mxu0 0
        %2199 = vmatmul.mubr.bf16.gmra.mrb[0].mxu0 %v766
        %v2200 = vpop.f32.mrb[0].mxu0
        %v2201 = vadd.f32 %v2024, %v2200
        %v2202 = vpop.f32.mrb[0].mxu0
        %v2203 = vpop.f32.mrb[0].mxu0
        %v2204 = vadd.f32 %v2027, %v2203
        %v2205 = vpop.f32.mrb[0].mxu0
        %2206 = vmatprep.mubr.bf16.mxu0 0
        %2207 = vmatmul.mubr.bf16.gmra.mrb[0].mxu0 %v767
        %v2208 = vpop.f32.mrb[0].mxu0
        %v2209 = vadd.f32 %v2032, %v2208
        %v2210 = vpop.f32.mrb[0].mxu0
        %v2211 = vpop.f32.mrb[0].mxu0
        %v2212 = vadd.f32 %v2035, %v2211
        %v2213 = vpop.f32.mrb[0].mxu0
        %2214 = vmatprep.mubr.bf16.mxu0 0
        %2215 = vmatmul.mubr.bf16.gmra.mrb[0].mxu0 %v768
        %v2216 = vpop.f32.mrb[0].mxu0
        %v2217 = vadd.f32 %v2040, %v2216
        %v2218 = vpop.f32.mrb[0].mxu0
        %v2219 = vpop.f32.mrb[0].mxu0
        %v2220 = vadd.f32 %v2043, %v2219
        %v2221 = vpop.f32.mrb[0].mxu0
        %2222 = vmatprep.mubr.bf16.mxu0 0
        %2223 = vmatmul.mubr.bf16.gmra.mrb[0].mxu0 %v769
        %v2224 = vpop.f32.mrb[0].mxu0
        %v2225 = vadd.f32 %v2048, %v2224
        %v2226 = vpop.f32.mrb[0].mxu0
        %v2227 = vpop.f32.mrb[0].mxu0
        %v2228 = vadd.f32 %v2051, %v2227
        %v2229 = vpop.f32.mrb[0].mxu0
        %2230 = vmatprep.mubr.bf16.mxu0 0
        %2231 = vmatmul.mubr.bf16.gmra.mrb[0].mxu0 %v770
        %v2232 = vpop.f32.mrb[0].mxu0
        %v2233 = vadd.f32 %v2056, %v2232
        %v2234 = vpop.f32.mrb[0].mxu0
        %v2235 = vpop.f32.mrb[0].mxu0
        %v2236 = vadd.f32 %v2059, %v2235
        %v2237 = vpop.f32.mrb[0].mxu0
        %2238 = vdwg.mxu0
        %v2239 = vmax.f32 %v2097, 0.0
        %v2240 = vmax.f32 %v2100, 0.0
        %v2241 = vmax.f32 %v2105, 0.0
        %v2242 = vmax.f32 %v2108, 0.0
        %v2243 = vmax.f32 %v2113, 0.0
        %v2244 = vmax.f32 %v2116, 0.0
        %v2245 = vmax.f32 %v2121, 0.0
        %v2246 = vmax.f32 %v2124, 0.0
        %v2247 = vmax.f32 %v2129, 0.0
        %v2248 = vmax.f32 %v2132, 0.0
        %v2249 = vmax.f32 %v2137, 0.0
        %v2250 = vmax.f32 %v2140, 0.0
        %v2251 = vmax.f32 %v2145, 0.0
        %v2252 = vmax.f32 %v2148, 0.0
        %v2253 = vmax.f32 %v2153, 0.0
        %v2254 = vmax.f32 %v2156, 0.0
        %v2255 = vmax.f32 %v2161, 0.0
        %v2256 = vmax.f32 %v2164, 0.0
        %v2257 = vmax.f32 %v2169, 0.0
        %v2258 = vmax.f32 %v2172, 0.0
        %v2259 = vmax.f32 %v2177, 0.0
        %v2260 = vmax.f32 %v2180, 0.0
        %v2261 = vmax.f32 %v2185, 0.0
        %v2262 = vmax.f32 %v2188, 0.0
        %v2263 = vmax.f32 %v2193, 0.0
        %v2264 = vmax.f32 %v2196, 0.0
        %v2265 = vmax.f32 %v2201, 0.0
        %v2266 = vmax.f32 %v2204, 0.0
        %v2267 = vmax.f32 %v2209, 0.0
        %v2268 = vmax.f32 %v2212, 0.0
        %v2269 = vmax.f32 %v2217, 0.0
        %v2270 = vmax.f32 %v2220, 0.0
        %v2271 = vmax.f32 %v2225, 0.0
        %v2272 = vmax.f32 %v2228, 0.0
        %v2273 = vmax.f32 %v2233, 0.0
        %v2274 = vmax.f32 %v2236, 0.0
        %2275 = vst [vmem:[#allocation2 + $0x1] sm:$0xff] %v2239
        %2276 = vst [vmem:[#allocation2 + $0x9] sm:$0xff] %v2240
        %2277 = vst [vmem:[#allocation2 + $0x19] sm:$0xff] %v2241
        %2278 = vst [vmem:[#allocation2 + $0x21] sm:$0xff] %v2242
        %2279 = vst [vmem:[#allocation2 + $0x31] sm:$0xff] %v2243
        %2280 = vst [vmem:[#allocation2 + $0x39] sm:$0xff] %v2244
        %2281 = vst [vmem:[#allocation2 + $0x49] sm:$0xff] %v2245
        %2282 = vst [vmem:[#allocation2 + $0x51] sm:$0xff] %v2246
        %2283 = vst [vmem:[#allocation2 + $0x61] sm:$0xff] %v2247
        %2284 = vst [vmem:[#allocation2 + $0x69] sm:$0xff] %v2248
        %2285 = vst [vmem:[#allocation2 + $0x79] sm:$0xff] %v2249
        %2286 = vst [vmem:[#allocation2 + $0x81] sm:$0xff] %v2250
        %2287 = vst [vmem:[#allocation2 + $0x91] sm:$0xff] %v2251
        %2288 = vst [vmem:[#allocation2 + $0x99] sm:$0xff] %v2252
        %2289 = vst [vmem:[#allocation2 + $0xa9] sm:$0xff] %v2253
        %2290 = vst [vmem:[#allocation2 + $0xb1] sm:$0xff] %v2254
        %2291 = vst [vmem:[#allocation2 + $0xc1] sm:$0xff] %v2255
        %2292 = vst [vmem:[#allocation2 + $0xc9] sm:$0xff] %v2256
        %2293 = vst [vmem:[#allocation2 + $0xd9] sm:$0xff] %v2257
        %2294 = vst [vmem:[#allocation2 + $0xe1] sm:$0xff] %v2258
        %2295 = vst [vmem:[#allocation2 + $0xf1] sm:$0xff] %v2259
        %2296 = vst [vmem:[#allocation2 + $0xf9] sm:$0xff] %v2260
        %2297 = vst [vmem:[#allocation2 + $0x109] sm:$0xff] %v2261
        %2298 = vst [vmem:[#allocation2 + $0x111] sm:$0xff] %v2262
        %2299 = vst [vmem:[#allocation2 + $0x121] sm:$0xff] %v2263
        %2300 = vst [vmem:[#allocation2 + $0x129] sm:$0xff] %v2264
        %2301 = vst [vmem:[#allocation2 + $0x139] sm:$0xff] %v2265
        %2302 = vst [vmem:[#allocation2 + $0x141] sm:$0xff] %v2266
        %2303 = vst [vmem:[#allocation2 + $0x151] sm:$0xff] %v2267
        %2304 = vst [vmem:[#allocation2 + $0x159] sm:$0xff] %v2268
        %2305 = vst [vmem:[#allocation2 + $0x169] sm:$0xff] %v2269
        %2306 = vst [vmem:[#allocation2 + $0x171] sm:$0xff] %v2270
        %2307 = vst [vmem:[#allocation2 + $0x181] sm:$0xff] %v2271
        %2308 = vst [vmem:[#allocation2 + $0x189] sm:$0xff] %v2272
        %2309 = vst [vmem:[#allocation2 + $0x199] sm:$0xff] %v2273
        %2310 = vst [vmem:[#allocation2 + $0x1a1] sm:$0xff] %v2274
        %p2311 = scmp.eq.s32.totalorder %s24, 0
        // Predicated region
        $region41: #{tpu_custom_call.1} parent=39 // pred_check
          %p2312 = pneg %p2311
        $region42: #{tpu_custom_call.1} parent=39 // pred_check_branch
          %2314 = sbr.rel (%p2312) target = $region44
        $region43: #{tpu_custom_call.1} parent=39 // pred_region
          %2315 = vst [vmem:[#allocation2] sm:$0xff] 0.0
          %2316 = vst [vmem:[#allocation2 + $0x8] sm:$0xff] 0.0
          %2317 = vst [vmem:[#allocation2 + $0x10] sm:$0x3] 0.0
          %s2318 = scalar_lea.vmem [#allocation2], 408
          %2319 = vst [vmem:[%s2318] sm:$0xff] 0.0
          %2320 = vst [vmem:[%s2318 + $0x8] sm:$0xff] 0.0
          %2321 = vst [vmem:[%s2318 + $0x10] sm:$0x3] 0.0
        $region44: #{tpu_custom_call.1} parent=39 // pred_fallthru
          _
        %v2322 = vld [vmem:[#allocation2] sm:$0xff]
        %v2323 = vld [vmem:[#allocation2 + $0x8] sm:$0xff]
        %v2324 = vld [vmem:[#allocation2 + $0x18] sm:$0xff]
        %v2325 = vld [vmem:[#allocation2 + $0x20] sm:$0xff]
        %v2326 = vld [vmem:[#allocation2 + $0x30] sm:$0xff]
        %v2327 = vld [vmem:[#allocation2 + $0x38] sm:$0xff]
        %v2328 = vld [vmem:[#allocation2 + $0x48] sm:$0xff]
        %v2329 = vld [vmem:[#allocation2 + $0x50] sm:$0xff]
        %v2330 = vld [vmem:[#allocation2 + $0x60] sm:$0xff]
        %v2331 = vld [vmem:[#allocation2 + $0x68] sm:$0xff]
        %v2332 = vld [vmem:[#allocation2 + $0x78] sm:$0xff]
        %v2333 = vld [vmem:[#allocation2 + $0x80] sm:$0xff]
        %v2334 = vld [vmem:[#allocation2 + $0x90] sm:$0xff]
        %v2335 = vld [vmem:[#allocation2 + $0x98] sm:$0xff]
        %v2336 = vld [vmem:[#allocation2 + $0xa8] sm:$0xff]
        %v2337 = vld [vmem:[#allocation2 + $0xb0] sm:$0xff]
        %v2338 = vld [vmem:[#allocation2 + $0xc0] sm:$0xff]
        %v2339 = vld [vmem:[#allocation2 + $0xc8] sm:$0xff]
        %v2340 = vld [vmem:[#allocation2 + $0xd8] sm:$0xff]
        %v2341 = vld [vmem:[#allocation2 + $0xe0] sm:$0xff]
        %v2342 = vld [vmem:[#allocation2 + $0xf0] sm:$0xff]
        %v2343 = vld [vmem:[#allocation2 + $0xf8] sm:$0xff]
        %v2344 = vld [vmem:[#allocation2 + $0x108] sm:$0xff]
        %v2345 = vld [vmem:[#allocation2 + $0x110] sm:$0xff]
        %v2346 = vld [vmem:[#allocation2 + $0x120] sm:$0xff]
        %v2347 = vld [vmem:[#allocation2 + $0x128] sm:$0xff]
        %v2348 = vld [vmem:[#allocation2 + $0x138] sm:$0xff]
        %v2349 = vld [vmem:[#allocation2 + $0x140] sm:$0xff]
        %v2350 = vld [vmem:[#allocation2 + $0x150] sm:$0xff]
        %v2351 = vld [vmem:[#allocation2 + $0x158] sm:$0xff]
        %v2352 = vld [vmem:[#allocation2 + $0x168] sm:$0xff]
        %v2353 = vld [vmem:[#allocation2 + $0x170] sm:$0xff]
        %v2354 = vpack.c.bf16 %v2323, %v2322
        %v2355 = vpack.c.bf16 %v2325, %v2324
        %v2356 = vpack.c.bf16 %v2327, %v2326
        %v2357 = vpack.c.bf16 %v2329, %v2328
        %v2358 = vpack.c.bf16 %v2331, %v2330
        %v2359 = vpack.c.bf16 %v2333, %v2332
        %v2360 = vpack.c.bf16 %v2335, %v2334
        %v2361 = vpack.c.bf16 %v2337, %v2336
        %v2362 = vpack.c.bf16 %v2339, %v2338
        %v2363 = vpack.c.bf16 %v2341, %v2340
        %v2364 = vpack.c.bf16 %v2343, %v2342
        %v2365 = vpack.c.bf16 %v2345, %v2344
        %v2366 = vpack.c.bf16 %v2347, %v2346
        %v2367 = vpack.c.bf16 %v2349, %v2348
        %v2368 = vpack.c.bf16 %v2351, %v2350
        %v2369 = vpack.c.bf16 %v2353, %v2352
        %v2370 = vld [vmem:[#allocation2 + $0x1] sm:$0xff]
        %v2371 = vld [vmem:[#allocation2 + $0x9] sm:$0xff]
        %v2372 = vld [vmem:[#allocation2 + $0x19] sm:$0xff]
        %v2373 = vld [vmem:[#allocation2 + $0x21] sm:$0xff]
        %v2374 = vld [vmem:[#allocation2 + $0x31] sm:$0xff]
        %v2375 = vld [vmem:[#allocation2 + $0x39] sm:$0xff]
        %v2376 = vld [vmem:[#allocation2 + $0x49] sm:$0xff]
        %v2377 = vld [vmem:[#allocation2 + $0x51] sm:$0xff]
        %v2378 = vld [vmem:[#allocation2 + $0x61] sm:$0xff]
        %v2379 = vld [vmem:[#allocation2 + $0x69] sm:$0xff]
        %v2380 = vld [vmem:[#allocation2 + $0x79] sm:$0xff]
        %v2381 = vld [vmem:[#allocation2 + $0x81] sm:$0xff]
        %v2382 = vld [vmem:[#allocation2 + $0x91] sm:$0xff]
        %v2383 = vld [vmem:[#allocation2 + $0x99] sm:$0xff]
        %v2384 = vld [vmem:[#allocation2 + $0xa9] sm:$0xff]
        %v2385 = vld [vmem:[#allocation2 + $0xb1] sm:$0xff]
        %v2386 = vld [vmem:[#allocation2 + $0xc1] sm:$0xff]
        %v2387 = vld [vmem:[#allocation2 + $0xc9] sm:$0xff]
        %v2388 = vld [vmem:[#allocation2 + $0xd9] sm:$0xff]
        %v2389 = vld [vmem:[#allocation2 + $0xe1] sm:$0xff]
        %v2390 = vld [vmem:[#allocation2 + $0xf1] sm:$0xff]
        %v2391 = vld [vmem:[#allocation2 + $0xf9] sm:$0xff]
        %v2392 = vld [vmem:[#allocation2 + $0x109] sm:$0xff]
        %v2393 = vld [vmem:[#allocation2 + $0x111] sm:$0xff]
        %v2394 = vld [vmem:[#allocation2 + $0x121] sm:$0xff]
        %v2395 = vld [vmem:[#allocation2 + $0x129] sm:$0xff]
        %v2396 = vld [vmem:[#allocation2 + $0x139] sm:$0xff]
        %v2397 = vld [vmem:[#allocation2 + $0x141] sm:$0xff]
        %v2398 = vld [vmem:[#allocation2 + $0x151] sm:$0xff]
        %v2399 = vld [vmem:[#allocation2 + $0x159] sm:$0xff]
        %v2400 = vld [vmem:[#allocation2 + $0x169] sm:$0xff]
        %v2401 = vld [vmem:[#allocation2 + $0x171] sm:$0xff]
        %v2402 = vpack.c.bf16 %v2371, %v2370
        %v2403 = vpack.c.bf16 %v2373, %v2372
        %v2404 = vpack.c.bf16 %v2375, %v2374
        %v2405 = vpack.c.bf16 %v2377, %v2376
        %v2406 = vpack.c.bf16 %v2379, %v2378
        %v2407 = vpack.c.bf16 %v2381, %v2380
        %v2408 = vpack.c.bf16 %v2383, %v2382
        %v2409 = vpack.c.bf16 %v2385, %v2384
        %v2410 = vpack.c.bf16 %v2387, %v2386
        %v2411 = vpack.c.bf16 %v2389, %v2388
        %v2412 = vpack.c.bf16 %v2391, %v2390
        %v2413 = vpack.c.bf16 %v2393, %v2392
        %v2414 = vpack.c.bf16 %v2395, %v2394
        %v2415 = vpack.c.bf16 %v2397, %v2396
        %v2416 = vpack.c.bf16 %v2399, %v2398
        %v2417 = vpack.c.bf16 %v2401, %v2400
        %v2418 = vld [vmem:[#allocation2 + $0x2] sm:$0xff]
        %v2419 = vld [vmem:[#allocation2 + $0xa] sm:$0xff]
        %v2420 = vld [vmem:[#allocation2 + $0x1a] sm:$0xff]
        %v2421 = vld [vmem:[#allocation2 + $0x22] sm:$0xff]
        %v2422 = vld [vmem:[#allocation2 + $0x32] sm:$0xff]
        %v2423 = vld [vmem:[#allocation2 + $0x3a] sm:$0xff]
        %v2424 = vld [vmem:[#allocation2 + $0x4a] sm:$0xff]
        %v2425 = vld [vmem:[#allocation2 + $0x52] sm:$0xff]
        %v2426 = vld [vmem:[#allocation2 + $0x62] sm:$0xff]
        %v2427 = vld [vmem:[#allocation2 + $0x6a] sm:$0xff]
        %v2428 = vld [vmem:[#allocation2 + $0x7a] sm:$0xff]
        %v2429 = vld [vmem:[#allocation2 + $0x82] sm:$0xff]
        %v2430 = vld [vmem:[#allocation2 + $0x92] sm:$0xff]
        %v2431 = vld [vmem:[#allocation2 + $0x9a] sm:$0xff]
        %v2432 = vld [vmem:[#allocation2 + $0xaa] sm:$0xff]
        %v2433 = vld [vmem:[#allocation2 + $0xb2] sm:$0xff]
        %v2434 = vld [vmem:[#allocation2 + $0xc2] sm:$0xff]
        %v2435 = vld [vmem:[#allocation2 + $0xca] sm:$0xff]
        %v2436 = vld [vmem:[#allocation2 + $0xda] sm:$0xff]
        %v2437 = vld [vmem:[#allocation2 + $0xe2] sm:$0xff]
        %v2438 = vld [vmem:[#allocation2 + $0xf2] sm:$0xff]
        %v2439 = vld [vmem:[#allocation2 + $0xfa] sm:$0xff]
        %v2440 = vld [vmem:[#allocation2 + $0x10a] sm:$0xff]
        %v2441 = vld [vmem:[#allocation2 + $0x112] sm:$0xff]
        %v2442 = vld [vmem:[#allocation2 + $0x122] sm:$0xff]
        %v2443 = vld [vmem:[#allocation2 + $0x12a] sm:$0xff]
        %v2444 = vld [vmem:[#allocation2 + $0x13a] sm:$0xff]
        %v2445 = vld [vmem:[#allocation2 + $0x142] sm:$0xff]
        %v2446 = vld [vmem:[#allocation2 + $0x152] sm:$0xff]
        %v2447 = vld [vmem:[#allocation2 + $0x15a] sm:$0xff]
        %v2448 = vld [vmem:[#allocation2 + $0x16a] sm:$0xff]
        %v2449 = vld [vmem:[#allocation2 + $0x172] sm:$0xff]
        %v2450 = vpack.c.bf16 %v2419, %v2418
        %v2451 = vpack.c.bf16 %v2421, %v2420
        %v2452 = vpack.c.bf16 %v2423, %v2422
        %v2453 = vpack.c.bf16 %v2425, %v2424
        %v2454 = vpack.c.bf16 %v2427, %v2426
        %v2455 = vpack.c.bf16 %v2429, %v2428
        %v2456 = vpack.c.bf16 %v2431, %v2430
        %v2457 = vpack.c.bf16 %v2433, %v2432
        %v2458 = vpack.c.bf16 %v2435, %v2434
        %v2459 = vpack.c.bf16 %v2437, %v2436
        %v2460 = vpack.c.bf16 %v2439, %v2438
        %v2461 = vpack.c.bf16 %v2441, %v2440
        %v2462 = vpack.c.bf16 %v2443, %v2442
        %v2463 = vpack.c.bf16 %v2445, %v2444
        %v2464 = vpack.c.bf16 %v2447, %v2446
        %v2465 = vpack.c.bf16 %v2449, %v2448
        %s2466 = scalar_lea.vmem [#allocation2], 24
        %v2467 = vld [vmem:[%s2466] sm:$0xff]
        %v2468 = vld [vmem:[%s2466 + $0x8] sm:$0xff]
        %v2469 = vld [vmem:[%s2466 + $0x18] sm:$0xff]
        %v2470 = vld [vmem:[%s2466 + $0x20] sm:$0xff]
        %v2471 = vld [vmem:[%s2466 + $0x30] sm:$0xff]
        %v2472 = vld [vmem:[%s2466 + $0x38] sm:$0xff]
        %v2473 = vld [vmem:[%s2466 + $0x48] sm:$0xff]
        %v2474 = vld [vmem:[%s2466 + $0x50] sm:$0xff]
        %v2475 = vld [vmem:[%s2466 + $0x60] sm:$0xff]
        %v2476 = vld [vmem:[%s2466 + $0x68] sm:$0xff]
        %v2477 = vld [vmem:[%s2466 + $0x78] sm:$0xff]
        %v2478 = vld [vmem:[%s2466 + $0x80] sm:$0xff]
        %v2479 = vld [vmem:[%s2466 + $0x90] sm:$0xff]
        %v2480 = vld [vmem:[%s2466 + $0x98] sm:$0xff]
        %v2481 = vld [vmem:[%s2466 + $0xa8] sm:$0xff]
        %v2482 = vld [vmem:[%s2466 + $0xb0] sm:$0xff]
        %v2483 = vld [vmem:[%s2466 + $0xc0] sm:$0xff]
        %v2484 = vld [vmem:[%s2466 + $0xc8] sm:$0xff]
        %v2485 = vld [vmem:[%s2466 + $0xd8] sm:$0xff]
        %v2486 = vld [vmem:[%s2466 + $0xe0] sm:$0xff]
        %v2487 = vld [vmem:[%s2466 + $0xf0] sm:$0xff]
        %v2488 = vld [vmem:[%s2466 + $0xf8] sm:$0xff]
        %v2489 = vld [vmem:[%s2466 + $0x108] sm:$0xff]
        %v2490 = vld [vmem:[%s2466 + $0x110] sm:$0xff]
        %v2491 = vld [vmem:[%s2466 + $0x120] sm:$0xff]
        %v2492 = vld [vmem:[%s2466 + $0x128] sm:$0xff]
        %v2493 = vld [vmem:[%s2466 + $0x138] sm:$0xff]
        %v2494 = vld [vmem:[%s2466 + $0x140] sm:$0xff]
        %v2495 = vld [vmem:[%s2466 + $0x150] sm:$0xff]
        %v2496 = vld [vmem:[%s2466 + $0x158] sm:$0xff]
        %v2497 = vld [vmem:[%s2466 + $0x168] sm:$0xff]
        %v2498 = vld [vmem:[%s2466 + $0x170] sm:$0xff]
        %v2499 = vpack.c.bf16 %v2468, %v2467
        %v2500 = vpack.c.bf16 %v2470, %v2469
        %v2501 = vpack.c.bf16 %v2472, %v2471
        %v2502 = vpack.c.bf16 %v2474, %v2473
        %v2503 = vpack.c.bf16 %v2476, %v2475
        %v2504 = vpack.c.bf16 %v2478, %v2477
        %v2505 = vpack.c.bf16 %v2480, %v2479
        %v2506 = vpack.c.bf16 %v2482, %v2481
        %v2507 = vpack.c.bf16 %v2484, %v2483
        %v2508 = vpack.c.bf16 %v2486, %v2485
        %v2509 = vpack.c.bf16 %v2488, %v2487
        %v2510 = vpack.c.bf16 %v2490, %v2489
        %v2511 = vpack.c.bf16 %v2492, %v2491
        %v2512 = vpack.c.bf16 %v2494, %v2493
        %v2513 = vpack.c.bf16 %v2496, %v2495
        %v2514 = vpack.c.bf16 %v2498, %v2497
        %v2515 = vld [vmem:[%s2466 + $0x1] sm:$0xff]
        %v2516 = vld [vmem:[%s2466 + $0x9] sm:$0xff]
        %v2517 = vld [vmem:[%s2466 + $0x19] sm:$0xff]
        %v2518 = vld [vmem:[%s2466 + $0x21] sm:$0xff]
        %v2519 = vld [vmem:[%s2466 + $0x31] sm:$0xff]
        %v2520 = vld [vmem:[%s2466 + $0x39] sm:$0xff]
        %v2521 = vld [vmem:[%s2466 + $0x49] sm:$0xff]
        %v2522 = vld [vmem:[%s2466 + $0x51] sm:$0xff]
        %v2523 = vld [vmem:[%s2466 + $0x61] sm:$0xff]
        %v2524 = vld [vmem:[%s2466 + $0x69] sm:$0xff]
        %v2525 = vld [vmem:[%s2466 + $0x79] sm:$0xff]
        %v2526 = vld [vmem:[%s2466 + $0x81] sm:$0xff]
        %v2527 = vld [vmem:[%s2466 + $0x91] sm:$0xff]
        %v2528 = vld [vmem:[%s2466 + $0x99] sm:$0xff]
        %v2529 = vld [vmem:[%s2466 + $0xa9] sm:$0xff]
        %v2530 = vld [vmem:[%s2466 + $0xb1] sm:$0xff]
        %v2531 = vld [vmem:[%s2466 + $0xc1] sm:$0xff]
        %v2532 = vld [vmem:[%s2466 + $0xc9] sm:$0xff]
        %v2533 = vld [vmem:[%s2466 + $0xd9] sm:$0xff]
        %v2534 = vld [vmem:[%s2466 + $0xe1] sm:$0xff]
        %v2535 = vld [vmem:[%s2466 + $0xf1] sm:$0xff]
        %v2536 = vld [vmem:[%s2466 + $0xf9] sm:$0xff]
        %v2537 = vld [vmem:[%s2466 + $0x109] sm:$0xff]
        %v2538 = vld [vmem:[%s2466 + $0x111] sm:$0xff]
        %v2539 = vld [vmem:[%s2466 + $0x121] sm:$0xff]
        %v2540 = vld [vmem:[%s2466 + $0x129] sm:$0xff]
        %v2541 = vld [vmem:[%s2466 + $0x139] sm:$0xff]
        %v2542 = vld [vmem:[%s2466 + $0x141] sm:$0xff]
        %v2543 = vld [vmem:[%s2466 + $0x151] sm:$0xff]
        %v2544 = vld [vmem:[%s2466 + $0x159] sm:$0xff]
        %v2545 = vld [vmem:[%s2466 + $0x169] sm:$0xff]
        %v2546 = vld [vmem:[%s2466 + $0x171] sm:$0xff]
        %v2547 = vpack.c.bf16 %v2516, %v2515
        %v2548 = vpack.c.bf16 %v2518, %v2517
        %v2549 = vpack.c.bf16 %v2520, %v2519
        %v2550 = vpack.c.bf16 %v2522, %v2521
        %v2551 = vpack.c.bf16 %v2524, %v2523
        %v2552 = vpack.c.bf16 %v2526, %v2525
        %v2553 = vpack.c.bf16 %v2528, %v2527
        %v2554 = vpack.c.bf16 %v2530, %v2529
        %v2555 = vpack.c.bf16 %v2532, %v2531
        %v2556 = vpack.c.bf16 %v2534, %v2533
        %v2557 = vpack.c.bf16 %v2536, %v2535
        %v2558 = vpack.c.bf16 %v2538, %v2537
        %v2559 = vpack.c.bf16 %v2540, %v2539
        %v2560 = vpack.c.bf16 %v2542, %v2541
        %v2561 = vpack.c.bf16 %v2544, %v2543
        %v2562 = vpack.c.bf16 %v2546, %v2545
        %v2563 = vld [vmem:[%s2466 + $0x2] sm:$0xff]
        %v2564 = vld [vmem:[%s2466 + $0xa] sm:$0xff]
        %v2565 = vld [vmem:[%s2466 + $0x1a] sm:$0xff]
        %v2566 = vld [vmem:[%s2466 + $0x22] sm:$0xff]
        %v2567 = vld [vmem:[%s2466 + $0x32] sm:$0xff]
        %v2568 = vld [vmem:[%s2466 + $0x3a] sm:$0xff]
        %v2569 = vld [vmem:[%s2466 + $0x4a] sm:$0xff]
        %v2570 = vld [vmem:[%s2466 + $0x52] sm:$0xff]
        %v2571 = vld [vmem:[%s2466 + $0x62] sm:$0xff]
        %v2572 = vld [vmem:[%s2466 + $0x6a] sm:$0xff]
        %v2573 = vld [vmem:[%s2466 + $0x7a] sm:$0xff]
        %v2574 = vld [vmem:[%s2466 + $0x82] sm:$0xff]
        %v2575 = vld [vmem:[%s2466 + $0x92] sm:$0xff]
        %v2576 = vld [vmem:[%s2466 + $0x9a] sm:$0xff]
        %v2577 = vld [vmem:[%s2466 + $0xaa] sm:$0xff]
        %v2578 = vld [vmem:[%s2466 + $0xb2] sm:$0xff]
        %v2579 = vld [vmem:[%s2466 + $0xc2] sm:$0xff]
        %v2580 = vld [vmem:[%s2466 + $0xca] sm:$0xff]
        %v2581 = vld [vmem:[%s2466 + $0xda] sm:$0xff]
        %v2582 = vld [vmem:[%s2466 + $0xe2] sm:$0xff]
        %v2583 = vld [vmem:[%s2466 + $0xf2] sm:$0xff]
        %v2584 = vld [vmem:[%s2466 + $0xfa] sm:$0xff]
        %v2585 = vld [vmem:[%s2466 + $0x10a] sm:$0xff]
        %v2586 = vld [vmem:[%s2466 + $0x112] sm:$0xff]
        %v2587 = vld [vmem:[%s2466 + $0x122] sm:$0xff]
        %v2588 = vld [vmem:[%s2466 + $0x12a] sm:$0xff]
        %v2589 = vld [vmem:[%s2466 + $0x13a] sm:$0xff]
        %v2590 = vld [vmem:[%s2466 + $0x142] sm:$0xff]
        %v2591 = vld [vmem:[%s2466 + $0x152] sm:$0xff]
        %v2592 = vld [vmem:[%s2466 + $0x15a] sm:$0xff]
        %v2593 = vld [vmem:[%s2466 + $0x16a] sm:$0xff]
        %v2594 = vld [vmem:[%s2466 + $0x172] sm:$0xff]
        %v2595 = vpack.c.bf16 %v2564, %v2563
        %v2596 = vpack.c.bf16 %v2566, %v2565
        %v2597 = vpack.c.bf16 %v2568, %v2567
        %v2598 = vpack.c.bf16 %v2570, %v2569
        %v2599 = vpack.c.bf16 %v2572, %v2571
        %v2600 = vpack.c.bf16 %v2574, %v2573
        %v2601 = vpack.c.bf16 %v2576, %v2575
        %v2602 = vpack.c.bf16 %v2578, %v2577
        %v2603 = vpack.c.bf16 %v2580, %v2579
        %v2604 = vpack.c.bf16 %v2582, %v2581
        %v2605 = vpack.c.bf16 %v2584, %v2583
        %v2606 = vpack.c.bf16 %v2586, %v2585
        %v2607 = vpack.c.bf16 %v2588, %v2587
        %v2608 = vpack.c.bf16 %v2590, %v2589
        %v2609 = vpack.c.bf16 %v2592, %v2591
        %v2610 = vpack.c.bf16 %v2594, %v2593
        %s2611 = scalar_lea.vmem [#allocation2], 48
        %v2612 = vld [vmem:[%s2611] sm:$0xff]
        %v2613 = vld [vmem:[%s2611 + $0x8] sm:$0xff]
        %v2614 = vld [vmem:[%s2611 + $0x18] sm:$0xff]
        %v2615 = vld [vmem:[%s2611 + $0x20] sm:$0xff]
        %v2616 = vld [vmem:[%s2611 + $0x30] sm:$0xff]
        %v2617 = vld [vmem:[%s2611 + $0x38] sm:$0xff]
        %v2618 = vld [vmem:[%s2611 + $0x48] sm:$0xff]
        %v2619 = vld [vmem:[%s2611 + $0x50] sm:$0xff]
        %v2620 = vld [vmem:[%s2611 + $0x60] sm:$0xff]
        %v2621 = vld [vmem:[%s2611 + $0x68] sm:$0xff]
        %v2622 = vld [vmem:[%s2611 + $0x78] sm:$0xff]
        %v2623 = vld [vmem:[%s2611 + $0x80] sm:$0xff]
        %v2624 = vld [vmem:[%s2611 + $0x90] sm:$0xff]
        %v2625 = vld [vmem:[%s2611 + $0x98] sm:$0xff]
        %v2626 = vld [vmem:[%s2611 + $0xa8] sm:$0xff]
        %v2627 = vld [vmem:[%s2611 + $0xb0] sm:$0xff]
        %v2628 = vld [vmem:[%s2611 + $0xc0] sm:$0xff]
        %v2629 = vld [vmem:[%s2611 + $0xc8] sm:$0xff]
        %v2630 = vld [vmem:[%s2611 + $0xd8] sm:$0xff]
        %v2631 = vld [vmem:[%s2611 + $0xe0] sm:$0xff]
        %v2632 = vld [vmem:[%s2611 + $0xf0] sm:$0xff]
        %v2633 = vld [vmem:[%s2611 + $0xf8] sm:$0xff]
        %v2634 = vld [vmem:[%s2611 + $0x108] sm:$0xff]
        %v2635 = vld [vmem:[%s2611 + $0x110] sm:$0xff]
        %v2636 = vld [vmem:[%s2611 + $0x120] sm:$0xff]
        %v2637 = vld [vmem:[%s2611 + $0x128] sm:$0xff]
        %v2638 = vld [vmem:[%s2611 + $0x138] sm:$0xff]
        %v2639 = vld [vmem:[%s2611 + $0x140] sm:$0xff]
        %v2640 = vld [vmem:[%s2611 + $0x150] sm:$0xff]
        %v2641 = vld [vmem:[%s2611 + $0x158] sm:$0xff]
        %v2642 = vld [vmem:[%s2611 + $0x168] sm:$0xff]
        %v2643 = vld [vmem:[%s2611 + $0x170] sm:$0xff]
        %v2644 = vpack.c.bf16 %v2613, %v2612
        %v2645 = vpack.c.bf16 %v2615, %v2614
        %v2646 = vpack.c.bf16 %v2617, %v2616
        %v2647 = vpack.c.bf16 %v2619, %v2618
        %v2648 = vpack.c.bf16 %v2621, %v2620
        %v2649 = vpack.c.bf16 %v2623, %v2622
        %v2650 = vpack.c.bf16 %v2625, %v2624
        %v2651 = vpack.c.bf16 %v2627, %v2626
        %v2652 = vpack.c.bf16 %v2629, %v2628
        %v2653 = vpack.c.bf16 %v2631, %v2630
        %v2654 = vpack.c.bf16 %v2633, %v2632
        %v2655 = vpack.c.bf16 %v2635, %v2634
        %v2656 = vpack.c.bf16 %v2637, %v2636
        %v2657 = vpack.c.bf16 %v2639, %v2638
        %v2658 = vpack.c.bf16 %v2641, %v2640
        %v2659 = vpack.c.bf16 %v2643, %v2642
        %v2660 = vld [vmem:[%s2611 + $0x1] sm:$0xff]
        %v2661 = vld [vmem:[%s2611 + $0x9] sm:$0xff]
        %v2662 = vld [vmem:[%s2611 + $0x19] sm:$0xff]
        %v2663 = vld [vmem:[%s2611 + $0x21] sm:$0xff]
        %v2664 = vld [vmem:[%s2611 + $0x31] sm:$0xff]
        %v2665 = vld [vmem:[%s2611 + $0x39] sm:$0xff]
        %v2666 = vld [vmem:[%s2611 + $0x49] sm:$0xff]
        %v2667 = vld [vmem:[%s2611 + $0x51] sm:$0xff]
        %v2668 = vld [vmem:[%s2611 + $0x61] sm:$0xff]
        %v2669 = vld [vmem:[%s2611 + $0x69] sm:$0xff]
        %v2670 = vld [vmem:[%s2611 + $0x79] sm:$0xff]
        %v2671 = vld [vmem:[%s2611 + $0x81] sm:$0xff]
        %v2672 = vld [vmem:[%s2611 + $0x91] sm:$0xff]
        %v2673 = vld [vmem:[%s2611 + $0x99] sm:$0xff]
        %v2674 = vld [vmem:[%s2611 + $0xa9] sm:$0xff]
        %v2675 = vld [vmem:[%s2611 + $0xb1] sm:$0xff]
        %v2676 = vld [vmem:[%s2611 + $0xc1] sm:$0xff]
        %v2677 = vld [vmem:[%s2611 + $0xc9] sm:$0xff]
        %v2678 = vld [vmem:[%s2611 + $0xd9] sm:$0xff]
        %v2679 = vld [vmem:[%s2611 + $0xe1] sm:$0xff]
        %v2680 = vld [vmem:[%s2611 + $0xf1] sm:$0xff]
        %v2681 = vld [vmem:[%s2611 + $0xf9] sm:$0xff]
        %v2682 = vld [vmem:[%s2611 + $0x109] sm:$0xff]
        %v2683 = vld [vmem:[%s2611 + $0x111] sm:$0xff]
        %v2684 = vld [vmem:[%s2611 + $0x121] sm:$0xff]
        %v2685 = vld [vmem:[%s2611 + $0x129] sm:$0xff]
        %v2686 = vld [vmem:[%s2611 + $0x139] sm:$0xff]
        %v2687 = vld [vmem:[%s2611 + $0x141] sm:$0xff]
        %v2688 = vld [vmem:[%s2611 + $0x151] sm:$0xff]
        %v2689 = vld [vmem:[%s2611 + $0x159] sm:$0xff]
        %v2690 = vld [vmem:[%s2611 + $0x169] sm:$0xff]
        %v2691 = vld [vmem:[%s2611 + $0x171] sm:$0xff]
        %v2692 = vpack.c.bf16 %v2661, %v2660
        %v2693 = vpack.c.bf16 %v2663, %v2662
        %v2694 = vpack.c.bf16 %v2665, %v2664
        %v2695 = vpack.c.bf16 %v2667, %v2666
        %v2696 = vpack.c.bf16 %v2669, %v2668
        %v2697 = vpack.c.bf16 %v2671, %v2670
        %v2698 = vpack.c.bf16 %v2673, %v2672
        %v2699 = vpack.c.bf16 %v2675, %v2674
        %v2700 = vpack.c.bf16 %v2677, %v2676
        %v2701 = vpack.c.bf16 %v2679, %v2678
        %v2702 = vpack.c.bf16 %v2681, %v2680
        %v2703 = vpack.c.bf16 %v2683, %v2682
        %v2704 = vpack.c.bf16 %v2685, %v2684
        %v2705 = vpack.c.bf16 %v2687, %v2686
        %v2706 = vpack.c.bf16 %v2689, %v2688
        %v2707 = vpack.c.bf16 %v2691, %v2690
        %v2708 = vld [vmem:[%s2611 + $0x2] sm:$0xff]
        %v2709 = vld [vmem:[%s2611 + $0xa] sm:$0xff]
        %v2710 = vld [vmem:[%s2611 + $0x1a] sm:$0xff]
        %v2711 = vld [vmem:[%s2611 + $0x22] sm:$0xff]
        %v2712 = vld [vmem:[%s2611 + $0x32] sm:$0xff]
        %v2713 = vld [vmem:[%s2611 + $0x3a] sm:$0xff]
        %v2714 = vld [vmem:[%s2611 + $0x4a] sm:$0xff]
        %v2715 = vld [vmem:[%s2611 + $0x52] sm:$0xff]
        %v2716 = vld [vmem:[%s2611 + $0x62] sm:$0xff]
        %v2717 = vld [vmem:[%s2611 + $0x6a] sm:$0xff]
        %v2718 = vld [vmem:[%s2611 + $0x7a] sm:$0xff]
        %v2719 = vld [vmem:[%s2611 + $0x82] sm:$0xff]
        %v2720 = vld [vmem:[%s2611 + $0x92] sm:$0xff]
        %v2721 = vld [vmem:[%s2611 + $0x9a] sm:$0xff]
        %v2722 = vld [vmem:[%s2611 + $0xaa] sm:$0xff]
        %v2723 = vld [vmem:[%s2611 + $0xb2] sm:$0xff]
        %v2724 = vld [vmem:[%s2611 + $0xc2] sm:$0xff]
        %v2725 = vld [vmem:[%s2611 + $0xca] sm:$0xff]
        %v2726 = vld [vmem:[%s2611 + $0xda] sm:$0xff]
        %v2727 = vld [vmem:[%s2611 + $0xe2] sm:$0xff]
        %v2728 = vld [vmem:[%s2611 + $0xf2] sm:$0xff]
        %v2729 = vld [vmem:[%s2611 + $0xfa] sm:$0xff]
        %v2730 = vld [vmem:[%s2611 + $0x10a] sm:$0xff]
        %v2731 = vld [vmem:[%s2611 + $0x112] sm:$0xff]
        %v2732 = vld [vmem:[%s2611 + $0x122] sm:$0xff]
        %v2733 = vld [vmem:[%s2611 + $0x12a] sm:$0xff]
        %v2734 = vld [vmem:[%s2611 + $0x13a] sm:$0xff]
        %v2735 = vld [vmem:[%s2611 + $0x142] sm:$0xff]
        %v2736 = vld [vmem:[%s2611 + $0x152] sm:$0xff]
        %v2737 = vld [vmem:[%s2611 + $0x15a] sm:$0xff]
        %v2738 = vld [vmem:[%s2611 + $0x16a] sm:$0xff]
        %v2739 = vld [vmem:[%s2611 + $0x172] sm:$0xff]
        %v2740 = vpack.c.bf16 %v2709, %v2708
        %v2741 = vpack.c.bf16 %v2711, %v2710
        %v2742 = vpack.c.bf16 %v2713, %v2712
        %v2743 = vpack.c.bf16 %v2715, %v2714
        %v2744 = vpack.c.bf16 %v2717, %v2716
        %v2745 = vpack.c.bf16 %v2719, %v2718
        %v2746 = vpack.c.bf16 %v2721, %v2720
        %v2747 = vpack.c.bf16 %v2723, %v2722
        %v2748 = vpack.c.bf16 %v2725, %v2724
        %v2749 = vpack.c.bf16 %v2727, %v2726
        %v2750 = vpack.c.bf16 %v2729, %v2728
        %v2751 = vpack.c.bf16 %v2731, %v2730
        %v2752 = vpack.c.bf16 %v2733, %v2732
        %v2753 = vpack.c.bf16 %v2735, %v2734
        %v2754 = vpack.c.bf16 %v2737, %v2736
        %v2755 = vpack.c.bf16 %v2739, %v2738
        %v2756 = vld [vmem:[%s3] sm:$0xf]
        %v2757 = vld [vmem:[%s3 + $0x4] sm:$0xf]
        %v2758 = vld [vmem:[%s3 + $0x8] sm:$0xf]
        %v2759 = vld [vmem:[%s3 + $0xc] sm:$0xf]
        %v2760 = vld [vmem:[%s3 + $0x10] sm:$0xf]
        %v2761 = vld [vmem:[%s3 + $0x14] sm:$0xf]
        %v2762 = vld [vmem:[%s3 + $0x18] sm:$0xf]
        %v2763 = vld [vmem:[%s3 + $0x1c] sm:$0xf]
        %v2764 = vld [vmem:[%s3 + $0x20] sm:$0xf]
        %v2765 = vld [vmem:[%s3 + $0x24] sm:$0xf]
        %v2766 = vld [vmem:[%s3 + $0x28] sm:$0xf]
        %v2767 = vld [vmem:[%s3 + $0x2c] sm:$0xf]
        %v2768 = vld [vmem:[%s3 + $0x30] sm:$0xf]
        %v2769 = vld [vmem:[%s3 + $0x34] sm:$0xf]
        %v2770 = vld [vmem:[%s3 + $0x38] sm:$0xf]
        %v2771 = vld [vmem:[%s3 + $0x3c] sm:$0xf]
        %v2772 = vld [vmem:[%s3 + $0x40] sm:$0xf]
        %v2773 = vld [vmem:[%s3 + $0x44] sm:$0xf]
        %v2774 = vld [vmem:[%s3 + $0x48] sm:$0xf]
        %v2775 = vld [vmem:[%s3 + $0x4c] sm:$0xf]
        %v2776 = vld [vmem:[%s3 + $0x50] sm:$0xf]
        %v2777 = vld [vmem:[%s3 + $0x54] sm:$0xf]
        %v2778 = vld [vmem:[%s3 + $0x58] sm:$0xf]
        %v2779 = vld [vmem:[%s3 + $0x5c] sm:$0xf]
        %v2780 = vld [vmem:[%s3 + $0x60] sm:$0xf]
        %v2781 = vld [vmem:[%s3 + $0x64] sm:$0xf]
        %v2782 = vld [vmem:[%s3 + $0x68] sm:$0xf]
        %v2783 = vld [vmem:[%s3 + $0x6c] sm:$0xf]
        %v2784 = vld [vmem:[%s3 + $0x70] sm:$0xf]
        %v2785 = vld [vmem:[%s3 + $0x74] sm:$0xf]
        %v2786 = vld [vmem:[%s3 + $0x78] sm:$0xf]
        %v2787 = vld [vmem:[%s3 + $0x7c] sm:$0xf]
        %v2788 = vld [vmem:[%s3 + $0x80] sm:$0xf]
        %v2789 = vld [vmem:[%s3 + $0x84] sm:$0xf]
        %v2790 = vld [vmem:[%s3 + $0x88] sm:$0xf]
        %v2791 = vld [vmem:[%s3 + $0x8c] sm:$0xf]
        %v2792 = vld [vmem:[%s3 + $0x90] sm:$0xf]
        %v2793 = vld [vmem:[%s3 + $0x94] sm:$0xf]
        %v2794 = vld [vmem:[%s3 + $0x98] sm:$0xf]
        %v2795 = vld [vmem:[%s3 + $0x9c] sm:$0xf]
        %v2796 = vld [vmem:[%s3 + $0xa0] sm:$0xf]
        %v2797 = vld [vmem:[%s3 + $0xa4] sm:$0xf]
        %v2798 = vld [vmem:[%s3 + $0xa8] sm:$0xf]
        %v2799 = vld [vmem:[%s3 + $0xac] sm:$0xf]
        %v2800 = vld [vmem:[%s3 + $0xb0] sm:$0xf]
        %v2801 = vld [vmem:[%s3 + $0xb4] sm:$0xf]
        %v2802 = vld [vmem:[%s3 + $0xb8] sm:$0xf]
        %v2803 = vld [vmem:[%s3 + $0xbc] sm:$0xf]
        %v2804 = vld [vmem:[%s3 + $0xc0] sm:$0xf]
        %v2805 = vld [vmem:[%s3 + $0xc4] sm:$0xf]
        %v2806 = vld [vmem:[%s3 + $0xc8] sm:$0xf]
        %v2807 = vld [vmem:[%s3 + $0xcc] sm:$0xf]
        %v2808 = vld [vmem:[%s3 + $0xd0] sm:$0xf]
        %v2809 = vld [vmem:[%s3 + $0xd4] sm:$0xf]
        %v2810 = vld [vmem:[%s3 + $0xd8] sm:$0xf]
        %v2811 = vld [vmem:[%s3 + $0xdc] sm:$0xf]
        %v2812 = vld [vmem:[%s3 + $0xe0] sm:$0xf]
        %v2813 = vld [vmem:[%s3 + $0xe4] sm:$0xf]
        %v2814 = vld [vmem:[%s3 + $0xe8] sm:$0xf]
        %v2815 = vld [vmem:[%s3 + $0xec] sm:$0xf]
        %v2816 = vld [vmem:[%s3 + $0xf0] sm:$0xf]
        %v2817 = vld [vmem:[%s3 + $0xf4] sm:$0xf]
        %v2818 = vld [vmem:[%s3 + $0xf8] sm:$0xf]
        %v2819 = vld [vmem:[%s3 + $0xfc] sm:$0xf]
        %v2820 = vld [vmem:[%s3 + $0x100] sm:$0xf]
        %v2821 = vld [vmem:[%s3 + $0x104] sm:$0xf]
        %v2822 = vld [vmem:[%s3 + $0x108] sm:$0xf]
        %v2823 = vld [vmem:[%s3 + $0x10c] sm:$0xf]
        %v2824 = vld [vmem:[%s3 + $0x110] sm:$0xf]
        %v2825 = vld [vmem:[%s3 + $0x114] sm:$0xf]
        %v2826 = vld [vmem:[%s3 + $0x118] sm:$0xf]
        %v2827 = vld [vmem:[%s3 + $0x11c] sm:$0xf]
        %v2828 = vld [vmem:[%s3 + $0x120] sm:$0xf]
        %v2829 = vld [vmem:[%s3 + $0x124] sm:$0xf]
        %v2830 = vld [vmem:[%s3 + $0x128] sm:$0xf]
        %v2831 = vld [vmem:[%s3 + $0x12c] sm:$0xf]
        %v2832 = vld [vmem:[%s3 + $0x130] sm:$0xf]
        %v2833 = vld [vmem:[%s3 + $0x134] sm:$0xf]
        %v2834 = vld [vmem:[%s3 + $0x138] sm:$0xf]
        %v2835 = vld [vmem:[%s3 + $0x13c] sm:$0xf]
        %v2836 = vld [vmem:[%s3 + $0x140] sm:$0xf]
        %v2837 = vld [vmem:[%s3 + $0x144] sm:$0xf]
        %v2838 = vld [vmem:[%s3 + $0x148] sm:$0xf]
        %v2839 = vld [vmem:[%s3 + $0x14c] sm:$0xf]
        %v2840 = vld [vmem:[%s3 + $0x150] sm:$0xf]
        %v2841 = vld [vmem:[%s3 + $0x154] sm:$0xf]
        %v2842 = vld [vmem:[%s3 + $0x158] sm:$0xf]
        %v2843 = vld [vmem:[%s3 + $0x15c] sm:$0xf]
        %v2844 = vld [vmem:[%s3 + $0x160] sm:$0xf]
        %v2845 = vld [vmem:[%s3 + $0x164] sm:$0xf]
        %v2846 = vld [vmem:[%s3 + $0x168] sm:$0xf]
        %v2847 = vld [vmem:[%s3 + $0x16c] sm:$0xf]
        %v2848 = vld [vmem:[%s3 + $0x170] sm:$0xf]
        %v2849 = vld [vmem:[%s3 + $0x174] sm:$0xf]
        %v2850 = vld [vmem:[%s3 + $0x178] sm:$0xf]
        %v2851 = vld [vmem:[%s3 + $0x17c] sm:$0xf]
        %v2852 = vld [vmem:[%s3 + $0x180] sm:$0xf]
        %v2853 = vld [vmem:[%s3 + $0x184] sm:$0xf]
        %v2854 = vld [vmem:[%s3 + $0x188] sm:$0xf]
        %v2855 = vld [vmem:[%s3 + $0x18c] sm:$0xf]
        %v2856 = vld [vmem:[%s3 + $0x190] sm:$0xf]
        %v2857 = vld [vmem:[%s3 + $0x194] sm:$0xf]
        %v2858 = vld [vmem:[%s3 + $0x198] sm:$0xf]
        %v2859 = vld [vmem:[%s3 + $0x19c] sm:$0xf]
        %v2860 = vld [vmem:[%s3 + $0x1a0] sm:$0xf]
        %v2861 = vld [vmem:[%s3 + $0x1a4] sm:$0xf]
        %v2862 = vld [vmem:[%s3 + $0x1a8] sm:$0xf]
        %v2863 = vld [vmem:[%s3 + $0x1ac] sm:$0xf]
        %v2864 = vld [vmem:[%s3 + $0x1b0] sm:$0xf]
        %v2865 = vld [vmem:[%s3 + $0x1b4] sm:$0xf]
        %v2866 = vld [vmem:[%s3 + $0x1b8] sm:$0xf]
        %v2867 = vld [vmem:[%s3 + $0x1bc] sm:$0xf]
        %v2868 = vld [vmem:[%s3 + $0x1c0] sm:$0xf]
        %v2869 = vld [vmem:[%s3 + $0x1c4] sm:$0xf]
        %v2870 = vld [vmem:[%s3 + $0x1c8] sm:$0xf]
        %v2871 = vld [vmem:[%s3 + $0x1cc] sm:$0xf]
        %v2872 = vld [vmem:[%s3 + $0x1d0] sm:$0xf]
        %v2873 = vld [vmem:[%s3 + $0x1d4] sm:$0xf]
        %v2874 = vld [vmem:[%s3 + $0x1d8] sm:$0xf]
        %v2875 = vld [vmem:[%s3 + $0x1dc] sm:$0xf]
        %v2876 = vld [vmem:[%s3 + $0x1e0] sm:$0xf]
        %v2877 = vld [vmem:[%s3 + $0x1e4] sm:$0xf]
        %v2878 = vld [vmem:[%s3 + $0x1e8] sm:$0xf]
        %v2879 = vld [vmem:[%s3 + $0x1ec] sm:$0xf]
        %v2880 = vld [vmem:[%s3 + $0x1f0] sm:$0xf]
        %v2881 = vld [vmem:[%s3 + $0x1f4] sm:$0xf]
        %v2882 = vld [vmem:[%s3 + $0x1f8] sm:$0xf]
        %v2883 = vld [vmem:[%s3 + $0x1fc] sm:$0xf]
        %v2884 = vld [vmem:[%s3 + $0x200] sm:$0xf]
        %v2885 = vld [vmem:[%s3 + $0x204] sm:$0xf]
        %v2886 = vld [vmem:[%s3 + $0x208] sm:$0xf]
        %v2887 = vld [vmem:[%s3 + $0x20c] sm:$0xf]
        %v2888 = vld [vmem:[%s3 + $0x210] sm:$0xf]
        %v2889 = vld [vmem:[%s3 + $0x214] sm:$0xf]
        %v2890 = vld [vmem:[%s3 + $0x218] sm:$0xf]
        %v2891 = vld [vmem:[%s3 + $0x21c] sm:$0xf]
        %v2892 = vld [vmem:[%s3 + $0x220] sm:$0xf]
        %v2893 = vld [vmem:[%s3 + $0x224] sm:$0xf]
        %v2894 = vld [vmem:[%s3 + $0x228] sm:$0xf]
        %v2895 = vld [vmem:[%s3 + $0x22c] sm:$0xf]
        %v2896 = vld [vmem:[%s3 + $0x230] sm:$0xf]
        %v2897 = vld [vmem:[%s3 + $0x234] sm:$0xf]
        %v2898 = vld [vmem:[%s3 + $0x238] sm:$0xf]
        %v2899 = vld [vmem:[%s3 + $0x23c] sm:$0xf]
        %v2900 = vld [vmem:[%s608 + $0x1] sm:$0xff]
        %v2901 = vld [vmem:[%s608 + $0x9] sm:$0xff]
        %v2902 = vld [vmem:[%s608 + $0x19] sm:$0xff]
        %v2903 = vld [vmem:[%s608 + $0x21] sm:$0xff]
        %v2904 = vld [vmem:[%s608 + $0x31] sm:$0xff]
        %v2905 = vld [vmem:[%s608 + $0x39] sm:$0xff]
        %v2906 = vld [vmem:[%s608 + $0x49] sm:$0xff]
        %v2907 = vld [vmem:[%s608 + $0x51] sm:$0xff]
        %v2908 = vld [vmem:[%s608 + $0x61] sm:$0xff]
        %v2909 = vld [vmem:[%s608 + $0x69] sm:$0xff]
        %v2910 = vld [vmem:[%s608 + $0x79] sm:$0xff]
        %v2911 = vld [vmem:[%s608 + $0x81] sm:$0xff]
        %v2912 = vld [vmem:[%s608 + $0x91] sm:$0xff]
        %v2913 = vld [vmem:[%s608 + $0x99] sm:$0xff]
        %v2914 = vld [vmem:[%s608 + $0xa9] sm:$0xff]
        %v2915 = vld [vmem:[%s608 + $0xb1] sm:$0xff]
        %v2916 = vld [vmem:[%s608 + $0xc1] sm:$0xff]
        %v2917 = vld [vmem:[%s608 + $0xc9] sm:$0xff]
        %v2918 = vld [vmem:[%s608 + $0xd9] sm:$0xff]
        %v2919 = vld [vmem:[%s608 + $0xe1] sm:$0xff]
        %v2920 = vld [vmem:[%s608 + $0xf1] sm:$0xff]
        %v2921 = vld [vmem:[%s608 + $0xf9] sm:$0xff]
        %v2922 = vld [vmem:[%s608 + $0x109] sm:$0xff]
        %v2923 = vld [vmem:[%s608 + $0x111] sm:$0xff]
        %v2924 = vld [vmem:[%s608 + $0x121] sm:$0xff]
        %v2925 = vld [vmem:[%s608 + $0x129] sm:$0xff]
        %v2926 = vld [vmem:[%s608 + $0x139] sm:$0xff]
        %v2927 = vld [vmem:[%s608 + $0x141] sm:$0xff]
        %v2928 = vld [vmem:[%s608 + $0x151] sm:$0xff]
        %v2929 = vld [vmem:[%s608 + $0x159] sm:$0xff]
        %v2930 = vld [vmem:[%s608 + $0x169] sm:$0xff]
        %v2931 = vld [vmem:[%s608 + $0x171] sm:$0xff]
        %v2932 = vld [vmem:[%s4] sm:$0x1]
        %v2934 = vlaneseq
        %v2935 = vshrl.u32 %v2934, 7
        %v2936 = vsub.s32 0, %v2935
        %v2937 = vrot.slane %v2932, %v2936
        %v3083 = vunpack.c.l.b16 %v2756
        %v3084 = vunpack.c.l.b16 %v2757
        %v3085 = vunpack.c.l.b16 %v2758
        %v3086 = vunpack.c.l.b16 %v2759
        %v3087 = vunpack.c.l.b16 %v2760
        %v3088 = vunpack.c.l.b16 %v2761
        %v3089 = vunpack.c.l.b16 %v2762
        %v3090 = vunpack.c.l.b16 %v2763
        %v3091 = vunpack.c.l.b16 %v2764
        %v3092 = vunpack.c.l.b16 %v2765
        %v3093 = vunpack.c.l.b16 %v2766
        %v3094 = vunpack.c.l.b16 %v2767
        %v3095 = vunpack.c.l.b16 %v2768
        %v3096 = vunpack.c.l.b16 %v2769
        %v3097 = vunpack.c.l.b16 %v2770
        %v3098 = vunpack.c.l.b16 %v2771
        %v3099 = vunpack.c.l.b16 %v2772
        %v3100 = vunpack.c.l.b16 %v2773
        %v3101 = vunpack.c.l.b16 %v2774
        %v3102 = vunpack.c.l.b16 %v2775
        %v3103 = vunpack.c.l.b16 %v2776
        %v3104 = vunpack.c.l.b16 %v2777
        %v3105 = vunpack.c.l.b16 %v2778
        %v3106 = vunpack.c.l.b16 %v2779
        %v3107 = vunpack.c.l.b16 %v2780
        %v3108 = vunpack.c.l.b16 %v2781
        %v3109 = vunpack.c.l.b16 %v2782
        %v3110 = vunpack.c.l.b16 %v2783
        %v3111 = vunpack.c.l.b16 %v2784
        %v3112 = vunpack.c.l.b16 %v2785
        %v3113 = vunpack.c.l.b16 %v2786
        %v3114 = vunpack.c.l.b16 %v2787
        %v3115 = vunpack.c.l.b16 %v2788
        %v3116 = vunpack.c.l.b16 %v2789
        %v3117 = vunpack.c.l.b16 %v2790
        %v3118 = vunpack.c.l.b16 %v2791
        %v3119 = vunpack.c.l.b16 %v2792
        %v3120 = vunpack.c.l.b16 %v2793
        %v3121 = vunpack.c.l.b16 %v2794
        %v3122 = vunpack.c.l.b16 %v2795
        %v3123 = vunpack.c.l.b16 %v2796
        %v3124 = vunpack.c.l.b16 %v2797
        %v3125 = vunpack.c.l.b16 %v2798
        %v3126 = vunpack.c.l.b16 %v2799
        %v3127 = vunpack.c.l.b16 %v2800
        %v3128 = vunpack.c.l.b16 %v2801
        %v3129 = vunpack.c.l.b16 %v2802
        %v3130 = vunpack.c.l.b16 %v2803
        %v3131 = vunpack.c.l.b16 %v2804
        %v3132 = vunpack.c.l.b16 %v2805
        %v3133 = vunpack.c.l.b16 %v2806
        %v3134 = vunpack.c.l.b16 %v2807
        %v3135 = vunpack.c.l.b16 %v2808
        %v3136 = vunpack.c.l.b16 %v2809
        %v3137 = vunpack.c.l.b16 %v2810
        %v3138 = vunpack.c.l.b16 %v2811
        %v3139 = vunpack.c.l.b16 %v2812
        %v3140 = vunpack.c.l.b16 %v2813
        %v3141 = vunpack.c.l.b16 %v2814
        %v3142 = vunpack.c.l.b16 %v2815
        %v3143 = vunpack.c.l.b16 %v2816
        %v3144 = vunpack.c.l.b16 %v2817
        %v3145 = vunpack.c.l.b16 %v2818
        %v3146 = vunpack.c.l.b16 %v2819
        %v3147 = vunpack.c.l.b16 %v2820
        %v3148 = vunpack.c.l.b16 %v2821
        %v3149 = vunpack.c.l.b16 %v2822
        %v3150 = vunpack.c.l.b16 %v2823
        %v3151 = vunpack.c.l.b16 %v2824
        %v3152 = vunpack.c.l.b16 %v2825
        %v3153 = vunpack.c.l.b16 %v2826
        %v3154 = vunpack.c.l.b16 %v2827
        %v3155 = vunpack.c.l.b16 %v2828
        %v3156 = vunpack.c.l.b16 %v2829
        %v3157 = vunpack.c.l.b16 %v2830
        %v3158 = vunpack.c.l.b16 %v2831
        %v3159 = vunpack.c.l.b16 %v2832
        %v3160 = vunpack.c.l.b16 %v2833
        %v3161 = vunpack.c.l.b16 %v2834
        %v3162 = vunpack.c.l.b16 %v2835
        %v3163 = vunpack.c.l.b16 %v2836
        %v3164 = vunpack.c.l.b16 %v2837
        %v3165 = vunpack.c.l.b16 %v2838
        %v3166 = vunpack.c.l.b16 %v2839
        %v3167 = vunpack.c.l.b16 %v2840
        %v3168 = vunpack.c.l.b16 %v2841
        %v3169 = vunpack.c.l.b16 %v2842
        %v3170 = vunpack.c.l.b16 %v2843
        %v3171 = vunpack.c.l.b16 %v2844
        %v3172 = vunpack.c.l.b16 %v2845
        %v3173 = vunpack.c.l.b16 %v2846
        %v3174 = vunpack.c.l.b16 %v2847
        %v3175 = vunpack.c.l.b16 %v2848
        %v3176 = vunpack.c.l.b16 %v2849
        %v3177 = vunpack.c.l.b16 %v2850
        %v3178 = vunpack.c.l.b16 %v2851
        %v3179 = vunpack.c.l.b16 %v2852
        %v3180 = vunpack.c.l.b16 %v2853
        %v3181 = vunpack.c.l.b16 %v2854
        %v3182 = vunpack.c.l.b16 %v2855
        %v3183 = vunpack.c.l.b16 %v2856
        %v3184 = vunpack.c.l.b16 %v2857
        %v3185 = vunpack.c.l.b16 %v2858
        %v3186 = vunpack.c.l.b16 %v2859
        %v3187 = vunpack.c.l.b16 %v2860
        %v3188 = vunpack.c.l.b16 %v2861
        %v3189 = vunpack.c.l.b16 %v2862
        %v3190 = vunpack.c.l.b16 %v2863
        %v3191 = vunpack.c.l.b16 %v2864
        %v3192 = vunpack.c.l.b16 %v2865
        %v3193 = vunpack.c.l.b16 %v2866
        %v3194 = vunpack.c.l.b16 %v2867
        %v3195 = vunpack.c.l.b16 %v2868
        %v3196 = vunpack.c.l.b16 %v2869
        %v3197 = vunpack.c.l.b16 %v2870
        %v3198 = vunpack.c.l.b16 %v2871
        %v3199 = vunpack.c.l.b16 %v2872
        %v3200 = vunpack.c.l.b16 %v2873
        %v3201 = vunpack.c.l.b16 %v2874
        %v3202 = vunpack.c.l.b16 %v2875
        %v3203 = vunpack.c.l.b16 %v2876
        %v3204 = vunpack.c.l.b16 %v2877
        %v3205 = vunpack.c.l.b16 %v2878
        %v3206 = vunpack.c.l.b16 %v2879
        %v3207 = vunpack.c.l.b16 %v2880
        %v3208 = vunpack.c.l.b16 %v2881
        %v3209 = vunpack.c.l.b16 %v2882
        %v3210 = vunpack.c.l.b16 %v2883
        %v3211 = vunpack.c.l.b16 %v2884
        %v3212 = vunpack.c.l.b16 %v2885
        %v3213 = vunpack.c.l.b16 %v2886
        %v3214 = vunpack.c.l.b16 %v2887
        %v3215 = vunpack.c.l.b16 %v2888
        %v3216 = vunpack.c.l.b16 %v2889
        %v3217 = vunpack.c.l.b16 %v2890
        %v3218 = vunpack.c.l.b16 %v2891
        %v3219 = vunpack.c.l.b16 %v2892
        %v3220 = vunpack.c.l.b16 %v2893
        %v3221 = vunpack.c.l.b16 %v2894
        %v3222 = vunpack.c.l.b16 %v2895
        %v3223 = vunpack.c.l.b16 %v2896
        %v3224 = vunpack.c.l.b16 %v2897
        %v3225 = vunpack.c.l.b16 %v2898
        %v3226 = vunpack.c.l.b16 %v2899
        %v3227 = vpack.c.b16 %v3084, %v3083
        %v3228 = vpack.c.b16 %v3086, %v3085
        %v3229 = vpack.c.b16 %v3088, %v3087
        %v3230 = vpack.c.b16 %v3090, %v3089
        %v3231 = vpack.c.b16 %v3092, %v3091
        %v3232 = vpack.c.b16 %v3094, %v3093
        %v3233 = vpack.c.b16 %v3096, %v3095
        %v3234 = vpack.c.b16 %v3098, %v3097
        %v3235 = vpack.c.b16 %v3100, %v3099
        %v3236 = vpack.c.b16 %v3102, %v3101
        %v3237 = vpack.c.b16 %v3104, %v3103
        %v3238 = vpack.c.b16 %v3106, %v3105
        %v3239 = vpack.c.b16 %v3108, %v3107
        %v3240 = vpack.c.b16 %v3110, %v3109
        %v3241 = vpack.c.b16 %v3112, %v3111
        %v3242 = vpack.c.b16 %v3114, %v3113
        %v3243 = vpack.c.b16 %v3116, %v3115
        %v3244 = vpack.c.b16 %v3118, %v3117
        %v3245 = vpack.c.b16 %v3120, %v3119
        %v3246 = vpack.c.b16 %v3122, %v3121
        %v3247 = vpack.c.b16 %v3124, %v3123
        %v3248 = vpack.c.b16 %v3126, %v3125
        %v3249 = vpack.c.b16 %v3128, %v3127
        %v3250 = vpack.c.b16 %v3130, %v3129
        %v3251 = vpack.c.b16 %v3132, %v3131
        %v3252 = vpack.c.b16 %v3134, %v3133
        %v3253 = vpack.c.b16 %v3136, %v3135
        %v3254 = vpack.c.b16 %v3138, %v3137
        %v3255 = vpack.c.b16 %v3140, %v3139
        %v3256 = vpack.c.b16 %v3142, %v3141
        %v3257 = vpack.c.b16 %v3144, %v3143
        %v3258 = vpack.c.b16 %v3146, %v3145
        %v3259 = vpack.c.b16 %v3148, %v3147
        %v3260 = vpack.c.b16 %v3150, %v3149
        %v3261 = vpack.c.b16 %v3152, %v3151
        %v3262 = vpack.c.b16 %v3154, %v3153
        %v3263 = vpack.c.b16 %v3156, %v3155
        %v3264 = vpack.c.b16 %v3158, %v3157
        %v3265 = vpack.c.b16 %v3160, %v3159
        %v3266 = vpack.c.b16 %v3162, %v3161
        %v3267 = vpack.c.b16 %v3164, %v3163
        %v3268 = vpack.c.b16 %v3166, %v3165
        %v3269 = vpack.c.b16 %v3168, %v3167
        %v3270 = vpack.c.b16 %v3170, %v3169
        %v3271 = vpack.c.b16 %v3172, %v3171
        %v3272 = vpack.c.b16 %v3174, %v3173
        %v3273 = vpack.c.b16 %v3176, %v3175
        %v3274 = vpack.c.b16 %v3178, %v3177
        %v3275 = vpack.c.b16 %v3180, %v3179
        %v3276 = vpack.c.b16 %v3182, %v3181
        %v3277 = vpack.c.b16 %v3184, %v3183
        %v3278 = vpack.c.b16 %v3186, %v3185
        %v3279 = vpack.c.b16 %v3188, %v3187
        %v3280 = vpack.c.b16 %v3190, %v3189
        %v3281 = vpack.c.b16 %v3192, %v3191
        %v3282 = vpack.c.b16 %v3194, %v3193
        %v3283 = vpack.c.b16 %v3196, %v3195
        %v3284 = vpack.c.b16 %v3198, %v3197
        %v3285 = vpack.c.b16 %v3200, %v3199
        %v3286 = vpack.c.b16 %v3202, %v3201
        %v3287 = vpack.c.b16 %v3204, %v3203
        %v3288 = vpack.c.b16 %v3206, %v3205
        %v3289 = vpack.c.b16 %v3208, %v3207
        %v3290 = vpack.c.b16 %v3210, %v3209
        %v3291 = vpack.c.b16 %v3212, %v3211
        %v3292 = vpack.c.b16 %v3214, %v3213
        %v3293 = vpack.c.b16 %v3216, %v3215
        %v3294 = vpack.c.b16 %v3218, %v3217
        %v3295 = vpack.c.b16 %v3220, %v3219
        %v3296 = vpack.c.b16 %v3222, %v3221
        %v3297 = vpack.c.b16 %v3224, %v3223
        %v3298 = vpack.c.b16 %v3226, %v3225
        %3371 = vmatprep.subr.bf16.mxu0 0
        %3372 = vmatpush1.bf16.msra.mxu0 %v3227
        %3373 = vmatprep.subr.bf16.mxu0 0
        %3374 = vmatpush1.bf16.msra.mxu0 %v3228
        %3375 = vmatprep.subr.bf16.mxu0 0
        %3376 = vmatpush1.bf16.msra.mxu0 %v3229
        %3377 = vmatprep.subr.bf16.mxu0 0
        %3378 = vmatpush1.bf16.msra.mxu0 %v3230
        %3379 = vmatprep.subr.bf16.mxu0 0
        %3380 = vmatpush1.bf16.msra.mxu0 %v3231
        %3381 = vmatprep.subr.bf16.mxu0 0
        %3382 = vmatpush1.bf16.msra.mxu0 %v3232
        %3383 = vmatprep.subr.bf16.mxu0 0
        %3384 = vmatpush1.bf16.msra.mxu0 %v3233
        %3385 = vmatprep.subr.bf16.mxu0 0
        %3386 = vmatpush1.bf16.msra.mxu0 %v3234
        %3387 = vmatprep.subr.bf16.mxu0 0
        %3388 = vmatpush1.bf16.msra.mxu0 %v3235
        %3389 = vmatprep.subr.bf16.mxu0 0
        %3390 = vmatpush1.bf16.msra.mxu0 %v3236
        %3391 = vmatprep.subr.bf16.mxu0 0
        %3392 = vmatpush1.bf16.msra.mxu0 %v3237
        %3393 = vmatprep.subr.bf16.mxu0 0
        %3394 = vmatpush1.bf16.msra.mxu0 %v3238
        %3395 = vmatprep.subr.bf16.mxu0 0
        %3396 = vmatpush1.bf16.msra.mxu0 %v3239
        %3397 = vmatprep.subr.bf16.mxu0 0
        %3398 = vmatpush1.bf16.msra.mxu0 %v3240
        %3399 = vmatprep.subr.bf16.mxu0 0
        %3400 = vmatpush1.bf16.msra.mxu0 %v3241
        %3401 = vmatprep.subr.bf16.mxu0 0
        %3402 = vmatpush1.bf16.msra.mxu0 %v3242
        %3403 = vmatprep.mubr.bf16.mxu0 %v2402
        %3404 = vmatmul.mubr.bf16.gmra.mrb[0].mxu0 %v2354
        %v3405 = vpop.f32.mrb[0].mxu0
        %v3406 = vadd.f32 %v2937, %v3405
        %v3407 = vpop.f32.mrb[0].mxu0
        %v3408 = vpop.f32.mrb[0].mxu0
        %v3409 = vadd.f32 %v2937, %v3408
        %v3410 = vpop.f32.mrb[0].mxu0
        %3411 = vmatprep.mubr.bf16.mxu0 %v2403
        %3412 = vmatmul.mubr.bf16.gmra.mrb[0].mxu0 %v2355
        %v3413 = vpop.f32.mrb[0].mxu0
        %v3414 = vadd.f32 %v2937, %v3413
        %v3415 = vpop.f32.mrb[0].mxu0
        %v3416 = vpop.f32.mrb[0].mxu0
        %v3417 = vadd.f32 %v2937, %v3416
        %v3418 = vpop.f32.mrb[0].mxu0
        %3419 = vmatprep.mubr.bf16.mxu0 %v2404
        %3420 = vmatmul.mubr.bf16.gmra.mrb[0].mxu0 %v2356
        %v3421 = vpop.f32.mrb[0].mxu0
        %v3422 = vadd.f32 %v2937, %v3421
        %v3423 = vpop.f32.mrb[0].mxu0
        %v3424 = vpop.f32.mrb[0].mxu0
        %v3425 = vadd.f32 %v2937, %v3424
        %v3426 = vpop.f32.mrb[0].mxu0
        %3427 = vmatprep.mubr.bf16.mxu0 %v2405
        %3428 = vmatmul.mubr.bf16.gmra.mrb[0].mxu0 %v2357
        %v3429 = vpop.f32.mrb[0].mxu0
        %v3430 = vadd.f32 %v2937, %v3429
        %v3431 = vpop.f32.mrb[0].mxu0
        %v3432 = vpop.f32.mrb[0].mxu0
        %v3433 = vadd.f32 %v2937, %v3432
        %v3434 = vpop.f32.mrb[0].mxu0
        %3435 = vmatprep.mubr.bf16.mxu0 %v2406
        %3436 = vmatmul.mubr.bf16.gmra.mrb[0].mxu0 %v2358
        %v3437 = vpop.f32.mrb[0].mxu0
        %v3438 = vadd.f32 %v2937, %v3437
        %v3439 = vpop.f32.mrb[0].mxu0
        %v3440 = vpop.f32.mrb[0].mxu0
        %v3441 = vadd.f32 %v2937, %v3440
        %v3442 = vpop.f32.mrb[0].mxu0
        %3443 = vmatprep.mubr.bf16.mxu0 %v2407
        %3444 = vmatmul.mubr.bf16.gmra.mrb[0].mxu0 %v2359
        %v3445 = vpop.f32.mrb[0].mxu0
        %v3446 = vadd.f32 %v2937, %v3445
        %v3447 = vpop.f32.mrb[0].mxu0
        %v3448 = vpop.f32.mrb[0].mxu0
        %v3449 = vadd.f32 %v2937, %v3448
        %v3450 = vpop.f32.mrb[0].mxu0
        %3451 = vmatprep.mubr.bf16.mxu0 %v2408
        %3452 = vmatmul.mubr.bf16.gmra.mrb[0].mxu0 %v2360
        %v3453 = vpop.f32.mrb[0].mxu0
        %v3454 = vadd.f32 %v2937, %v3453
        %v3455 = vpop.f32.mrb[0].mxu0
        %v3456 = vpop.f32.mrb[0].mxu0
        %v3457 = vadd.f32 %v2937, %v3456
        %v3458 = vpop.f32.mrb[0].mxu0
        %3459 = vmatprep.mubr.bf16.mxu0 %v2409
        %3460 = vmatmul.mubr.bf16.gmra.mrb[0].mxu0 %v2361
        %v3461 = vpop.f32.mrb[0].mxu0
        %v3462 = vadd.f32 %v2937, %v3461
        %v3463 = vpop.f32.mrb[0].mxu0
        %v3464 = vpop.f32.mrb[0].mxu0
        %v3465 = vadd.f32 %v2937, %v3464
        %v3466 = vpop.f32.mrb[0].mxu0
        %3467 = vmatprep.mubr.bf16.mxu0 %v2410
        %3468 = vmatmul.mubr.bf16.gmra.mrb[0].mxu0 %v2362
        %v3469 = vpop.f32.mrb[0].mxu0
        %v3470 = vadd.f32 %v2937, %v3469
        %v3471 = vpop.f32.mrb[0].mxu0
        %v3472 = vpop.f32.mrb[0].mxu0
        %v3473 = vadd.f32 %v2937, %v3472
        %v3474 = vpop.f32.mrb[0].mxu0
        %3475 = vmatprep.mubr.bf16.mxu0 %v2411
        %3476 = vmatmul.mubr.bf16.gmra.mrb[0].mxu0 %v2363
        %v3477 = vpop.f32.mrb[0].mxu0
        %v3478 = vadd.f32 %v2937, %v3477
        %v3479 = vpop.f32.mrb[0].mxu0
        %v3480 = vpop.f32.mrb[0].mxu0
        %v3481 = vadd.f32 %v2937, %v3480
        %v3482 = vpop.f32.mrb[0].mxu0
        %3483 = vmatprep.mubr.bf16.mxu0 %v2412
        %3484 = vmatmul.mubr.bf16.gmra.mrb[0].mxu0 %v2364
        %v3485 = vpop.f32.mrb[0].mxu0
        %v3486 = vadd.f32 %v2937, %v3485
        %v3487 = vpop.f32.mrb[0].mxu0
        %v3488 = vpop.f32.mrb[0].mxu0
        %v3489 = vadd.f32 %v2937, %v3488
        %v3490 = vpop.f32.mrb[0].mxu0
        %3491 = vmatprep.mubr.bf16.mxu0 %v2413
        %3492 = vmatmul.mubr.bf16.gmra.mrb[0].mxu0 %v2365
        %v3493 = vpop.f32.mrb[0].mxu0
        %v3494 = vadd.f32 %v2937, %v3493
        %v3495 = vpop.f32.mrb[0].mxu0
        %v3496 = vpop.f32.mrb[0].mxu0
        %v3497 = vadd.f32 %v2937, %v3496
        %v3498 = vpop.f32.mrb[0].mxu0
        %3499 = vmatprep.mubr.bf16.mxu0 %v2414
        %3500 = vmatmul.mubr.bf16.gmra.mrb[0].mxu0 %v2366
        %v3501 = vpop.f32.mrb[0].mxu0
        %v3502 = vadd.f32 %v2937, %v3501
        %v3503 = vpop.f32.mrb[0].mxu0
        %v3504 = vpop.f32.mrb[0].mxu0
        %v3505 = vadd.f32 %v2937, %v3504
        %v3506 = vpop.f32.mrb[0].mxu0
        %3507 = vmatprep.mubr.bf16.mxu0 %v2415
        %3508 = vmatmul.mubr.bf16.gmra.mrb[0].mxu0 %v2367
        %v3509 = vpop.f32.mrb[0].mxu0
        %v3510 = vadd.f32 %v2937, %v3509
        %v3511 = vpop.f32.mrb[0].mxu0
        %v3512 = vpop.f32.mrb[0].mxu0
        %v3513 = vadd.f32 %v2937, %v3512
        %v3514 = vpop.f32.mrb[0].mxu0
        %3515 = vmatprep.mubr.bf16.mxu0 %v2416
        %3516 = vmatmul.mubr.bf16.gmra.mrb[0].mxu0 %v2368
        %v3517 = vpop.f32.mrb[0].mxu0
        %v3518 = vadd.f32 %v2937, %v3517
        %v3519 = vpop.f32.mrb[0].mxu0
        %v3520 = vpop.f32.mrb[0].mxu0
        %v3521 = vadd.f32 %v2937, %v3520
        %v3522 = vpop.f32.mrb[0].mxu0
        %3523 = vmatprep.mubr.bf16.mxu0 %v2417
        %3524 = vmatmul.mubr.bf16.gmra.mrb[0].mxu0 %v2369
        %v3525 = vpop.f32.mrb[0].mxu0
        %v3526 = vadd.f32 %v2937, %v3525
        %v3527 = vpop.f32.mrb[0].mxu0
        %v3528 = vpop.f32.mrb[0].mxu0
        %v3529 = vadd.f32 %v2937, %v3528
        %v3530 = vpop.f32.mrb[0].mxu0
        %3531 = vdwg.mxu0
        %3532 = vmatprep.subr.bf16.mxu0 0
        %3533 = vmatpush1.bf16.msra.mxu0 %v3243
        %3534 = vmatprep.subr.bf16.mxu0 0
        %3535 = vmatpush1.bf16.msra.mxu0 %v3244
        %3536 = vmatprep.subr.bf16.mxu0 0
        %3537 = vmatpush1.bf16.msra.mxu0 %v3245
        %3538 = vmatprep.subr.bf16.mxu0 0
        %3539 = vmatpush1.bf16.msra.mxu0 %v3246
        %3540 = vmatprep.subr.bf16.mxu0 0
        %3541 = vmatpush1.bf16.msra.mxu0 %v3247
        %3542 = vmatprep.subr.bf16.mxu0 0
        %3543 = vmatpush1.bf16.msra.mxu0 %v3248
        %3544 = vmatprep.subr.bf16.mxu0 0
        %3545 = vmatpush1.bf16.msra.mxu0 %v3249
        %3546 = vmatprep.subr.bf16.mxu0 0
        %3547 = vmatpush1.bf16.msra.mxu0 %v3250
        %3548 = vmatprep.subr.bf16.mxu0 0
        %3549 = vmatpush1.bf16.msra.mxu0 %v3251
        %3550 = vmatprep.subr.bf16.mxu0 0
        %3551 = vmatpush1.bf16.msra.mxu0 %v3252
        %3552 = vmatprep.subr.bf16.mxu0 0
        %3553 = vmatpush1.bf16.msra.mxu0 %v3253
        %3554 = vmatprep.subr.bf16.mxu0 0
        %3555 = vmatpush1.bf16.msra.mxu0 %v3254
        %3556 = vmatprep.subr.bf16.mxu0 0
        %3557 = vmatpush1.bf16.msra.mxu0 %v3255
        %3558 = vmatprep.subr.bf16.mxu0 0
        %3559 = vmatpush1.bf16.msra.mxu0 %v3256
        %3560 = vmatprep.subr.bf16.mxu0 0
        %3561 = vmatpush1.bf16.msra.mxu0 %v3257
        %3562 = vmatprep.subr.bf16.mxu0 0
        %3563 = vmatpush1.bf16.msra.mxu0 %v3258
        %3564 = vmatprep.mubr.bf16.mxu0 %v2499
        %3565 = vmatmul.mubr.bf16.gmra.mrb[0].mxu0 %v2450
        %v3566 = vpop.f32.mrb[0].mxu0
        %v3567 = vadd.f32 %v3406, %v3566
        %v3568 = vpop.f32.mrb[0].mxu0
        %v3569 = vpop.f32.mrb[0].mxu0
        %v3570 = vadd.f32 %v3409, %v3569
        %v3571 = vpop.f32.mrb[0].mxu0
        %3572 = vmatprep.mubr.bf16.mxu0 %v2500
        %3573 = vmatmul.mubr.bf16.gmra.mrb[0].mxu0 %v2451
        %v3574 = vpop.f32.mrb[0].mxu0
        %v3575 = vadd.f32 %v3414, %v3574
        %v3576 = vpop.f32.mrb[0].mxu0
        %v3577 = vpop.f32.mrb[0].mxu0
        %v3578 = vadd.f32 %v3417, %v3577
        %v3579 = vpop.f32.mrb[0].mxu0
        %3580 = vmatprep.mubr.bf16.mxu0 %v2501
        %3581 = vmatmul.mubr.bf16.gmra.mrb[0].mxu0 %v2452
        %v3582 = vpop.f32.mrb[0].mxu0
        %v3583 = vadd.f32 %v3422, %v3582
        %v3584 = vpop.f32.mrb[0].mxu0
        %v3585 = vpop.f32.mrb[0].mxu0
        %v3586 = vadd.f32 %v3425, %v3585
        %v3587 = vpop.f32.mrb[0].mxu0
        %3588 = vmatprep.mubr.bf16.mxu0 %v2502
        %3589 = vmatmul.mubr.bf16.gmra.mrb[0].mxu0 %v2453
        %v3590 = vpop.f32.mrb[0].mxu0
        %v3591 = vadd.f32 %v3430, %v3590
        %v3592 = vpop.f32.mrb[0].mxu0
        %v3593 = vpop.f32.mrb[0].mxu0
        %v3594 = vadd.f32 %v3433, %v3593
        %v3595 = vpop.f32.mrb[0].mxu0
        %3596 = vmatprep.mubr.bf16.mxu0 %v2503
        %3597 = vmatmul.mubr.bf16.gmra.mrb[0].mxu0 %v2454
        %v3598 = vpop.f32.mrb[0].mxu0
        %v3599 = vadd.f32 %v3438, %v3598
        %v3600 = vpop.f32.mrb[0].mxu0
        %v3601 = vpop.f32.mrb[0].mxu0
        %v3602 = vadd.f32 %v3441, %v3601
        %v3603 = vpop.f32.mrb[0].mxu0
        %3604 = vmatprep.mubr.bf16.mxu0 %v2504
        %3605 = vmatmul.mubr.bf16.gmra.mrb[0].mxu0 %v2455
        %v3606 = vpop.f32.mrb[0].mxu0
        %v3607 = vadd.f32 %v3446, %v3606
        %v3608 = vpop.f32.mrb[0].mxu0
        %v3609 = vpop.f32.mrb[0].mxu0
        %v3610 = vadd.f32 %v3449, %v3609
        %v3611 = vpop.f32.mrb[0].mxu0
        %3612 = vmatprep.mubr.bf16.mxu0 %v2505
        %3613 = vmatmul.mubr.bf16.gmra.mrb[0].mxu0 %v2456
        %v3614 = vpop.f32.mrb[0].mxu0
        %v3615 = vadd.f32 %v3454, %v3614
        %v3616 = vpop.f32.mrb[0].mxu0
        %v3617 = vpop.f32.mrb[0].mxu0
        %v3618 = vadd.f32 %v3457, %v3617
        %v3619 = vpop.f32.mrb[0].mxu0
        %3620 = vmatprep.mubr.bf16.mxu0 %v2506
        %3621 = vmatmul.mubr.bf16.gmra.mrb[0].mxu0 %v2457
        %v3622 = vpop.f32.mrb[0].mxu0
        %v3623 = vadd.f32 %v3462, %v3622
        %v3624 = vpop.f32.mrb[0].mxu0
        %v3625 = vpop.f32.mrb[0].mxu0
        %v3626 = vadd.f32 %v3465, %v3625
        %v3627 = vpop.f32.mrb[0].mxu0
        %3628 = vmatprep.mubr.bf16.mxu0 %v2507
        %3629 = vmatmul.mubr.bf16.gmra.mrb[0].mxu0 %v2458
        %v3630 = vpop.f32.mrb[0].mxu0
        %v3631 = vadd.f32 %v3470, %v3630
        %v3632 = vpop.f32.mrb[0].mxu0
        %v3633 = vpop.f32.mrb[0].mxu0
        %v3634 = vadd.f32 %v3473, %v3633
        %v3635 = vpop.f32.mrb[0].mxu0
        %3636 = vmatprep.mubr.bf16.mxu0 %v2508
        %3637 = vmatmul.mubr.bf16.gmra.mrb[0].mxu0 %v2459
        %v3638 = vpop.f32.mrb[0].mxu0
        %v3639 = vadd.f32 %v3478, %v3638
        %v3640 = vpop.f32.mrb[0].mxu0
        %v3641 = vpop.f32.mrb[0].mxu0
        %v3642 = vadd.f32 %v3481, %v3641
        %v3643 = vpop.f32.mrb[0].mxu0
        %3644 = vmatprep.mubr.bf16.mxu0 %v2509
        %3645 = vmatmul.mubr.bf16.gmra.mrb[0].mxu0 %v2460
        %v3646 = vpop.f32.mrb[0].mxu0
        %v3647 = vadd.f32 %v3486, %v3646
        %v3648 = vpop.f32.mrb[0].mxu0
        %v3649 = vpop.f32.mrb[0].mxu0
        %v3650 = vadd.f32 %v3489, %v3649
        %v3651 = vpop.f32.mrb[0].mxu0
        %3652 = vmatprep.mubr.bf16.mxu0 %v2510
        %3653 = vmatmul.mubr.bf16.gmra.mrb[0].mxu0 %v2461
        %v3654 = vpop.f32.mrb[0].mxu0
        %v3655 = vadd.f32 %v3494, %v3654
        %v3656 = vpop.f32.mrb[0].mxu0
        %v3657 = vpop.f32.mrb[0].mxu0
        %v3658 = vadd.f32 %v3497, %v3657
        %v3659 = vpop.f32.mrb[0].mxu0
        %3660 = vmatprep.mubr.bf16.mxu0 %v2511
        %3661 = vmatmul.mubr.bf16.gmra.mrb[0].mxu0 %v2462
        %v3662 = vpop.f32.mrb[0].mxu0
        %v3663 = vadd.f32 %v3502, %v3662
        %v3664 = vpop.f32.mrb[0].mxu0
        %v3665 = vpop.f32.mrb[0].mxu0
        %v3666 = vadd.f32 %v3505, %v3665
        %v3667 = vpop.f32.mrb[0].mxu0
        %3668 = vmatprep.mubr.bf16.mxu0 %v2512
        %3669 = vmatmul.mubr.bf16.gmra.mrb[0].mxu0 %v2463
        %v3670 = vpop.f32.mrb[0].mxu0
        %v3671 = vadd.f32 %v3510, %v3670
        %v3672 = vpop.f32.mrb[0].mxu0
        %v3673 = vpop.f32.mrb[0].mxu0
        %v3674 = vadd.f32 %v3513, %v3673
        %v3675 = vpop.f32.mrb[0].mxu0
        %3676 = vmatprep.mubr.bf16.mxu0 %v2513
        %3677 = vmatmul.mubr.bf16.gmra.mrb[0].mxu0 %v2464
        %v3678 = vpop.f32.mrb[0].mxu0
        %v3679 = vadd.f32 %v3518, %v3678
        %v3680 = vpop.f32.mrb[0].mxu0
        %v3681 = vpop.f32.mrb[0].mxu0
        %v3682 = vadd.f32 %v3521, %v3681
        %v3683 = vpop.f32.mrb[0].mxu0
        %3684 = vmatprep.mubr.bf16.mxu0 %v2514
        %3685 = vmatmul.mubr.bf16.gmra.mrb[0].mxu0 %v2465
        %v3686 = vpop.f32.mrb[0].mxu0
        %v3687 = vadd.f32 %v3526, %v3686
        %v3688 = vpop.f32.mrb[0].mxu0
        %v3689 = vpop.f32.mrb[0].mxu0
        %v3690 = vadd.f32 %v3529, %v3689
        %v3691 = vpop.f32.mrb[0].mxu0
        %3692 = vdwg.mxu0
        %3693 = vmatprep.subr.bf16.mxu0 0
        %3694 = vmatpush1.bf16.msra.mxu0 %v3259
        %3695 = vmatprep.subr.bf16.mxu0 0
        %3696 = vmatpush1.bf16.msra.mxu0 %v3260
        %3697 = vmatprep.subr.bf16.mxu0 0
        %3698 = vmatpush1.bf16.msra.mxu0 %v3261
        %3699 = vmatprep.subr.bf16.mxu0 0
        %3700 = vmatpush1.bf16.msra.mxu0 %v3262
        %3701 = vmatprep.subr.bf16.mxu0 0
        %3702 = vmatpush1.bf16.msra.mxu0 %v3263
        %3703 = vmatprep.subr.bf16.mxu0 0
        %3704 = vmatpush1.bf16.msra.mxu0 %v3264
        %3705 = vmatprep.subr.bf16.mxu0 0
        %3706 = vmatpush1.bf16.msra.mxu0 %v3265
        %3707 = vmatprep.subr.bf16.mxu0 0
        %3708 = vmatpush1.bf16.msra.mxu0 %v3266
        %3709 = vmatprep.subr.bf16.mxu0 0
        %3710 = vmatpush1.bf16.msra.mxu0 %v3267
        %3711 = vmatprep.subr.bf16.mxu0 0
        %3712 = vmatpush1.bf16.msra.mxu0 %v3268
        %3713 = vmatprep.subr.bf16.mxu0 0
        %3714 = vmatpush1.bf16.msra.mxu0 %v3269
        %3715 = vmatprep.subr.bf16.mxu0 0
        %3716 = vmatpush1.bf16.msra.mxu0 %v3270
        %3717 = vmatprep.subr.bf16.mxu0 0
        %3718 = vmatpush1.bf16.msra.mxu0 %v3271
        %3719 = vmatprep.subr.bf16.mxu0 0
        %3720 = vmatpush1.bf16.msra.mxu0 %v3272
        %3721 = vmatprep.subr.bf16.mxu0 0
        %3722 = vmatpush1.bf16.msra.mxu0 %v3273
        %3723 = vmatprep.subr.bf16.mxu0 0
        %3724 = vmatpush1.bf16.msra.mxu0 %v3274
        %3725 = vmatprep.mubr.bf16.mxu0 %v2595
        %3726 = vmatmul.mubr.bf16.gmra.mrb[0].mxu0 %v2547
        %v3727 = vpop.f32.mrb[0].mxu0
        %v3728 = vadd.f32 %v3567, %v3727
        %v3729 = vpop.f32.mrb[0].mxu0
        %v3730 = vpop.f32.mrb[0].mxu0
        %v3731 = vadd.f32 %v3570, %v3730
        %v3732 = vpop.f32.mrb[0].mxu0
        %3733 = vmatprep.mubr.bf16.mxu0 %v2596
        %3734 = vmatmul.mubr.bf16.gmra.mrb[0].mxu0 %v2548
        %v3735 = vpop.f32.mrb[0].mxu0
        %v3736 = vadd.f32 %v3575, %v3735
        %v3737 = vpop.f32.mrb[0].mxu0
        %v3738 = vpop.f32.mrb[0].mxu0
        %v3739 = vadd.f32 %v3578, %v3738
        %v3740 = vpop.f32.mrb[0].mxu0
        %3741 = vmatprep.mubr.bf16.mxu0 %v2597
        %3742 = vmatmul.mubr.bf16.gmra.mrb[0].mxu0 %v2549
        %v3743 = vpop.f32.mrb[0].mxu0
        %v3744 = vadd.f32 %v3583, %v3743
        %v3745 = vpop.f32.mrb[0].mxu0
        %v3746 = vpop.f32.mrb[0].mxu0
        %v3747 = vadd.f32 %v3586, %v3746
        %v3748 = vpop.f32.mrb[0].mxu0
        %3749 = vmatprep.mubr.bf16.mxu0 %v2598
        %3750 = vmatmul.mubr.bf16.gmra.mrb[0].mxu0 %v2550
        %v3751 = vpop.f32.mrb[0].mxu0
        %v3752 = vadd.f32 %v3591, %v3751
        %v3753 = vpop.f32.mrb[0].mxu0
        %v3754 = vpop.f32.mrb[0].mxu0
        %v3755 = vadd.f32 %v3594, %v3754
        %v3756 = vpop.f32.mrb[0].mxu0
        %3757 = vmatprep.mubr.bf16.mxu0 %v2599
        %3758 = vmatmul.mubr.bf16.gmra.mrb[0].mxu0 %v2551
        %v3759 = vpop.f32.mrb[0].mxu0
        %v3760 = vadd.f32 %v3599, %v3759
        %v3761 = vpop.f32.mrb[0].mxu0
        %v3762 = vpop.f32.mrb[0].mxu0
        %v3763 = vadd.f32 %v3602, %v3762
        %v3764 = vpop.f32.mrb[0].mxu0
        %3765 = vmatprep.mubr.bf16.mxu0 %v2600
        %3766 = vmatmul.mubr.bf16.gmra.mrb[0].mxu0 %v2552
        %v3767 = vpop.f32.mrb[0].mxu0
        %v3768 = vadd.f32 %v3607, %v3767
        %v3769 = vpop.f32.mrb[0].mxu0
        %v3770 = vpop.f32.mrb[0].mxu0
        %v3771 = vadd.f32 %v3610, %v3770
        %v3772 = vpop.f32.mrb[0].mxu0
        %3773 = vmatprep.mubr.bf16.mxu0 %v2601
        %3774 = vmatmul.mubr.bf16.gmra.mrb[0].mxu0 %v2553
        %v3775 = vpop.f32.mrb[0].mxu0
        %v3776 = vadd.f32 %v3615, %v3775
        %v3777 = vpop.f32.mrb[0].mxu0
        %v3778 = vpop.f32.mrb[0].mxu0
        %v3779 = vadd.f32 %v3618, %v3778
        %v3780 = vpop.f32.mrb[0].mxu0
        %3781 = vmatprep.mubr.bf16.mxu0 %v2602
        %3782 = vmatmul.mubr.bf16.gmra.mrb[0].mxu0 %v2554
        %v3783 = vpop.f32.mrb[0].mxu0
        %v3784 = vadd.f32 %v3623, %v3783
        %v3785 = vpop.f32.mrb[0].mxu0
        %v3786 = vpop.f32.mrb[0].mxu0
        %v3787 = vadd.f32 %v3626, %v3786
        %v3788 = vpop.f32.mrb[0].mxu0
        %3789 = vmatprep.mubr.bf16.mxu0 %v2603
        %3790 = vmatmul.mubr.bf16.gmra.mrb[0].mxu0 %v2555
        %v3791 = vpop.f32.mrb[0].mxu0
        %v3792 = vadd.f32 %v3631, %v3791
        %v3793 = vpop.f32.mrb[0].mxu0
        %v3794 = vpop.f32.mrb[0].mxu0
        %v3795 = vadd.f32 %v3634, %v3794
        %v3796 = vpop.f32.mrb[0].mxu0
        %3797 = vmatprep.mubr.bf16.mxu0 %v2604
        %3798 = vmatmul.mubr.bf16.gmra.mrb[0].mxu0 %v2556
        %v3799 = vpop.f32.mrb[0].mxu0
        %v3800 = vadd.f32 %v3639, %v3799
        %v3801 = vpop.f32.mrb[0].mxu0
        %v3802 = vpop.f32.mrb[0].mxu0
        %v3803 = vadd.f32 %v3642, %v3802
        %v3804 = vpop.f32.mrb[0].mxu0
        %3805 = vmatprep.mubr.bf16.mxu0 %v2605
        %3806 = vmatmul.mubr.bf16.gmra.mrb[0].mxu0 %v2557
        %v3807 = vpop.f32.mrb[0].mxu0
        %v3808 = vadd.f32 %v3647, %v3807
        %v3809 = vpop.f32.mrb[0].mxu0
        %v3810 = vpop.f32.mrb[0].mxu0
        %v3811 = vadd.f32 %v3650, %v3810
        %v3812 = vpop.f32.mrb[0].mxu0
        %3813 = vmatprep.mubr.bf16.mxu0 %v2606
        %3814 = vmatmul.mubr.bf16.gmra.mrb[0].mxu0 %v2558
        %v3815 = vpop.f32.mrb[0].mxu0
        %v3816 = vadd.f32 %v3655, %v3815
        %v3817 = vpop.f32.mrb[0].mxu0
        %v3818 = vpop.f32.mrb[0].mxu0
        %v3819 = vadd.f32 %v3658, %v3818
        %v3820 = vpop.f32.mrb[0].mxu0
        %3821 = vmatprep.mubr.bf16.mxu0 %v2607
        %3822 = vmatmul.mubr.bf16.gmra.mrb[0].mxu0 %v2559
        %v3823 = vpop.f32.mrb[0].mxu0
        %v3824 = vadd.f32 %v3663, %v3823
        %v3825 = vpop.f32.mrb[0].mxu0
        %v3826 = vpop.f32.mrb[0].mxu0
        %v3827 = vadd.f32 %v3666, %v3826
        %v3828 = vpop.f32.mrb[0].mxu0
        %3829 = vmatprep.mubr.bf16.mxu0 %v2608
        %3830 = vmatmul.mubr.bf16.gmra.mrb[0].mxu0 %v2560
        %v3831 = vpop.f32.mrb[0].mxu0
        %v3832 = vadd.f32 %v3671, %v3831
        %v3833 = vpop.f32.mrb[0].mxu0
        %v3834 = vpop.f32.mrb[0].mxu0
        %v3835 = vadd.f32 %v3674, %v3834
        %v3836 = vpop.f32.mrb[0].mxu0
        %3837 = vmatprep.mubr.bf16.mxu0 %v2609
        %3838 = vmatmul.mubr.bf16.gmra.mrb[0].mxu0 %v2561
        %v3839 = vpop.f32.mrb[0].mxu0
        %v3840 = vadd.f32 %v3679, %v3839
        %v3841 = vpop.f32.mrb[0].mxu0
        %v3842 = vpop.f32.mrb[0].mxu0
        %v3843 = vadd.f32 %v3682, %v3842
        %v3844 = vpop.f32.mrb[0].mxu0
        %3845 = vmatprep.mubr.bf16.mxu0 %v2610
        %3846 = vmatmul.mubr.bf16.gmra.mrb[0].mxu0 %v2562
        %v3847 = vpop.f32.mrb[0].mxu0
        %v3848 = vadd.f32 %v3687, %v3847
        %v3849 = vpop.f32.mrb[0].mxu0
        %v3850 = vpop.f32.mrb[0].mxu0
        %v3851 = vadd.f32 %v3690, %v3850
        %v3852 = vpop.f32.mrb[0].mxu0
        %3853 = vdwg.mxu0
        %3854 = vmatprep.subr.bf16.mxu0 0
        %3855 = vmatpush1.bf16.msra.mxu0 %v3275
        %3856 = vmatprep.subr.bf16.mxu0 0
        %3857 = vmatpush1.bf16.msra.mxu0 %v3276
        %3858 = vmatprep.subr.bf16.mxu0 0
        %3859 = vmatpush1.bf16.msra.mxu0 %v3277
        %3860 = vmatprep.subr.bf16.mxu0 0
        %3861 = vmatpush1.bf16.msra.mxu0 %v3278
        %3862 = vmatprep.subr.bf16.mxu0 0
        %3863 = vmatpush1.bf16.msra.mxu0 %v3279
        %3864 = vmatprep.subr.bf16.mxu0 0
        %3865 = vmatpush1.bf16.msra.mxu0 %v3280
        %3866 = vmatprep.subr.bf16.mxu0 0
        %3867 = vmatpush1.bf16.msra.mxu0 %v3281
        %3868 = vmatprep.subr.bf16.mxu0 0
        %3869 = vmatpush1.bf16.msra.mxu0 %v3282
        %3870 = vmatprep.subr.bf16.mxu0 0
        %3871 = vmatpush1.bf16.msra.mxu0 %v3283
        %3872 = vmatprep.subr.bf16.mxu0 0
        %3873 = vmatpush1.bf16.msra.mxu0 %v3284
        %3874 = vmatprep.subr.bf16.mxu0 0
        %3875 = vmatpush1.bf16.msra.mxu0 %v3285
        %3876 = vmatprep.subr.bf16.mxu0 0
        %3877 = vmatpush1.bf16.msra.mxu0 %v3286
        %3878 = vmatprep.subr.bf16.mxu0 0
        %3879 = vmatpush1.bf16.msra.mxu0 %v3287
        %3880 = vmatprep.subr.bf16.mxu0 0
        %3881 = vmatpush1.bf16.msra.mxu0 %v3288
        %3882 = vmatprep.subr.bf16.mxu0 0
        %3883 = vmatpush1.bf16.msra.mxu0 %v3289
        %3884 = vmatprep.subr.bf16.mxu0 0
        %3885 = vmatpush1.bf16.msra.mxu0 %v3290
        %3886 = vmatprep.mubr.bf16.mxu0 %v2692
        %3887 = vmatmul.mubr.bf16.gmra.mrb[0].mxu0 %v2644
        %v3888 = vpop.f32.mrb[0].mxu0
        %v3889 = vadd.f32 %v3728, %v3888
        %v3890 = vpop.f32.mrb[0].mxu0
        %v3891 = vpop.f32.mrb[0].mxu0
        %v3892 = vadd.f32 %v3731, %v3891
        %v3893 = vpop.f32.mrb[0].mxu0
        %3894 = vmatprep.mubr.bf16.mxu0 %v2693
        %3895 = vmatmul.mubr.bf16.gmra.mrb[0].mxu0 %v2645
        %v3896 = vpop.f32.mrb[0].mxu0
        %v3897 = vadd.f32 %v3736, %v3896
        %v3898 = vpop.f32.mrb[0].mxu0
        %v3899 = vpop.f32.mrb[0].mxu0
        %v3900 = vadd.f32 %v3739, %v3899
        %v3901 = vpop.f32.mrb[0].mxu0
        %3902 = vmatprep.mubr.bf16.mxu0 %v2694
        %3903 = vmatmul.mubr.bf16.gmra.mrb[0].mxu0 %v2646
        %v3904 = vpop.f32.mrb[0].mxu0
        %v3905 = vadd.f32 %v3744, %v3904
        %v3906 = vpop.f32.mrb[0].mxu0
        %v3907 = vpop.f32.mrb[0].mxu0
        %v3908 = vadd.f32 %v3747, %v3907
        %v3909 = vpop.f32.mrb[0].mxu0
        %3910 = vmatprep.mubr.bf16.mxu0 %v2695
        %3911 = vmatmul.mubr.bf16.gmra.mrb[0].mxu0 %v2647
        %v3912 = vpop.f32.mrb[0].mxu0
        %v3913 = vadd.f32 %v3752, %v3912
        %v3914 = vpop.f32.mrb[0].mxu0
        %v3915 = vpop.f32.mrb[0].mxu0
        %v3916 = vadd.f32 %v3755, %v3915
        %v3917 = vpop.f32.mrb[0].mxu0
        %3918 = vmatprep.mubr.bf16.mxu0 %v2696
        %3919 = vmatmul.mubr.bf16.gmra.mrb[0].mxu0 %v2648
        %v3920 = vpop.f32.mrb[0].mxu0
        %v3921 = vadd.f32 %v3760, %v3920
        %v3922 = vpop.f32.mrb[0].mxu0
        %v3923 = vpop.f32.mrb[0].mxu0
        %v3924 = vadd.f32 %v3763, %v3923
        %v3925 = vpop.f32.mrb[0].mxu0
        %3926 = vmatprep.mubr.bf16.mxu0 %v2697
        %3927 = vmatmul.mubr.bf16.gmra.mrb[0].mxu0 %v2649
        %v3928 = vpop.f32.mrb[0].mxu0
        %v3929 = vadd.f32 %v3768, %v3928
        %v3930 = vpop.f32.mrb[0].mxu0
        %v3931 = vpop.f32.mrb[0].mxu0
        %v3932 = vadd.f32 %v3771, %v3931
        %v3933 = vpop.f32.mrb[0].mxu0
        %3934 = vmatprep.mubr.bf16.mxu0 %v2698
        %3935 = vmatmul.mubr.bf16.gmra.mrb[0].mxu0 %v2650
        %v3936 = vpop.f32.mrb[0].mxu0
        %v3937 = vadd.f32 %v3776, %v3936
        %v3938 = vpop.f32.mrb[0].mxu0
        %v3939 = vpop.f32.mrb[0].mxu0
        %v3940 = vadd.f32 %v3779, %v3939
        %v3941 = vpop.f32.mrb[0].mxu0
        %3942 = vmatprep.mubr.bf16.mxu0 %v2699
        %3943 = vmatmul.mubr.bf16.gmra.mrb[0].mxu0 %v2651
        %v3944 = vpop.f32.mrb[0].mxu0
        %v3945 = vadd.f32 %v3784, %v3944
        %v3946 = vpop.f32.mrb[0].mxu0
        %v3947 = vpop.f32.mrb[0].mxu0
        %v3948 = vadd.f32 %v3787, %v3947
        %v3949 = vpop.f32.mrb[0].mxu0
        %3950 = vmatprep.mubr.bf16.mxu0 %v2700
        %3951 = vmatmul.mubr.bf16.gmra.mrb[0].mxu0 %v2652
        %v3952 = vpop.f32.mrb[0].mxu0
        %v3953 = vadd.f32 %v3792, %v3952
        %v3954 = vpop.f32.mrb[0].mxu0
        %v3955 = vpop.f32.mrb[0].mxu0
        %v3956 = vadd.f32 %v3795, %v3955
        %v3957 = vpop.f32.mrb[0].mxu0
        %3958 = vmatprep.mubr.bf16.mxu0 %v2701
        %3959 = vmatmul.mubr.bf16.gmra.mrb[0].mxu0 %v2653
        %v3960 = vpop.f32.mrb[0].mxu0
        %v3961 = vadd.f32 %v3800, %v3960
        %v3962 = vpop.f32.mrb[0].mxu0
        %v3963 = vpop.f32.mrb[0].mxu0
        %v3964 = vadd.f32 %v3803, %v3963
        %v3965 = vpop.f32.mrb[0].mxu0
        %3966 = vmatprep.mubr.bf16.mxu0 %v2702
        %3967 = vmatmul.mubr.bf16.gmra.mrb[0].mxu0 %v2654
        %v3968 = vpop.f32.mrb[0].mxu0
        %v3969 = vadd.f32 %v3808, %v3968
        %v3970 = vpop.f32.mrb[0].mxu0
        %v3971 = vpop.f32.mrb[0].mxu0
        %v3972 = vadd.f32 %v3811, %v3971
        %v3973 = vpop.f32.mrb[0].mxu0
        %3974 = vmatprep.mubr.bf16.mxu0 %v2703
        %3975 = vmatmul.mubr.bf16.gmra.mrb[0].mxu0 %v2655
        %v3976 = vpop.f32.mrb[0].mxu0
        %v3977 = vadd.f32 %v3816, %v3976
        %v3978 = vpop.f32.mrb[0].mxu0
        %v3979 = vpop.f32.mrb[0].mxu0
        %v3980 = vadd.f32 %v3819, %v3979
        %v3981 = vpop.f32.mrb[0].mxu0
        %3982 = vmatprep.mubr.bf16.mxu0 %v2704
        %3983 = vmatmul.mubr.bf16.gmra.mrb[0].mxu0 %v2656
        %v3984 = vpop.f32.mrb[0].mxu0
        %v3985 = vadd.f32 %v3824, %v3984
        %v3986 = vpop.f32.mrb[0].mxu0
        %v3987 = vpop.f32.mrb[0].mxu0
        %v3988 = vadd.f32 %v3827, %v3987
        %v3989 = vpop.f32.mrb[0].mxu0
        %3990 = vmatprep.mubr.bf16.mxu0 %v2705
        %3991 = vmatmul.mubr.bf16.gmra.mrb[0].mxu0 %v2657
        %v3992 = vpop.f32.mrb[0].mxu0
        %v3993 = vadd.f32 %v3832, %v3992
        %v3994 = vpop.f32.mrb[0].mxu0
        %v3995 = vpop.f32.mrb[0].mxu0
        %v3996 = vadd.f32 %v3835, %v3995
        %v3997 = vpop.f32.mrb[0].mxu0
        %3998 = vmatprep.mubr.bf16.mxu0 %v2706
        %3999 = vmatmul.mubr.bf16.gmra.mrb[0].mxu0 %v2658
        %v4000 = vpop.f32.mrb[0].mxu0
        %v4001 = vadd.f32 %v3840, %v4000
        %v4002 = vpop.f32.mrb[0].mxu0
        %v4003 = vpop.f32.mrb[0].mxu0
        %v4004 = vadd.f32 %v3843, %v4003
        %v4005 = vpop.f32.mrb[0].mxu0
        %4006 = vmatprep.mubr.bf16.mxu0 %v2707
        %4007 = vmatmul.mubr.bf16.gmra.mrb[0].mxu0 %v2659
        %v4008 = vpop.f32.mrb[0].mxu0
        %v4009 = vadd.f32 %v3848, %v4008
        %v4010 = vpop.f32.mrb[0].mxu0
        %v4011 = vpop.f32.mrb[0].mxu0
        %v4012 = vadd.f32 %v3851, %v4011
        %v4013 = vpop.f32.mrb[0].mxu0
        %4014 = vdwg.mxu0
        %4015 = vmatprep.subr.bf16.mxu0 0
        %4016 = vmatpush1.bf16.msra.mxu0 %v3291
        %4017 = vmatprep.subr.bf16.mxu0 0
        %4018 = vmatpush1.bf16.msra.mxu0 %v3292
        %4019 = vmatprep.subr.bf16.mxu0 0
        %4020 = vmatpush1.bf16.msra.mxu0 %v3293
        %4021 = vmatprep.subr.bf16.mxu0 0
        %4022 = vmatpush1.bf16.msra.mxu0 %v3294
        %4023 = vmatprep.subr.bf16.mxu0 0
        %4024 = vmatpush1.bf16.msra.mxu0 %v3295
        %4025 = vmatprep.subr.bf16.mxu0 0
        %4026 = vmatpush1.bf16.msra.mxu0 %v3296
        %4027 = vmatprep.subr.bf16.mxu0 0
        %4028 = vmatpush1.bf16.msra.mxu0 %v3297
        %4029 = vmatprep.subr.bf16.mxu0 0
        %4030 = vmatpush1.bf16.msra.mxu0 %v3298
        %4031 = vmatprep.subr.bf16.mxu0 0
        %4032 = vmatpush1.bf16.msra.mxu0 0
        %4033 = vmatprep.subr.bf16.mxu0 0
        %4034 = vmatpush1.bf16.msra.mxu0 0
        %4035 = vmatprep.subr.bf16.mxu0 0
        %4036 = vmatpush1.bf16.msra.mxu0 0
        %4037 = vmatprep.subr.bf16.mxu0 0
        %4038 = vmatpush1.bf16.msra.mxu0 0
        %4039 = vmatprep.subr.bf16.mxu0 0
        %4040 = vmatpush1.bf16.msra.mxu0 0
        %4041 = vmatprep.subr.bf16.mxu0 0
        %4042 = vmatpush1.bf16.msra.mxu0 0
        %4043 = vmatprep.subr.bf16.mxu0 0
        %4044 = vmatpush1.bf16.msra.mxu0 0
        %4045 = vmatprep.subr.bf16.mxu0 0
        %4046 = vmatpush1.bf16.msra.mxu0 0
        %4047 = vmatprep.mubr.bf16.mxu0 0
        %4048 = vmatmul.mubr.bf16.gmra.mrb[0].mxu0 %v2740
        %v4049 = vpop.f32.mrb[0].mxu0
        %v4050 = vadd.f32 %v3889, %v4049
        %v4051 = vpop.f32.mrb[0].mxu0
        %v4052 = vpop.f32.mrb[0].mxu0
        %v4053 = vadd.f32 %v3892, %v4052
        %v4054 = vpop.f32.mrb[0].mxu0
        %4055 = vmatprep.mubr.bf16.mxu0 0
        %4056 = vmatmul.mubr.bf16.gmra.mrb[0].mxu0 %v2741
        %v4057 = vpop.f32.mrb[0].mxu0
        %v4058 = vadd.f32 %v3897, %v4057
        %v4059 = vpop.f32.mrb[0].mxu0
        %v4060 = vpop.f32.mrb[0].mxu0
        %v4061 = vadd.f32 %v3900, %v4060
        %v4062 = vpop.f32.mrb[0].mxu0
        %4063 = vmatprep.mubr.bf16.mxu0 0
        %4064 = vmatmul.mubr.bf16.gmra.mrb[0].mxu0 %v2742
        %v4065 = vpop.f32.mrb[0].mxu0
        %v4066 = vadd.f32 %v3905, %v4065
        %v4067 = vpop.f32.mrb[0].mxu0
        %v4068 = vpop.f32.mrb[0].mxu0
        %v4069 = vadd.f32 %v3908, %v4068
        %v4070 = vpop.f32.mrb[0].mxu0
        %4071 = vmatprep.mubr.bf16.mxu0 0
        %4072 = vmatmul.mubr.bf16.gmra.mrb[0].mxu0 %v2743
        %v4073 = vpop.f32.mrb[0].mxu0
        %v4074 = vadd.f32 %v3913, %v4073
        %v4075 = vpop.f32.mrb[0].mxu0
        %v4076 = vpop.f32.mrb[0].mxu0
        %v4077 = vadd.f32 %v3916, %v4076
        %v4078 = vpop.f32.mrb[0].mxu0
        %4079 = vmatprep.mubr.bf16.mxu0 0
        %4080 = vmatmul.mubr.bf16.gmra.mrb[0].mxu0 %v2744
        %v4081 = vpop.f32.mrb[0].mxu0
        %v4082 = vadd.f32 %v3921, %v4081
        %v4083 = vpop.f32.mrb[0].mxu0
        %v4084 = vpop.f32.mrb[0].mxu0
        %v4085 = vadd.f32 %v3924, %v4084
        %v4086 = vpop.f32.mrb[0].mxu0
        %4087 = vmatprep.mubr.bf16.mxu0 0
        %4088 = vmatmul.mubr.bf16.gmra.mrb[0].mxu0 %v2745
        %v4089 = vpop.f32.mrb[0].mxu0
        %v4090 = vadd.f32 %v3929, %v4089
        %v4091 = vpop.f32.mrb[0].mxu0
        %v4092 = vpop.f32.mrb[0].mxu0
        %v4093 = vadd.f32 %v3932, %v4092
        %v4094 = vpop.f32.mrb[0].mxu0
        %4095 = vmatprep.mubr.bf16.mxu0 0
        %4096 = vmatmul.mubr.bf16.gmra.mrb[0].mxu0 %v2746
        %v4097 = vpop.f32.mrb[0].mxu0
        %v4098 = vadd.f32 %v3937, %v4097
        %v4099 = vpop.f32.mrb[0].mxu0
        %v4100 = vpop.f32.mrb[0].mxu0
        %v4101 = vadd.f32 %v3940, %v4100
        %v4102 = vpop.f32.mrb[0].mxu0
        %4103 = vmatprep.mubr.bf16.mxu0 0
        %4104 = vmatmul.mubr.bf16.gmra.mrb[0].mxu0 %v2747
        %v4105 = vpop.f32.mrb[0].mxu0
        %v4106 = vadd.f32 %v3945, %v4105
        %v4107 = vpop.f32.mrb[0].mxu0
        %v4108 = vpop.f32.mrb[0].mxu0
        %v4109 = vadd.f32 %v3948, %v4108
        %v4110 = vpop.f32.mrb[0].mxu0
        %4111 = vmatprep.mubr.bf16.mxu0 0
        %4112 = vmatmul.mubr.bf16.gmra.mrb[0].mxu0 %v2748
        %v4113 = vpop.f32.mrb[0].mxu0
        %v4114 = vadd.f32 %v3953, %v4113
        %v4115 = vpop.f32.mrb[0].mxu0
        %v4116 = vpop.f32.mrb[0].mxu0
        %v4117 = vadd.f32 %v3956, %v4116
        %v4118 = vpop.f32.mrb[0].mxu0
        %4119 = vmatprep.mubr.bf16.mxu0 0
        %4120 = vmatmul.mubr.bf16.gmra.mrb[0].mxu0 %v2749
        %v4121 = vpop.f32.mrb[0].mxu0
        %v4122 = vadd.f32 %v3961, %v4121
        %v4123 = vpop.f32.mrb[0].mxu0
        %v4124 = vpop.f32.mrb[0].mxu0
        %v4125 = vadd.f32 %v3964, %v4124
        %v4126 = vpop.f32.mrb[0].mxu0
        %4127 = vmatprep.mubr.bf16.mxu0 0
        %4128 = vmatmul.mubr.bf16.gmra.mrb[0].mxu0 %v2750
        %v4129 = vpop.f32.mrb[0].mxu0
        %v4130 = vadd.f32 %v3969, %v4129
        %v4131 = vpop.f32.mrb[0].mxu0
        %v4132 = vpop.f32.mrb[0].mxu0
        %v4133 = vadd.f32 %v3972, %v4132
        %v4134 = vpop.f32.mrb[0].mxu0
        %4135 = vmatprep.mubr.bf16.mxu0 0
        %4136 = vmatmul.mubr.bf16.gmra.mrb[0].mxu0 %v2751
        %v4137 = vpop.f32.mrb[0].mxu0
        %v4138 = vadd.f32 %v3977, %v4137
        %v4139 = vpop.f32.mrb[0].mxu0
        %v4140 = vpop.f32.mrb[0].mxu0
        %v4141 = vadd.f32 %v3980, %v4140
        %v4142 = vpop.f32.mrb[0].mxu0
        %4143 = vmatprep.mubr.bf16.mxu0 0
        %4144 = vmatmul.mubr.bf16.gmra.mrb[0].mxu0 %v2752
        %v4145 = vpop.f32.mrb[0].mxu0
        %v4146 = vadd.f32 %v3985, %v4145
        %v4147 = vpop.f32.mrb[0].mxu0
        %v4148 = vpop.f32.mrb[0].mxu0
        %v4149 = vadd.f32 %v3988, %v4148
        %v4150 = vpop.f32.mrb[0].mxu0
        %4151 = vmatprep.mubr.bf16.mxu0 0
        %4152 = vmatmul.mubr.bf16.gmra.mrb[0].mxu0 %v2753
        %v4153 = vpop.f32.mrb[0].mxu0
        %v4154 = vadd.f32 %v3993, %v4153
        %v4155 = vpop.f32.mrb[0].mxu0
        %v4156 = vpop.f32.mrb[0].mxu0
        %v4157 = vadd.f32 %v3996, %v4156
        %v4158 = vpop.f32.mrb[0].mxu0
        %4159 = vmatprep.mubr.bf16.mxu0 0
        %4160 = vmatmul.mubr.bf16.gmra.mrb[0].mxu0 %v2754
        %v4161 = vpop.f32.mrb[0].mxu0
        %v4162 = vadd.f32 %v4001, %v4161
        %v4163 = vpop.f32.mrb[0].mxu0
        %v4164 = vpop.f32.mrb[0].mxu0
        %v4165 = vadd.f32 %v4004, %v4164
        %v4166 = vpop.f32.mrb[0].mxu0
        %4167 = vmatprep.mubr.bf16.mxu0 0
        %4168 = vmatmul.mubr.bf16.gmra.mrb[0].mxu0 %v2755
        %v4169 = vpop.f32.mrb[0].mxu0
        %v4170 = vadd.f32 %v4009, %v4169
        %v4171 = vpop.f32.mrb[0].mxu0
        %v4172 = vpop.f32.mrb[0].mxu0
        %v4173 = vadd.f32 %v4012, %v4172
        %v4174 = vpop.f32.mrb[0].mxu0
        %4175 = vdwg.mxu0
        %v4176 = vadd.f32 %v4050, %v2900
        %v4177 = vadd.f32 %v4053, %v2901
        %v4178 = vadd.f32 %v4058, %v2902
        %v4179 = vadd.f32 %v4061, %v2903
        %v4180 = vadd.f32 %v4066, %v2904
        %v4181 = vadd.f32 %v4069, %v2905
        %v4182 = vadd.f32 %v4074, %v2906
        %v4183 = vadd.f32 %v4077, %v2907
        %v4184 = vadd.f32 %v4082, %v2908
        %v4185 = vadd.f32 %v4085, %v2909
        %v4186 = vadd.f32 %v4090, %v2910
        %v4187 = vadd.f32 %v4093, %v2911
        %v4188 = vadd.f32 %v4098, %v2912
        %v4189 = vadd.f32 %v4101, %v2913
        %v4190 = vadd.f32 %v4106, %v2914
        %v4191 = vadd.f32 %v4109, %v2915
        %v4192 = vadd.f32 %v4114, %v2916
        %v4193 = vadd.f32 %v4117, %v2917
        %v4194 = vadd.f32 %v4122, %v2918
        %v4195 = vadd.f32 %v4125, %v2919
        %v4196 = vadd.f32 %v4130, %v2920
        %v4197 = vadd.f32 %v4133, %v2921
        %v4198 = vadd.f32 %v4138, %v2922
        %v4199 = vadd.f32 %v4141, %v2923
        %v4200 = vadd.f32 %v4146, %v2924
        %v4201 = vadd.f32 %v4149, %v2925
        %v4202 = vadd.f32 %v4154, %v2926
        %v4203 = vadd.f32 %v4157, %v2927
        %v4204 = vadd.f32 %v4162, %v2928
        %v4205 = vadd.f32 %v4165, %v2929
        %v4206 = vadd.f32 %v4170, %v2930
        %v4207 = vadd.f32 %v4173, %v2931
        %v4208 = vmax.f32 %v4176, 0.0
        %v4209 = vmax.f32 %v4177, 0.0
        %v4210 = vmax.f32 %v4178, 0.0
        %v4211 = vmax.f32 %v4179, 0.0
        %v4212 = vmax.f32 %v4180, 0.0
        %v4213 = vmax.f32 %v4181, 0.0
        %v4214 = vmax.f32 %v4182, 0.0
        %v4215 = vmax.f32 %v4183, 0.0
        %v4216 = vmax.f32 %v4184, 0.0
        %v4217 = vmax.f32 %v4185, 0.0
        %v4218 = vmax.f32 %v4186, 0.0
        %v4219 = vmax.f32 %v4187, 0.0
        %v4220 = vmax.f32 %v4188, 0.0
        %v4221 = vmax.f32 %v4189, 0.0
        %v4222 = vmax.f32 %v4190, 0.0
        %v4223 = vmax.f32 %v4191, 0.0
        %v4224 = vmax.f32 %v4192, 0.0
        %v4225 = vmax.f32 %v4193, 0.0
        %v4226 = vmax.f32 %v4194, 0.0
        %v4227 = vmax.f32 %v4195, 0.0
        %v4228 = vmax.f32 %v4196, 0.0
        %v4229 = vmax.f32 %v4197, 0.0
        %v4230 = vmax.f32 %v4198, 0.0
        %v4231 = vmax.f32 %v4199, 0.0
        %v4232 = vmax.f32 %v4200, 0.0
        %v4233 = vmax.f32 %v4201, 0.0
        %v4234 = vmax.f32 %v4202, 0.0
        %v4235 = vmax.f32 %v4203, 0.0
        %v4236 = vmax.f32 %v4204, 0.0
        %v4237 = vmax.f32 %v4205, 0.0
        %v4238 = vmax.f32 %v4206, 0.0
        %v4239 = vmax.f32 %v4207, 0.0
        %4240 = vst [vmem:[%s231] sm:$0xff] %v4208
        %4241 = vst [vmem:[%s231 + $0x8] sm:$0xff] %v4209
        %4242 = vst [vmem:[%s231 + $0x10] sm:$0xff] %v4210
        %4243 = vst [vmem:[%s231 + $0x18] sm:$0xff] %v4211
        %4244 = vst [vmem:[%s231 + $0x20] sm:$0xff] %v4212
        %4245 = vst [vmem:[%s231 + $0x28] sm:$0xff] %v4213
        %4246 = vst [vmem:[%s231 + $0x30] sm:$0xff] %v4214
        %4247 = vst [vmem:[%s231 + $0x38] sm:$0xff] %v4215
        %4248 = vst [vmem:[%s231 + $0x40] sm:$0xff] %v4216
        %4249 = vst [vmem:[%s231 + $0x48] sm:$0xff] %v4217
        %4250 = vst [vmem:[%s231 + $0x50] sm:$0xff] %v4218
        %4251 = vst [vmem:[%s231 + $0x58] sm:$0xff] %v4219
        %4252 = vst [vmem:[%s231 + $0x60] sm:$0xff] %v4220
        %4253 = vst [vmem:[%s231 + $0x68] sm:$0xff] %v4221
        %4254 = vst [vmem:[%s231 + $0x70] sm:$0xff] %v4222
        %4255 = vst [vmem:[%s231 + $0x78] sm:$0xff] %v4223
        %4256 = vst [vmem:[%s231 + $0x80] sm:$0xff] %v4224
        %4257 = vst [vmem:[%s231 + $0x88] sm:$0xff] %v4225
        %4258 = vst [vmem:[%s231 + $0x90] sm:$0xff] %v4226
        %4259 = vst [vmem:[%s231 + $0x98] sm:$0xff] %v4227
        %4260 = vst [vmem:[%s231 + $0xa0] sm:$0xff] %v4228
        %4261 = vst [vmem:[%s231 + $0xa8] sm:$0xff] %v4229
        %4262 = vst [vmem:[%s231 + $0xb0] sm:$0xff] %v4230
        %4263 = vst [vmem:[%s231 + $0xb8] sm:$0xff] %v4231
        %4264 = vst [vmem:[%s231 + $0xc0] sm:$0xff] %v4232
        %4265 = vst [vmem:[%s231 + $0xc8] sm:$0xff] %v4233
        %4266 = vst [vmem:[%s231 + $0xd0] sm:$0xff] %v4234
        %4267 = vst [vmem:[%s231 + $0xd8] sm:$0xff] %v4235
        %4268 = vst [vmem:[%s231 + $0xe0] sm:$0xff] %v4236
        %4269 = vst [vmem:[%s231 + $0xe8] sm:$0xff] %v4237
        %4270 = vst [vmem:[%s231 + $0xf0] sm:$0xff] %v4238
        %4271 = vst [vmem:[%s231 + $0xf8] sm:$0xff] %v4239
        %s4272 = sand.u32 %s151, 1
        %s4273 = scalar_lea.sflag [#allocation4], %s4272
        %s4274 = sand.u32 %s151, 1
        %s4275 = smul.addr %s4274, 256
        %s4276 = scalar_lea.vmem [#allocation3], %s4275
        // Predicated region
        $region45: #{tpu_custom_call.1} parent=39 // pred_check
          %p4277 = pneg %p161
        $region46: #{tpu_custom_call.1} parent=39 // pred_check_branch
          %4279 = sbr.rel (%p4277) target = $region48
        $region47: #{tpu_custom_call.1} parent=39 // pred_region
          %s4280 = sadd.s32 %s23, %s24
          %s4281 = smul.u32 32, %s4280
          %s4283 = ssub.s32 4096, 4096
          %4284 = vsyncadd %s4273, %s4283
          %s4285 = smul.addr %s4281, 128
          %s4286 = scalar_lea.hbm %s5, %s4285
          %s4287 = sshll.u32 %s4276, 4
          %s4288 = int_to_ptr.vmem [resolvable:$true] %s4287
          %4293 = dma.vmem_to_hbm [thread:$0]  %s4288, 4096, %s4286, %s4273, 128, 128, 8
        $region48: #{tpu_custom_call.1} parent=39 // pred_fallthru
          _
      $region40: #{tpu_custom_call.1} parent=5 // pred_fallthru
        _
      %p4294 = scmp.le.s32.totalorder 2, %s14
      // Predicated region
      $region49: #{tpu_custom_call.1} parent=5 // pred_check
        %p4295 = pneg %p4294
      $region50: #{tpu_custom_call.1} parent=5 // pred_check_branch
        %4297 = sbr.rel (%p4295) target = $region52
      $region51: #{tpu_custom_call.1} parent=5 // pred_region
        %s4298 = ssub.s32 %s14, 2
        // Predicated region
        $region53: #{tpu_custom_call.1} parent=51 // pred_check
          %p4299 = pneg %p167
        $region54: #{tpu_custom_call.1} parent=51 // pred_check_branch
          %4301 = sbr.rel (%p4299) target = $region56
        $region55: #{tpu_custom_call.1} parent=51 // pred_region
          %s4302 = sand.u32 %s152, 1
          %s4303 = scalar_lea.sflag [#allocation4], %s4302
          %s4304 = sand.u32 %s152, 1
          %s4305 = smul.addr %s4304, 256
          %s4306 = scalar_lea.vmem [#allocation3], %s4305
          %4307 = dma.done %s4303, 4096
        $region56: #{tpu_custom_call.1} parent=51 // pred_fallthru
          _
      $region52: #{tpu_custom_call.1} parent=5 // pred_fallthru
        _
    $region6: #{tpu_custom_call.1} parent=1 // loop_footer
      %s18 = sadd.s32 1, %s14
    $region7: #{tpu_custom_call.1} parent=1 // loop_footer_branch
      %13 = sbr.rel target = $region3
    $region8: #{tpu_custom_call.1} parent=1 // loop_exit
      _
    %4308 = vsyncpa [#allocation4], 1
    %s4309 = scalar_lea.sflag [#allocation4], 1
    %4310 = vsyncpa %s4309, 1

</llo_original>
